<compile_context>
chip_gen: v7x
topology: tpu7x:2x2x1
jax: 0.10.0
libtpu: 0.0.40
codegen_flags: <defaults>
</compile_context>

<pallas_src>
import math
import functools

import jax
import jax.numpy as jnp
from jax import lax
from jax.experimental import pallas as pl
from jax.experimental.pallas import tpu as pltpu


_SQRT2 = math.sqrt(2.0)
_MAX_POSITIONS = 10000.0


def _round_up(x, m):
    return (x + m - 1) // m * m


def _gelu_exact(x):
    # PyTorch nn.GELU() default is the exact (erf-based) GELU.
    return 0.5 * x * (1.0 + lax.erf(x / _SQRT2))


# -----------------------------------------------------------------------------
# Pure-JAX sinusoidal embedding (used only by the reference implementation).
# -----------------------------------------------------------------------------
def sinusoidal_embedding(timesteps, embedding_dim, max_positions=_MAX_POSITIONS):
    assert timesteps.ndim == 1
    half_dim = embedding_dim // 2
    emb = math.log(max_positions) / (half_dim - 1)
    freqs = jnp.exp(jnp.arange(half_dim, dtype=jnp.float32) * -emb)
    emb = timesteps.astype(jnp.float32)[:, None] * freqs[None, :]
    emb = jnp.concatenate([jnp.sin(emb), jnp.cos(emb)], axis=1)
    if embedding_dim % 2 == 1:
        emb = jnp.pad(emb, ((0, 0), (0, 1)))
    return emb


# -----------------------------------------------------------------------------
# Pallas kernel: in-kernel timestep embedding + the whole MLP for one batch tile.
# -----------------------------------------------------------------------------
def _fourier_mlp_kernel(
    x_ref, c_ref,
    w_t1_ref, b_t1_ref,
    w_ti_ref, b_ti_ref,        # stacked [w_t2; w_in], bias = b_t2 + b_in
    w_l1_ref, b_l1_ref,
    w_l2_ref, b_l2_ref,
    w_out_ref, b_out_ref,
    o_ref,
    *, t_dim, embedding_scale,
):
    dot = functools.partial(jnp.dot, preferred_element_type=jnp.float32)

    # ---- sinusoidal timestep embedding (exact match to the reference) -------
    # ec[:, :half] = sin(scale*cond * freqs), ec[:, half:] = cos(scale*cond * freqs)
    half = t_dim // 2
    col = lax.broadcasted_iota(jnp.int32, (1, t_dim), 1)              # (1, T)
    k = jnp.where(col < half, col, col - half).astype(jnp.float32)
    freqs = jnp.exp(k * (-math.log(_MAX_POSITIONS) / (half - 1)))     # (1, T)
    angle = (embedding_scale * c_ref[...]) * freqs                    # (TB, T)
    ec = jnp.where(col < half, jnp.sin(angle), jnp.cos(angle))        # (TB, T)

    # ---- timestep_embed: Linear -> GELU --------------------------------------
    t_pre = _gelu_exact(dot(ec, w_t1_ref[...]) + b_t1_ref[...])       # (TB, C)

    # ---- fused: t_pre @ w_t2 + x @ w_in (+ b_t2 + b_in) ----------------------
    # Concatenation boundary sits at the 128-lane tile edge (channels=128).
    h = dot(jnp.concatenate([t_pre, x_ref[...]], axis=-1), w_ti_ref[...])
    h = h + b_ti_ref[...]

    # ---- trunk: GELU, 2 x (Linear -> GELU), Linear ---------------------------
    h = _gelu_exact(h)
    h = _gelu_exact(dot(h, w_l1_ref[...]) + b_l1_ref[...])
    h = _gelu_exact(dot(h, w_l2_ref[...]) + b_l2_ref[...])
    o_ref[...] = (dot(h, w_out_ref[...]) + b_out_ref[...]).astype(o_ref.dtype)


def fourier_mlp_forward(inputs, cond, params, timesteps_embedding_dim=32,
                        embedding_scale=_MAX_POSITIONS, tile_b=None):
    """inputs: (B, input_dim) f32, cond: (B,) f32."""
    B, input_dim = inputs.shape
    channels = params["w_l1"].shape[0]
    t_dim = timesteps_embedding_dim
    assert t_dim % 2 == 0, "in-kernel embedding assumes even embedding_dim"

    # Fuse the second timestep Linear with the input embed Linear.
    w_ti = jnp.concatenate([params["w_t2"], params["w_in"]], axis=0)   # (C+D, C)
    b_ti = params["b_t2"] + params["b_in"]                              # (1, C)

    # Batch tile: biggest reasonable tile, multiple of 8 (sublane constraint).
    if tile_b is None:
        tile_b = 1024 if B >= 1024 else _round_up(B, 8)
    tile_b = max(8, _round_up(tile_b, 8))
    padded_B = _round_up(B, tile_b)

    x = inputs.astype(jnp.float32)
    c2 = cond.reshape(B, 1).astype(jnp.float32)
    if padded_B != B:
        x = jnp.pad(x, ((0, padded_B - B), (0, 0)))
        c2 = jnp.pad(c2, ((0, padded_B - B), (0, 0)))

    operands = (
        x, c2,
        params["w_t1"], params["b_t1"],
        w_ti, b_ti,
        params["w_l1"], params["b_l1"],
        params["w_l2"], params["b_l2"],
        params["w_out"], params["b_out"],
    )

    def const_spec(shape):
        nd = len(shape)
        return pl.BlockSpec(shape, lambda i: (0,) * nd)   # VMEM-resident weight

    in_specs = [
        pl.BlockSpec((tile_b, input_dim), lambda i: (i, 0)),   # x tile
        pl.BlockSpec((tile_b, 1), lambda i: (i, 0)),           # cond tile
    ] + [const_spec(op.shape) for op in operands[2:]]
    out_specs = pl.BlockSpec((tile_b, input_dim), lambda i: (i, 0))

    flops = 2 * padded_B * (
        t_dim * channels + (channels + input_dim) * channels
        + 2 * channels * channels + channels * input_dim)
    transcendentals = padded_B * (2 * t_dim + t_dim + 4 * channels)  # sin+cos, exp, erf
    bytes_accessed = 4 * (padded_B * (2 * input_dim + 1)
                          + sum(int(op.size) for op in operands[2:]))

    out = pl.pallas_call(
        functools.partial(_fourier_mlp_kernel, t_dim=t_dim,
                          embedding_scale=float(embedding_scale)),
        out_shape=jax.ShapeDtypeStruct((padded_B, input_dim), jnp.float32),
        grid=(padded_B // tile_b,),
        in_specs=in_specs,
        out_specs=out_specs,
        compiler_params=pltpu.CompilerParams(
            dimension_semantics=("parallel",),         # megacore sharding on v7x
            vmem_limit_bytes=32 * 1024 * 1024),        # safe under v7x 64 MiB VMEM
        cost_estimate=pl.CostEstimate(
            flops=int(flops), transcendentals=int(transcendentals),
            bytes_accessed=int(bytes_accessed)),
    )(*operands)
    return out[:B]


# -----------------------------------------------------------------------------
# Deterministic parameter init (PyTorch-Linear style uniform(-1/sqrt(fan_in))).
# Weights stored as (in_features, out_features).
# -----------------------------------------------------------------------------
def init_params(key, input_dim, t_dim, channels):
    def linear(k, fan_in, fan_out):
        k1, k2 = jax.random.split(k)
        bound = 1.0 / math.sqrt(fan_in)
        w = jax.random.uniform(k1, (fan_in, fan_out), jnp.float32, -bound, bound)
        b = jax.random.uniform(k2, (1, fan_out), jnp.float32, -bound, bound)
        return w, b

    keys = jax.random.split(key, 6)
    p = {}
    p["w_in"], p["b_in"] = linear(keys[0], input_dim, channels)
    p["w_t1"], p["b_t1"] = linear(keys[1], t_dim, channels)
    p["w_t2"], p["b_t2"] = linear(keys[2], channels, channels)
    p["w_l1"], p["b_l1"] = linear(keys[3], channels, channels)
    p["w_l2"], p["b_l2"] = linear(keys[4], channels, channels)
    p["w_out"], p["b_out"] = linear(keys[5], channels, input_dim)
    return p


# -----------------------------------------------------------------------------
# Pure-JAX reference (mirrors the PyTorch module exactly, unfused weights).
# -----------------------------------------------------------------------------
def reference_forward(inputs, cond, params, t_dim=32):
    ec = sinusoidal_embedding(_MAX_POSITIONS * cond, t_dim)
    g = lambda v: 0.5 * v * (1.0 + lax.erf(v / _SQRT2))
    t = g(ec @ params["w_t1"] + params["b_t1"]) @ params["w_t2"] + params["b_t2"]
    h = inputs @ params["w_in"] + params["b_in"]
    h = g(h + t)
    h = g(h @ params["w_l1"] + params["b_l1"])
    h = g(h @ params["w_l2"] + params["b_l2"])
    return h @ params["w_out"] + params["b_out"]


if __name__ == "__main__":
    input_dim = 4
    t_dim = 32
    channels = 128   # module default
    batch = 300      # not a multiple of the tile -> exercises grid + tail padding

    key = jax.random.PRNGKey(0)
    k_p, k_x, k_c = jax.random.split(key, 3)
    params = init_params(k_p, input_dim, t_dim, channels)
    x = jax.random.normal(k_x, (batch, input_dim), jnp.float32)
    cond = jax.random.uniform(k_c, (batch,), jnp.float32)  # diffusion time in [0, 1)

    out = fourier_mlp_forward(x, cond, params, timesteps_embedding_dim=t_dim,
                              tile_b=128)  # grid of 3 batch tiles
    out = jax.block_until_ready(out)

    ref = reference_forward(x, cond, params, t_dim)
    assert out.shape == (batch, input_dim)
    assert jnp.allclose(out, ref, rtol=2e-2, atol=2e-2), "mismatch vs JAX reference"

    print("KERNEL_OK")
</pallas_src>

<mosaic_0001>
module attributes {stable_mosaic.version = 11 : i64} {
  func.func @_fourier_mlp_kernel(%arg0: i32, %arg1: memref<128x4xf32, #tpu.memory_space<vmem>>, %arg2: memref<128x1xf32, #tpu.memory_space<vmem>>, %arg3: memref<32x128xf32, #tpu.memory_space<vmem>>, %arg4: memref<1x128xf32, #tpu.memory_space<vmem>>, %arg5: memref<132x128xf32, #tpu.memory_space<vmem>>, %arg6: memref<1x128xf32, #tpu.memory_space<vmem>>, %arg7: memref<128x128xf32, #tpu.memory_space<vmem>>, %arg8: memref<1x128xf32, #tpu.memory_space<vmem>>, %arg9: memref<128x128xf32, #tpu.memory_space<vmem>>, %arg10: memref<1x128xf32, #tpu.memory_space<vmem>>, %arg11: memref<128x4xf32, #tpu.memory_space<vmem>>, %arg12: memref<1x4xf32, #tpu.memory_space<vmem>>, %arg13: memref<128x4xf32, #tpu.memory_space<vmem>>) attributes {dimension_semantics = [#tpu.dimension_semantics<parallel>], iteration_bounds = array<i64: 3>, scalar_prefetch = 0 : i64, scratch_operands = 0 : i64, tpu.core_type = #tpu.core_type<tc>, window_params = [{transform_indices = @transform_0, window_bounds = array<i64: 128, 4>}, {transform_indices = @transform_1, window_bounds = array<i64: 128, 1>}, {pipeline_mode = #tpu.pipeline_mode<synchronous>, transform_indices = @transform_2, window_bounds = array<i64: 32, 128>}, {pipeline_mode = #tpu.pipeline_mode<synchronous>, transform_indices = @transform_3, window_bounds = array<i64: 1, 128>}, {pipeline_mode = #tpu.pipeline_mode<synchronous>, transform_indices = @transform_4, window_bounds = array<i64: 132, 128>}, {pipeline_mode = #tpu.pipeline_mode<synchronous>, transform_indices = @transform_5, window_bounds = array<i64: 1, 128>}, {pipeline_mode = #tpu.pipeline_mode<synchronous>, transform_indices = @transform_6, window_bounds = array<i64: 128, 128>}, {pipeline_mode = #tpu.pipeline_mode<synchronous>, transform_indices = @transform_7, window_bounds = array<i64: 1, 128>}, {pipeline_mode = #tpu.pipeline_mode<synchronous>, transform_indices = @transform_8, window_bounds = array<i64: 128, 128>}, {pipeline_mode = #tpu.pipeline_mode<synchronous>, transform_indices = @transform_9, window_bounds = array<i64: 1, 128>}, {pipeline_mode = #tpu.pipeline_mode<synchronous>, transform_indices = @transform_10, window_bounds = array<i64: 128, 4>}, {pipeline_mode = #tpu.pipeline_mode<synchronous>, transform_indices = @transform_11, window_bounds = array<i64: 1, 4>}, {transform_indices = @transform_12, window_bounds = array<i64: 128, 4>}]} {
    %0 = tpu.iota {dimensions = array<i32: 1>} : vector<1x32xi32>
    %c16_i32 = arith.constant 16 : i32
    %1 = vector.broadcast %c16_i32 : i32 to vector<1x32xi32>
    %2 = arith.cmpi slt, %0, %1 : vector<1x32xi32>
    %c16_i32_0 = arith.constant 16 : i32
    %3 = vector.broadcast %c16_i32_0 : i32 to vector<1x32xi32>
    %4 = arith.subi %0, %3 : vector<1x32xi32>
    %5 = arith.select %2, %0, %4 : vector<1x32xi1>, vector<1x32xi32>
    %6 = arith.sitofp %5 : vector<1x32xi32> to vector<1x32xf32>
    %cst = arith.constant -0.614022672 : f32
    %7 = vector.broadcast %cst : f32 to vector<1x32xf32>
    %8 = arith.mulf %6, %7 : vector<1x32xf32>
    %9 = math.exp %8 : vector<1x32xf32>
    %c0 = arith.constant 0 : index
    %c0_1 = arith.constant 0 : index
    %10 = vector.load %arg2[%c0, %c0_1] : memref<128x1xf32, #tpu.memory_space<vmem>>, vector<128x1xf32>
    %cst_2 = arith.constant 1.000000e+04 : f32
    %11 = vector.broadcast %cst_2 : f32 to vector<128x1xf32>
    %12 = arith.mulf %11, %10 : vector<128x1xf32>
    %13 = vector.broadcast %12 : vector<128x1xf32> to vector<128x32xf32>
    %14 = vector.broadcast %9 : vector<1x32xf32> to vector<128x32xf32>
    %15 = arith.mulf %13, %14 : vector<128x32xf32>
    %c16_i32_3 = arith.constant 16 : i32
    %16 = vector.broadcast %c16_i32_3 : i32 to vector<1x32xi32>
    %17 = arith.cmpi slt, %0, %16 : vector<1x32xi32>
    %18 = math.sin %15 : vector<128x32xf32>
    %19 = math.cos %15 : vector<128x32xf32>
    %20 = vector.shape_cast %17 : vector<1x32xi1> to vector<1x32xi1>
    %21 = vector.broadcast %20 : vector<1x32xi1> to vector<128x32xi1>
    %22 = arith.select %21, %18, %19 : vector<128x32xi1>, vector<128x32xf32>
    %c0_4 = arith.constant 0 : index
    %c0_5 = arith.constant 0 : index
    %23 = vector.load %arg3[%c0_4, %c0_5] : memref<32x128xf32, #tpu.memory_space<vmem>>, vector<32x128xf32>
    %cst_6 = arith.constant dense<0.000000e+00> : vector<128x128xf32>
    %24 = tpu.matmul %22, %23, %cst_6 {dimension_numbers = #tpu.dot_dimension_numbers<[1], [0], [0], [1], [0, 0, 1, 1], [], []>} : vector<128x32xf32>, vector<32x128xf32>, vector<128x128xf32> -> vector<128x128xf32>
    %c0_7 = arith.constant 0 : index
    %c0_8 = arith.constant 0 : index
    %25 = vector.load %arg4[%c0_7, %c0_8] : memref<1x128xf32, #tpu.memory_space<vmem>>, vector<1x128xf32>
    %26 = vector.broadcast %25 : vector<1x128xf32> to vector<128x128xf32>
    %27 = arith.addf %24, %26 : vector<128x128xf32>
    %cst_9 = arith.constant 5.000000e-01 : f32
    %28 = vector.broadcast %cst_9 : f32 to vector<128x128xf32>
    %29 = arith.mulf %28, %27 : vector<128x128xf32>
    %cst_10 = arith.constant 1.41421354 : f32
    %30 = vector.broadcast %cst_10 : f32 to vector<128x128xf32>
    %31 = arith.divf %27, %30 : vector<128x128xf32>
    %32 = math.erf %31 : vector<128x128xf32>
    %cst_11 = arith.constant 1.000000e+00 : f32
    %33 = vector.broadcast %cst_11 : f32 to vector<128x128xf32>
    %34 = arith.addf %33, %32 : vector<128x128xf32>
    %35 = arith.mulf %29, %34 : vector<128x128xf32>
    %c0_12 = arith.constant 0 : index
    %c0_13 = arith.constant 0 : index
    %36 = vector.load %arg1[%c0_12, %c0_13] : memref<128x4xf32, #tpu.memory_space<vmem>>, vector<128x4xf32>
    %37 = tpu.concatenate %35, %36 in 1 : vector<128x128xf32>, vector<128x4xf32> -> vector<128x132xf32>
    %c0_14 = arith.constant 0 : index
    %c0_15 = arith.constant 0 : index
    %38 = vector.load %arg5[%c0_14, %c0_15] : memref<132x128xf32, #tpu.memory_space<vmem>>, vector<132x128xf32>
    %cst_16 = arith.constant dense<0.000000e+00> : vector<128x128xf32>
    %39 = tpu.matmul %37, %38, %cst_16 {dimension_numbers = #tpu.dot_dimension_numbers<[1], [0], [0], [1], [0, 0, 1, 1], [], []>} : vector<128x132xf32>, vector<132x128xf32>, vector<128x128xf32> -> vector<128x128xf32>
    %c0_17 = arith.constant 0 : index
    %c0_18 = arith.constant 0 : index
    %40 = vector.load %arg6[%c0_17, %c0_18] : memref<1x128xf32, #tpu.memory_space<vmem>>, vector<1x128xf32>
    %41 = vector.broadcast %40 : vector<1x128xf32> to vector<128x128xf32>
    %42 = arith.addf %39, %41 : vector<128x128xf32>
    %cst_19 = arith.constant 5.000000e-01 : f32
    %43 = vector.broadcast %cst_19 : f32 to vector<128x128xf32>
    %44 = arith.mulf %43, %42 : vector<128x128xf32>
    %cst_20 = arith.constant 1.41421354 : f32
    %45 = vector.broadcast %cst_20 : f32 to vector<128x128xf32>
    %46 = arith.divf %42, %45 : vector<128x128xf32>
    %47 = math.erf %46 : vector<128x128xf32>
    %cst_21 = arith.constant 1.000000e+00 : f32
    %48 = vector.broadcast %cst_21 : f32 to vector<128x128xf32>
    %49 = arith.addf %48, %47 : vector<128x128xf32>
    %50 = arith.mulf %44, %49 : vector<128x128xf32>
    %c0_22 = arith.constant 0 : index
    %c0_23 = arith.constant 0 : index
    %51 = vector.load %arg7[%c0_22, %c0_23] : memref<128x128xf32, #tpu.memory_space<vmem>>, vector<128x128xf32>
    %cst_24 = arith.constant dense<0.000000e+00> : vector<128x128xf32>
    %52 = tpu.matmul %50, %51, %cst_24 {dimension_numbers = #tpu.dot_dimension_numbers<[1], [0], [0], [1], [0, 0, 1, 1], [], []>} : vector<128x128xf32>, vector<128x128xf32>, vector<128x128xf32> -> vector<128x128xf32>
    %c0_25 = arith.constant 0 : index
    %c0_26 = arith.constant 0 : index
    %53 = vector.load %arg8[%c0_25, %c0_26] : memref<1x128xf32, #tpu.memory_space<vmem>>, vector<1x128xf32>
    %54 = vector.broadcast %53 : vector<1x128xf32> to vector<128x128xf32>
    %55 = arith.addf %52, %54 : vector<128x128xf32>
    %cst_27 = arith.constant 5.000000e-01 : f32
    %56 = vector.broadcast %cst_27 : f32 to vector<128x128xf32>
    %57 = arith.mulf %56, %55 : vector<128x128xf32>
    %cst_28 = arith.constant 1.41421354 : f32
    %58 = vector.broadcast %cst_28 : f32 to vector<128x128xf32>
    %59 = arith.divf %55, %58 : vector<128x128xf32>
    %60 = math.erf %59 : vector<128x128xf32>
    %cst_29 = arith.constant 1.000000e+00 : f32
    %61 = vector.broadcast %cst_29 : f32 to vector<128x128xf32>
    %62 = arith.addf %61, %60 : vector<128x128xf32>
    %63 = arith.mulf %57, %62 : vector<128x128xf32>
    %c0_30 = arith.constant 0 : index
    %c0_31 = arith.constant 0 : index
    %64 = vector.load %arg9[%c0_30, %c0_31] : memref<128x128xf32, #tpu.memory_space<vmem>>, vector<128x128xf32>
    %cst_32 = arith.constant dense<0.000000e+00> : vector<128x128xf32>
    %65 = tpu.matmul %63, %64, %cst_32 {dimension_numbers = #tpu.dot_dimension_numbers<[1], [0], [0], [1], [0, 0, 1, 1], [], []>} : vector<128x128xf32>, vector<128x128xf32>, vector<128x128xf32> -> vector<128x128xf32>
    %c0_33 = arith.constant 0 : index
    %c0_34 = arith.constant 0 : index
    %66 = vector.load %arg10[%c0_33, %c0_34] : memref<1x128xf32, #tpu.memory_space<vmem>>, vector<1x128xf32>
    %67 = vector.broadcast %66 : vector<1x128xf32> to vector<128x128xf32>
    %68 = arith.addf %65, %67 : vector<128x128xf32>
    %cst_35 = arith.constant 5.000000e-01 : f32
    %69 = vector.broadcast %cst_35 : f32 to vector<128x128xf32>
    %70 = arith.mulf %69, %68 : vector<128x128xf32>
    %cst_36 = arith.constant 1.41421354 : f32
    %71 = vector.broadcast %cst_36 : f32 to vector<128x128xf32>
    %72 = arith.divf %68, %71 : vector<128x128xf32>
    %73 = math.erf %72 : vector<128x128xf32>
    %cst_37 = arith.constant 1.000000e+00 : f32
    %74 = vector.broadcast %cst_37 : f32 to vector<128x128xf32>
    %75 = arith.addf %74, %73 : vector<128x128xf32>
    %76 = arith.mulf %70, %75 : vector<128x128xf32>
    %c0_38 = arith.constant 0 : index
    %c0_39 = arith.constant 0 : index
    %77 = vector.load %arg11[%c0_38, %c0_39] : memref<128x4xf32, #tpu.memory_space<vmem>>, vector<128x4xf32>
    %cst_40 = arith.constant dense<0.000000e+00> : vector<128x4xf32>
    %78 = tpu.matmul %76, %77, %cst_40 {dimension_numbers = #tpu.dot_dimension_numbers<[1], [0], [0], [1], [0, 0, 1, 1], [], []>} : vector<128x128xf32>, vector<128x4xf32>, vector<128x4xf32> -> vector<128x4xf32>
    %c0_41 = arith.constant 0 : index
    %c0_42 = arith.constant 0 : index
    %79 = vector.load %arg12[%c0_41, %c0_42] : memref<1x4xf32, #tpu.memory_space<vmem>>, vector<1x4xf32>
    %80 = vector.broadcast %79 : vector<1x4xf32> to vector<128x4xf32>
    %81 = arith.addf %78, %80 : vector<128x4xf32>
    %c0_43 = arith.constant 0 : index
    %c0_44 = arith.constant 0 : index
    %82 = vector.load %arg13[%c0_43, %c0_44] : memref<128x4xf32, #tpu.memory_space<vmem>>, vector<128x4xf32>
    tpu.vector_store %arg13[%c0_43, %c0_44], %81 {strides = array<i32>} : memref<128x4xf32, #tpu.memory_space<vmem>>, vector<128x4xf32>,
    return
  }
  func.func @transform_0(%arg0: i32) -> (i32, i32) {
    %c0_i32 = arith.constant 0 : i32
    %c0_i32_0 = arith.constant 0 : i32
    return %arg0, %c0_i32 : i32, i32
  }
  func.func @transform_1(%arg0: i32) -> (i32, i32) {
    %c0_i32 = arith.constant 0 : i32
    %c0_i32_0 = arith.constant 0 : i32
    return %arg0, %c0_i32 : i32, i32
  }
  func.func @transform_2(%arg0: i32) -> (i32, i32) {
    %c0_i32 = arith.constant 0 : i32
    %c0_i32_0 = arith.constant 0 : i32
    %c0_i32_1 = arith.constant 0 : i32
    return %c0_i32, %c0_i32_0 : i32, i32
  }
  func.func @transform_3(%arg0: i32) -> (i32, i32) {
    %c0_i32 = arith.constant 0 : i32
    %c0_i32_0 = arith.constant 0 : i32
    %c0_i32_1 = arith.constant 0 : i32
    return %c0_i32, %c0_i32_0 : i32, i32
  }
  func.func @transform_4(%arg0: i32) -> (i32, i32) {
    %c0_i32 = arith.constant 0 : i32
    %c0_i32_0 = arith.constant 0 : i32
    %c0_i32_1 = arith.constant 0 : i32
    return %c0_i32, %c0_i32_0 : i32, i32
  }
  func.func @transform_5(%arg0: i32) -> (i32, i32) {
    %c0_i32 = arith.constant 0 : i32
    %c0_i32_0 = arith.constant 0 : i32
    %c0_i32_1 = arith.constant 0 : i32
    return %c0_i32, %c0_i32_0 : i32, i32
  }
  func.func @transform_6(%arg0: i32) -> (i32, i32) {
    %c0_i32 = arith.constant 0 : i32
    %c0_i32_0 = arith.constant 0 : i32
    %c0_i32_1 = arith.constant 0 : i32
    return %c0_i32, %c0_i32_0 : i32, i32
  }
  func.func @transform_7(%arg0: i32) -> (i32, i32) {
    %c0_i32 = arith.constant 0 : i32
    %c0_i32_0 = arith.constant 0 : i32
    %c0_i32_1 = arith.constant 0 : i32
    return %c0_i32, %c0_i32_0 : i32, i32
  }
  func.func @transform_8(%arg0: i32) -> (i32, i32) {
    %c0_i32 = arith.constant 0 : i32
    %c0_i32_0 = arith.constant 0 : i32
    %c0_i32_1 = arith.constant 0 : i32
    return %c0_i32, %c0_i32_0 : i32, i32
  }
  func.func @transform_9(%arg0: i32) -> (i32, i32) {
    %c0_i32 = arith.constant 0 : i32
    %c0_i32_0 = arith.constant 0 : i32
    %c0_i32_1 = arith.constant 0 : i32
    return %c0_i32, %c0_i32_0 : i32, i32
  }
  func.func @transform_10(%arg0: i32) -> (i32, i32) {
    %c0_i32 = arith.constant 0 : i32
    %c0_i32_0 = arith.constant 0 : i32
    %c0_i32_1 = arith.constant 0 : i32
    return %c0_i32, %c0_i32_0 : i32, i32
  }
  func.func @transform_11(%arg0: i32) -> (i32, i32) {
    %c0_i32 = arith.constant 0 : i32
    %c0_i32_0 = arith.constant 0 : i32
    %c0_i32_1 = arith.constant 0 : i32
    return %c0_i32, %c0_i32_0 : i32, i32
  }
  func.func @transform_12(%arg0: i32) -> (i32, i32) {
    %c0_i32 = arith.constant 0 : i32
    %c0_i32_0 = arith.constant 0 : i32
    return %arg0, %c0_i32 : i32, i32
  }
}

</mosaic_0001>

<llo_original>
// kernel: tpu_custom_call.1
$region0: #{tpu_custom_call.1}
  #allocation0 [shape = 'u32[]', space=smem, size = 0x4, offset = 0x4, fixed_abs, tag = 'smem constant byte address 0x4 - core index']
  #allocation1 [shape = 'u32[144,128]{1,0:T(1,128)}', space=vmem, size = 0x12000, scoped, tag = 'internal scratch']
  %s0 = inlined_call_operand.vmem [shape: f32[384,4], index: 0, kind: input, shape index: {}]
  %s1 = inlined_call_operand.vmem [shape: f32[384,1], index: 1, kind: input, shape index: {}]
  %s2 = inlined_call_operand.vmem [shape: f32[32,128], index: 2, kind: input, shape index: {}]
  %s3 = inlined_call_operand.vmem [shape: f32[1,128], index: 3, kind: input, shape index: {}]
  %s4 = inlined_call_operand.vmem [shape: f32[132,128], index: 4, kind: input, shape index: {}]
  %s5 = inlined_call_operand.vmem [shape: f32[1,128], index: 5, kind: input, shape index: {}]
  %s6 = inlined_call_operand.vmem [shape: f32[128,128], index: 6, kind: input, shape index: {}]
  %s7 = inlined_call_operand.vmem [shape: f32[1,128], index: 7, kind: input, shape index: {}]
  %s8 = inlined_call_operand.vmem [shape: f32[128,128], index: 8, kind: input, shape index: {}]
  %s9 = inlined_call_operand.vmem [shape: f32[1,128], index: 9, kind: input, shape index: {}]
  %s10 = inlined_call_operand.vmem [shape: f32[128,4], index: 10, kind: input, shape index: {}]
  %s11 = inlined_call_operand.vmem [shape: f32[1,4], index: 11, kind: input, shape index: {}]
  %s12 = inlined_call_operand.vmem [shape: f32[384,4], index: 12, kind: output, shape index: {}]
  %s13 = sld [smem:[#allocation0]]
  $region81: #{tpu_custom_call.1} parent=0
    _
  %s15 = ssub.s32 1, %s13
  %s16 = scalar_select 0, %s15, %s13
  loop: start=0, step=1, limit=5
  $region2: #{tpu_custom_call.1} parent=0 // loop_pre_header
    _
  $region3: #{tpu_custom_call.1} parent=0 // loop_header
    %s18 = sphi 0, %s22
    %p19 = scmp.ge.s32.totalorder %s18, 5
    %s28 = sphi 0, %s30
    %s31 = sphi 0, %s28
    %s32 = sphi 0, %s31
    %s48 = sphi 0, %s32
    %s54 = sphi 0, %s56
    %s57 = sphi 0, %s54
    %s58 = sphi 0, %s57
    %s74 = sphi 0, %s58
    %s78 = sphi 0, %s78
    %s80 = sphi 0, %s78
    %s81 = sphi 0, %s80
    %s95 = sphi 0, %s81
    %s99 = sphi 0, %s99
    %s101 = sphi 0, %s99
    %s102 = sphi 0, %s101
    %s116 = sphi 0, %s102
    %s120 = sphi 0, %s120
    %s122 = sphi 0, %s120
    %s123 = sphi 0, %s122
    %s137 = sphi 0, %s123
    %s141 = sphi 0, %s141
    %s143 = sphi 0, %s141
    %s144 = sphi 0, %s143
    %s158 = sphi 0, %s144
    %s162 = sphi 0, %s162
    %s164 = sphi 0, %s162
    %s165 = sphi 0, %s164
    %s179 = sphi 0, %s165
    %s183 = sphi 0, %s183
    %s185 = sphi 0, %s183
    %s186 = sphi 0, %s185
    %s200 = sphi 0, %s186
    %s204 = sphi 0, %s204
    %s206 = sphi 0, %s204
    %s207 = sphi 0, %s206
    %s221 = sphi 0, %s207
    %s225 = sphi 0, %s225
    %s227 = sphi 0, %s225
    %s228 = sphi 0, %s227
    %s242 = sphi 0, %s228
    %s246 = sphi 0, %s246
    %s248 = sphi 0, %s246
    %s249 = sphi 0, %s248
    %s263 = sphi 0, %s249
    %s267 = sphi 0, %s267
    %s269 = sphi 0, %s267
    %s270 = sphi 0, %s269
    %s284 = sphi 0, %s270
    %s290 = sphi 0, %s292
    %s293 = sphi 0, %s290
    %s294 = sphi 0, %s293
    %s310 = sphi 0, %s294
  $region4: #{tpu_custom_call.1} parent=0 // loop_header_branch
    %21 = sbr.rel (%p19) target = $region8
  $region5: #{tpu_custom_call.1} parent=0 // loop_body
    %s23 = ssub.s32 %s18, 1
    %s24 = ssub.s32 %s18, 2
    %s25 = sadd.s32 %s18, 1
    %s26 = ssub.s32 %s18, %s25
    %p27 = scmp.eq.s32.totalorder %s26, 0
    %s29 = sadd.s32 %s28, 1
    %s30 = scalar_select %p27, %s28, %s29
    %p33 = pneg %p27
    %p34 = scmp.eq.s32.totalorder %s18, 2
    %p35 = por %p33, %p34
    %p36 = scmp.ne.s32.totalorder %s28, %s31
    %p37 = scmp.eq.s32.totalorder %s18, 0
    %p38 = por %p36, %p37
    %p39 = scmp.ne.s32.totalorder %s28, %s31
    %p40 = scmp.eq.s32.totalorder %s23, 2
    %p41 = por %p39, %p40
    %p42 = scmp.ne.s32.totalorder %s31, %s32
    %p43 = scmp.eq.s32.totalorder %s23, 0
    %p44 = por %p42, %p43
    %p45 = scmp.ne.s32.totalorder %s31, %s32
    %p46 = scmp.eq.s32.totalorder %s24, 2
    %p47 = por %p45, %p46
    %p49 = scmp.ne.s32.totalorder %s32, %s48
    %p50 = scmp.eq.s32.totalorder %s24, 0
    %p51 = por %p49, %p50
    %s52 = ssub.s32 %s18, %s25
    %p53 = scmp.eq.s32.totalorder %s52, 0
    %s55 = sadd.s32 %s54, 1
    %s56 = scalar_select %p53, %s54, %s55
    %p59 = pneg %p53
    %p60 = scmp.eq.s32.totalorder %s18, 2
    %p61 = por %p59, %p60
    %p62 = scmp.ne.s32.totalorder %s54, %s57
    %p63 = scmp.eq.s32.totalorder %s18, 0
    %p64 = por %p62, %p63
    %p65 = scmp.ne.s32.totalorder %s54, %s57
    %p66 = scmp.eq.s32.totalorder %s23, 2
    %p67 = por %p65, %p66
    %p68 = scmp.ne.s32.totalorder %s57, %s58
    %p69 = scmp.eq.s32.totalorder %s23, 0
    %p70 = por %p68, %p69
    %p71 = scmp.ne.s32.totalorder %s57, %s58
    %p72 = scmp.eq.s32.totalorder %s24, 2
    %p73 = por %p71, %p72
    %p75 = scmp.ne.s32.totalorder %s58, %s74
    %p76 = scmp.eq.s32.totalorder %s24, 0
    %p77 = por %p75, %p76
    %s79 = sadd.s32 %s78, 1
    %p82 = scmp.eq.s32.totalorder %s18, 2
    %p83 = scmp.ne.s32.totalorder %s78, %s80
    %p84 = scmp.eq.s32.totalorder %s18, 0
    %p85 = por %p83, %p84
    %p86 = scmp.ne.s32.totalorder %s78, %s80
    %p87 = scmp.eq.s32.totalorder %s23, 2
    %p88 = por %p86, %p87
    %p89 = scmp.ne.s32.totalorder %s80, %s81
    %p90 = scmp.eq.s32.totalorder %s23, 0
    %p91 = por %p89, %p90
    %p92 = scmp.ne.s32.totalorder %s80, %s81
    %p93 = scmp.eq.s32.totalorder %s24, 2
    %p94 = por %p92, %p93
    %p96 = scmp.ne.s32.totalorder %s81, %s95
    %p97 = scmp.eq.s32.totalorder %s24, 0
    %p98 = por %p96, %p97
    %s100 = sadd.s32 %s99, 1
    %p103 = scmp.eq.s32.totalorder %s18, 2
    %p104 = scmp.ne.s32.totalorder %s99, %s101
    %p105 = scmp.eq.s32.totalorder %s18, 0
    %p106 = por %p104, %p105
    %p107 = scmp.ne.s32.totalorder %s99, %s101
    %p108 = scmp.eq.s32.totalorder %s23, 2
    %p109 = por %p107, %p108
    %p110 = scmp.ne.s32.totalorder %s101, %s102
    %p111 = scmp.eq.s32.totalorder %s23, 0
    %p112 = por %p110, %p111
    %p113 = scmp.ne.s32.totalorder %s101, %s102
    %p114 = scmp.eq.s32.totalorder %s24, 2
    %p115 = por %p113, %p114
    %p117 = scmp.ne.s32.totalorder %s102, %s116
    %p118 = scmp.eq.s32.totalorder %s24, 0
    %p119 = por %p117, %p118
    %s121 = sadd.s32 %s120, 1
    %p124 = scmp.eq.s32.totalorder %s18, 2
    %p125 = scmp.ne.s32.totalorder %s120, %s122
    %p126 = scmp.eq.s32.totalorder %s18, 0
    %p127 = por %p125, %p126
    %p128 = scmp.ne.s32.totalorder %s120, %s122
    %p129 = scmp.eq.s32.totalorder %s23, 2
    %p130 = por %p128, %p129
    %p131 = scmp.ne.s32.totalorder %s122, %s123
    %p132 = scmp.eq.s32.totalorder %s23, 0
    %p133 = por %p131, %p132
    %p134 = scmp.ne.s32.totalorder %s122, %s123
    %p135 = scmp.eq.s32.totalorder %s24, 2
    %p136 = por %p134, %p135
    %p138 = scmp.ne.s32.totalorder %s123, %s137
    %p139 = scmp.eq.s32.totalorder %s24, 0
    %p140 = por %p138, %p139
    %s142 = sadd.s32 %s141, 1
    %p145 = scmp.eq.s32.totalorder %s18, 2
    %p146 = scmp.ne.s32.totalorder %s141, %s143
    %p147 = scmp.eq.s32.totalorder %s18, 0
    %p148 = por %p146, %p147
    %p149 = scmp.ne.s32.totalorder %s141, %s143
    %p150 = scmp.eq.s32.totalorder %s23, 2
    %p151 = por %p149, %p150
    %p152 = scmp.ne.s32.totalorder %s143, %s144
    %p153 = scmp.eq.s32.totalorder %s23, 0
    %p154 = por %p152, %p153
    %p155 = scmp.ne.s32.totalorder %s143, %s144
    %p156 = scmp.eq.s32.totalorder %s24, 2
    %p157 = por %p155, %p156
    %p159 = scmp.ne.s32.totalorder %s144, %s158
    %p160 = scmp.eq.s32.totalorder %s24, 0
    %p161 = por %p159, %p160
    %s163 = sadd.s32 %s162, 1
    %p166 = scmp.eq.s32.totalorder %s18, 2
    %p167 = scmp.ne.s32.totalorder %s162, %s164
    %p168 = scmp.eq.s32.totalorder %s18, 0
    %p169 = por %p167, %p168
    %p170 = scmp.ne.s32.totalorder %s162, %s164
    %p171 = scmp.eq.s32.totalorder %s23, 2
    %p172 = por %p170, %p171
    %p173 = scmp.ne.s32.totalorder %s164, %s165
    %p174 = scmp.eq.s32.totalorder %s23, 0
    %p175 = por %p173, %p174
    %p176 = scmp.ne.s32.totalorder %s164, %s165
    %p177 = scmp.eq.s32.totalorder %s24, 2
    %p178 = por %p176, %p177
    %p180 = scmp.ne.s32.totalorder %s165, %s179
    %p181 = scmp.eq.s32.totalorder %s24, 0
    %p182 = por %p180, %p181
    %s184 = sadd.s32 %s183, 1
    %p187 = scmp.eq.s32.totalorder %s18, 2
    %p188 = scmp.ne.s32.totalorder %s183, %s185
    %p189 = scmp.eq.s32.totalorder %s18, 0
    %p190 = por %p188, %p189
    %p191 = scmp.ne.s32.totalorder %s183, %s185
    %p192 = scmp.eq.s32.totalorder %s23, 2
    %p193 = por %p191, %p192
    %p194 = scmp.ne.s32.totalorder %s185, %s186
    %p195 = scmp.eq.s32.totalorder %s23, 0
    %p196 = por %p194, %p195
    %p197 = scmp.ne.s32.totalorder %s185, %s186
    %p198 = scmp.eq.s32.totalorder %s24, 2
    %p199 = por %p197, %p198
    %p201 = scmp.ne.s32.totalorder %s186, %s200
    %p202 = scmp.eq.s32.totalorder %s24, 0
    %p203 = por %p201, %p202
    %s205 = sadd.s32 %s204, 1
    %p208 = scmp.eq.s32.totalorder %s18, 2
    %p209 = scmp.ne.s32.totalorder %s204, %s206
    %p210 = scmp.eq.s32.totalorder %s18, 0
    %p211 = por %p209, %p210
    %p212 = scmp.ne.s32.totalorder %s204, %s206
    %p213 = scmp.eq.s32.totalorder %s23, 2
    %p214 = por %p212, %p213
    %p215 = scmp.ne.s32.totalorder %s206, %s207
    %p216 = scmp.eq.s32.totalorder %s23, 0
    %p217 = por %p215, %p216
    %p218 = scmp.ne.s32.totalorder %s206, %s207
    %p219 = scmp.eq.s32.totalorder %s24, 2
    %p220 = por %p218, %p219
    %p222 = scmp.ne.s32.totalorder %s207, %s221
    %p223 = scmp.eq.s32.totalorder %s24, 0
    %p224 = por %p222, %p223
    %s226 = sadd.s32 %s225, 1
    %p229 = scmp.eq.s32.totalorder %s18, 2
    %p230 = scmp.ne.s32.totalorder %s225, %s227
    %p231 = scmp.eq.s32.totalorder %s18, 0
    %p232 = por %p230, %p231
    %p233 = scmp.ne.s32.totalorder %s225, %s227
    %p234 = scmp.eq.s32.totalorder %s23, 2
    %p235 = por %p233, %p234
    %p236 = scmp.ne.s32.totalorder %s227, %s228
    %p237 = scmp.eq.s32.totalorder %s23, 0
    %p238 = por %p236, %p237
    %p239 = scmp.ne.s32.totalorder %s227, %s228
    %p240 = scmp.eq.s32.totalorder %s24, 2
    %p241 = por %p239, %p240
    %p243 = scmp.ne.s32.totalorder %s228, %s242
    %p244 = scmp.eq.s32.totalorder %s24, 0
    %p245 = por %p243, %p244
    %s247 = sadd.s32 %s246, 1
    %p250 = scmp.eq.s32.totalorder %s18, 2
    %p251 = scmp.ne.s32.totalorder %s246, %s248
    %p252 = scmp.eq.s32.totalorder %s18, 0
    %p253 = por %p251, %p252
    %p254 = scmp.ne.s32.totalorder %s246, %s248
    %p255 = scmp.eq.s32.totalorder %s23, 2
    %p256 = por %p254, %p255
    %p257 = scmp.ne.s32.totalorder %s248, %s249
    %p258 = scmp.eq.s32.totalorder %s23, 0
    %p259 = por %p257, %p258
    %p260 = scmp.ne.s32.totalorder %s248, %s249
    %p261 = scmp.eq.s32.totalorder %s24, 2
    %p262 = por %p260, %p261
    %p264 = scmp.ne.s32.totalorder %s249, %s263
    %p265 = scmp.eq.s32.totalorder %s24, 0
    %p266 = por %p264, %p265
    %s268 = sadd.s32 %s267, 1
    %p271 = scmp.eq.s32.totalorder %s18, 2
    %p272 = scmp.ne.s32.totalorder %s267, %s269
    %p273 = scmp.eq.s32.totalorder %s18, 0
    %p274 = por %p272, %p273
    %p275 = scmp.ne.s32.totalorder %s267, %s269
    %p276 = scmp.eq.s32.totalorder %s23, 2
    %p277 = por %p275, %p276
    %p278 = scmp.ne.s32.totalorder %s269, %s270
    %p279 = scmp.eq.s32.totalorder %s23, 0
    %p280 = por %p278, %p279
    %p281 = scmp.ne.s32.totalorder %s269, %s270
    %p282 = scmp.eq.s32.totalorder %s24, 2
    %p283 = por %p281, %p282
    %p285 = scmp.ne.s32.totalorder %s270, %s284
    %p286 = scmp.eq.s32.totalorder %s24, 0
    %p287 = por %p285, %p286
    %s288 = ssub.s32 %s18, %s25
    %p289 = scmp.eq.s32.totalorder %s288, 0
    %s291 = sadd.s32 %s290, 1
    %s292 = scalar_select %p289, %s290, %s291
    %p295 = pneg %p289
    %p296 = scmp.eq.s32.totalorder %s18, 2
    %p297 = por %p295, %p296
    %p298 = scmp.ne.s32.totalorder %s290, %s293
    %p299 = scmp.eq.s32.totalorder %s18, 0
    %p300 = por %p298, %p299
    %p301 = scmp.ne.s32.totalorder %s290, %s293
    %p302 = scmp.eq.s32.totalorder %s23, 2
    %p303 = por %p301, %p302
    %p304 = scmp.ne.s32.totalorder %s293, %s294
    %p305 = scmp.eq.s32.totalorder %s23, 0
    %p306 = por %p304, %p305
    %p307 = scmp.ne.s32.totalorder %s293, %s294
    %p308 = scmp.eq.s32.totalorder %s24, 2
    %p309 = por %p307, %p308
    %p311 = scmp.ne.s32.totalorder %s294, %s310
    %p312 = scmp.eq.s32.totalorder %s24, 0
    %p313 = por %p311, %p312
    %p314 = scmp.le.s32.totalorder 1, %s18
    %p315 = scmp.lt.s32.totalorder %s18, 4
    %p316 = pnand %p314, %p315
    %p317 = pneg %p316
    // Predicated region
    $region9: #{tpu_custom_call.1} parent=5 // pred_check
      _
    $region10: #{tpu_custom_call.1} parent=5 // pred_check_branch
      %319 = sbr.rel (%p316) target = $region12
    $region11: #{tpu_custom_call.1} parent=5 // pred_region
      %s320 = ssub.s32 %s18, 1
      // Predicated region
      $region13: #{tpu_custom_call.1} parent=11 // pred_check
        %p321 = pneg %p91
      $region14: #{tpu_custom_call.1} parent=11 // pred_check_branch
        %323 = sbr.rel (%p321) target = $region16
      $region15: #{tpu_custom_call.1} parent=11 // pred_region
        _
      $region16: #{tpu_custom_call.1} parent=11 // pred_fallthru
        _
      // Predicated region
      $region17: #{tpu_custom_call.1} parent=11 // pred_check
        %p324 = pneg %p112
      $region18: #{tpu_custom_call.1} parent=11 // pred_check_branch
        %326 = sbr.rel (%p324) target = $region20
      $region19: #{tpu_custom_call.1} parent=11 // pred_region
        _
      $region20: #{tpu_custom_call.1} parent=11 // pred_fallthru
        _
      // Predicated region
      $region21: #{tpu_custom_call.1} parent=11 // pred_check
        %p327 = pneg %p133
      $region22: #{tpu_custom_call.1} parent=11 // pred_check_branch
        %329 = sbr.rel (%p327) target = $region24
      $region23: #{tpu_custom_call.1} parent=11 // pred_region
        _
      $region24: #{tpu_custom_call.1} parent=11 // pred_fallthru
        _
      // Predicated region
      $region25: #{tpu_custom_call.1} parent=11 // pred_check
        %p330 = pneg %p154
      $region26: #{tpu_custom_call.1} parent=11 // pred_check_branch
        %332 = sbr.rel (%p330) target = $region28
      $region27: #{tpu_custom_call.1} parent=11 // pred_region
        _
      $region28: #{tpu_custom_call.1} parent=11 // pred_fallthru
        _
      // Predicated region
      $region29: #{tpu_custom_call.1} parent=11 // pred_check
        %p333 = pneg %p175
      $region30: #{tpu_custom_call.1} parent=11 // pred_check_branch
        %335 = sbr.rel (%p333) target = $region32
      $region31: #{tpu_custom_call.1} parent=11 // pred_region
        _
      $region32: #{tpu_custom_call.1} parent=11 // pred_fallthru
        _
      // Predicated region
      $region33: #{tpu_custom_call.1} parent=11 // pred_check
        %p336 = pneg %p196
      $region34: #{tpu_custom_call.1} parent=11 // pred_check_branch
        %338 = sbr.rel (%p336) target = $region36
      $region35: #{tpu_custom_call.1} parent=11 // pred_region
        _
      $region36: #{tpu_custom_call.1} parent=11 // pred_fallthru
        _
      // Predicated region
      $region37: #{tpu_custom_call.1} parent=11 // pred_check
        %p339 = pneg %p217
      $region38: #{tpu_custom_call.1} parent=11 // pred_check_branch
        %341 = sbr.rel (%p339) target = $region40
      $region39: #{tpu_custom_call.1} parent=11 // pred_region
        _
      $region40: #{tpu_custom_call.1} parent=11 // pred_fallthru
        _
      // Predicated region
      $region41: #{tpu_custom_call.1} parent=11 // pred_check
        %p342 = pneg %p238
      $region42: #{tpu_custom_call.1} parent=11 // pred_check_branch
        %344 = sbr.rel (%p342) target = $region44
      $region43: #{tpu_custom_call.1} parent=11 // pred_region
        _
      $region44: #{tpu_custom_call.1} parent=11 // pred_fallthru
        _
      // Predicated region
      $region45: #{tpu_custom_call.1} parent=11 // pred_check
        %p345 = pneg %p259
      $region46: #{tpu_custom_call.1} parent=11 // pred_check_branch
        %347 = sbr.rel (%p345) target = $region48
      $region47: #{tpu_custom_call.1} parent=11 // pred_region
        _
      $region48: #{tpu_custom_call.1} parent=11 // pred_fallthru
        _
      // Predicated region
      $region49: #{tpu_custom_call.1} parent=11 // pred_check
        %p348 = pneg %p280
      $region50: #{tpu_custom_call.1} parent=11 // pred_check_branch
        %350 = sbr.rel (%p348) target = $region52
      $region51: #{tpu_custom_call.1} parent=11 // pred_region
        _
      $region52: #{tpu_custom_call.1} parent=11 // pred_fallthru
        _
    $region12: #{tpu_custom_call.1} parent=5 // pred_fallthru
      _
    %p351 = scmp.lt.s32.totalorder %s18, 3
    // Predicated region
    $region53: #{tpu_custom_call.1} parent=5 // pred_check
      %p352 = pneg %p351
    $region54: #{tpu_custom_call.1} parent=5 // pred_check_branch
      %354 = sbr.rel (%p352) target = $region56
    $region55: #{tpu_custom_call.1} parent=5 // pred_region
      // Predicated region
      $region57: #{tpu_custom_call.1} parent=55 // pred_check
        %p355 = pneg %p38
      $region58: #{tpu_custom_call.1} parent=55 // pred_check_branch
        %357 = sbr.rel (%p355) target = $region60
      $region59: #{tpu_custom_call.1} parent=55 // pred_region
        %s358 = smul.u32 16, %s18
        %p359 = scmp.lt.s32.totalorder %s358, 47
        %s360 = scalar_select %p359, %s358, 47
        %s361 = smul.addr %s360, 8
        %s362 = scalar_lea.vmem %s0, %s361
        %s363 = smul.u32 16, %s18
      $region60: #{tpu_custom_call.1} parent=55 // pred_fallthru
        _
      // Predicated region
      $region61: #{tpu_custom_call.1} parent=55 // pred_check
        %p364 = pneg %p64
      $region62: #{tpu_custom_call.1} parent=55 // pred_check_branch
        %366 = sbr.rel (%p364) target = $region64
      $region63: #{tpu_custom_call.1} parent=55 // pred_region
        %s367 = smul.u32 16, %s18
        %p368 = scmp.lt.s32.totalorder %s367, 47
        %s369 = scalar_select %p368, %s367, 47
        %s370 = smul.addr %s369, 8
        %s371 = scalar_lea.vmem %s1, %s370
        %s372 = smul.u32 16, %s18
      $region64: #{tpu_custom_call.1} parent=55 // pred_fallthru
        _
    $region56: #{tpu_custom_call.1} parent=5 // pred_fallthru
      _
    %p373 = scmp.le.s32.totalorder 1, %s18
    %p374 = scmp.lt.s32.totalorder %s18, 4
    %p375 = pnand %p373, %p374
    %p376 = pneg %p375
    // Predicated region
    $region65: #{tpu_custom_call.1} parent=5 // pred_check
      _
    $region66: #{tpu_custom_call.1} parent=5 // pred_check_branch
      %378 = sbr.rel (%p375) target = $region68
    $region67: #{tpu_custom_call.1} parent=5 // pred_region
      %s379 = ssub.s32 %s18, 1
      %s380 = smul.u32 16, %s23
      %p381 = scmp.lt.s32.totalorder %s380, 47
      %s382 = scalar_select %p381, %s380, 47
      %s383 = smul.addr %s382, 8
      %s384 = scalar_lea.vmem %s0, %s383
      %p385 = pneg %p44
      %p386 = pneg %p41
      %s387 = smul.u32 16, %s23
      %p388 = scmp.lt.s32.totalorder %s387, 47
      %s389 = scalar_select %p388, %s387, 47
      %s390 = smul.addr %s389, 8
      %s391 = scalar_lea.vmem %s1, %s390
      %p392 = pneg %p70
      %p393 = pneg %p67
      %p394 = pneg %p91
      %p395 = pneg %p88
      %p396 = pneg %p112
      %p397 = pneg %p109
      %p398 = pneg %p133
      %p399 = pneg %p130
      %p400 = pneg %p154
      %p401 = pneg %p151
      %p402 = pneg %p175
      %p403 = pneg %p172
      %p404 = pneg %p196
      %p405 = pneg %p193
      %p406 = pneg %p217
      %p407 = pneg %p214
      %p408 = pneg %p238
      %p409 = pneg %p235
      %p410 = pneg %p259
      %p411 = pneg %p256
      %p412 = pneg %p280
      %p413 = pneg %p277
      %p414 = pneg %p306
      %p415 = pneg %p303
      %s416 = smul.u32 16, %s23
      %p417 = scmp.lt.s32.totalorder %s416, 47
      %s418 = scalar_select %p417, %s416, 47
      %s419 = smul.addr %s418, 8
      %s420 = scalar_lea.vmem %s12, %s419
      %s421 = smul.u32 16, %s23
      %p422 = scmp.lt.s32.totalorder %s421, 47
      %s423 = scalar_select %p422, %s421, 47
      %s424 = smul.addr %s423, 8
      %s425 = scalar_lea.vmem %s0, %s424
      %s426 = smul.u32 16, %s23
      %s427 = smul.u32 16, %s23
      %p428 = scmp.lt.s32.totalorder %s427, 47
      %s429 = scalar_select %p428, %s427, 47
      %s430 = smul.addr %s429, 8
      %s431 = scalar_lea.vmem %s1, %s430
      %s432 = smul.u32 16, %s23
      %s433 = smul.u32 16, %s23
      %p434 = scmp.lt.s32.totalorder %s433, 47
      %s435 = scalar_select %p434, %s433, 47
      %s436 = smul.addr %s435, 8
      %s437 = scalar_lea.vmem %s12, %s436
      %s438 = smul.u32 16, %s23
      %v439 = vlaneseq
      %v440 = vand.u32 %v439, 127
      %vm441 = vcmp.lt.s32.totalorder %v440, 16
      %v442 = vsub.s32 %v440, 16
      %v443 = vsel %vm441, %v440, %v442
      %v444 = vcvt.s32.f32 %v443
      %v445 = vmul.f32 %v444, -0.6140227
      %v446 = vmul.f32 %v445, 1.442695
      %v447 = vpow.pop %v446
      %v448 = vld [vmem:[%s431] sm:$0xff]
      %v449 = vld [vmem:[%s431 + $0x8] sm:$0xff]
      %v450 = vld [vmem:[%s431 + $0x10] sm:$0xff]
      %v451 = vld [vmem:[%s431 + $0x18] sm:$0xff]
      %v452 = vld [vmem:[%s431 + $0x20] sm:$0xff]
      %v453 = vld [vmem:[%s431 + $0x28] sm:$0xff]
      %v454 = vld [vmem:[%s431 + $0x30] sm:$0xff]
      %v455 = vld [vmem:[%s431 + $0x38] sm:$0xff]
      %v456 = vld [vmem:[%s431 + $0x40] sm:$0xff]
      %v457 = vld [vmem:[%s431 + $0x48] sm:$0xff]
      %v458 = vld [vmem:[%s431 + $0x50] sm:$0xff]
      %v459 = vld [vmem:[%s431 + $0x58] sm:$0xff]
      %v460 = vld [vmem:[%s431 + $0x60] sm:$0xff]
      %v461 = vld [vmem:[%s431 + $0x68] sm:$0xff]
      %v462 = vld [vmem:[%s431 + $0x70] sm:$0xff]
      %v463 = vld [vmem:[%s431 + $0x78] sm:$0xff]
      %v464 = vmul.f32 %v448, 10000.0
      %v465 = vmul.f32 %v449, 10000.0
      %v466 = vmul.f32 %v450, 10000.0
      %v467 = vmul.f32 %v451, 10000.0
      %v468 = vmul.f32 %v452, 10000.0
      %v469 = vmul.f32 %v453, 10000.0
      %v470 = vmul.f32 %v454, 10000.0
      %v471 = vmul.f32 %v455, 10000.0
      %v472 = vmul.f32 %v456, 10000.0
      %v473 = vmul.f32 %v457, 10000.0
      %v474 = vmul.f32 %v458, 10000.0
      %v475 = vmul.f32 %v459, 10000.0
      %v476 = vmul.f32 %v460, 10000.0
      %v477 = vmul.f32 %v461, 10000.0
      %v478 = vmul.f32 %v462, 10000.0
      %v479 = vmul.f32 %v463, 10000.0
      %481 = vset.pattern.permute.xlu0 0
      %482 = vperm.xlu0 %481, %v464
      %v483 = vpop.permute.xlu0 %482
      %486 = vset.pattern.permute.xlu0 0
      %487 = vperm.xlu0 %486, %v465
      %v488 = vpop.permute.xlu0 %487
      %491 = vset.pattern.permute.xlu0 0
      %492 = vperm.xlu0 %491, %v466
      %v493 = vpop.permute.xlu0 %492
      %496 = vset.pattern.permute.xlu0 0
      %497 = vperm.xlu0 %496, %v467
      %v498 = vpop.permute.xlu0 %497
      %501 = vset.pattern.permute.xlu0 0
      %502 = vperm.xlu0 %501, %v468
      %v503 = vpop.permute.xlu0 %502
      %506 = vset.pattern.permute.xlu0 0
      %507 = vperm.xlu0 %506, %v469
      %v508 = vpop.permute.xlu0 %507
      %511 = vset.pattern.permute.xlu0 0
      %512 = vperm.xlu0 %511, %v470
      %v513 = vpop.permute.xlu0 %512
      %516 = vset.pattern.permute.xlu0 0
      %517 = vperm.xlu0 %516, %v471
      %v518 = vpop.permute.xlu0 %517
      %521 = vset.pattern.permute.xlu0 0
      %522 = vperm.xlu0 %521, %v472
      %v523 = vpop.permute.xlu0 %522
      %526 = vset.pattern.permute.xlu0 0
      %527 = vperm.xlu0 %526, %v473
      %v528 = vpop.permute.xlu0 %527
      %531 = vset.pattern.permute.xlu0 0
      %532 = vperm.xlu0 %531, %v474
      %v533 = vpop.permute.xlu0 %532
      %536 = vset.pattern.permute.xlu0 0
      %537 = vperm.xlu0 %536, %v475
      %v538 = vpop.permute.xlu0 %537
      %541 = vset.pattern.permute.xlu0 0
      %542 = vperm.xlu0 %541, %v476
      %v543 = vpop.permute.xlu0 %542
      %546 = vset.pattern.permute.xlu0 0
      %547 = vperm.xlu0 %546, %v477
      %v548 = vpop.permute.xlu0 %547
      %551 = vset.pattern.permute.xlu0 0
      %552 = vperm.xlu0 %551, %v478
      %v553 = vpop.permute.xlu0 %552
      %556 = vset.pattern.permute.xlu0 0
      %557 = vperm.xlu0 %556, %v479
      %v558 = vpop.permute.xlu0 %557
      %v560 = vmul.f32 %v483, %v447
      %v561 = vmul.f32 %v488, %v447
      %v562 = vmul.f32 %v493, %v447
      %v563 = vmul.f32 %v498, %v447
      %v564 = vmul.f32 %v503, %v447
      %v565 = vmul.f32 %v508, %v447
      %v566 = vmul.f32 %v513, %v447
      %v567 = vmul.f32 %v518, %v447
      %v568 = vmul.f32 %v523, %v447
      %v569 = vmul.f32 %v528, %v447
      %v570 = vmul.f32 %v533, %v447
      %v571 = vmul.f32 %v538, %v447
      %v572 = vmul.f32 %v543, %v447
      %v573 = vmul.f32 %v548, %v447
      %v574 = vmul.f32 %v553, %v447
      %v575 = vmul.f32 %v558, %v447
      %v576 = vand.u32 2147483647, %v560
      %vm577 = vcmp.le.f32.partialorder %v576, 0.7853982
      %vm578 = vcmp.lt.s32.totalorder %v560, 0
      %v579 = vand.u32 %v560, 2139095040
      %v580 = vshrl.u32 %v579, 23
      %v581 = vsub.s32 %v580, 127
      %v582 = vand.u32 2147483647, %v560
      %v583 = vand.u32 %v582, 8388607
      %v584 = vor.u32 %v583, 8388608
      %v585 = vsub.s32 0, %v584
      %v586 = vadd.s32 %v581, 1
      %vm587 = vcmp.gt.s32.totalorder %v586, 0
      %v588 = vsel %vm587, %v586, 0
      %v589 = vshrl.u32 %v588, 5
      %v590 = vand.u32 %v588, 31
      %v591 = vsub.s32 32, %v590
      %v592 = vshrl.u32 683565275, %v591
      %v593 = vshll.u32 683565275, %v590
      %v594 = vshrl.u32 2475754826, %v591
      %v595 = vor.u32 %v593, %v594
      %v596 = vshll.u32 2475754826, %v590
      %v597 = vshrl.u32 2131351028, %v591
      %v598 = vor.u32 %v596, %v597
      %v599 = vshll.u32 2131351028, %v590
      %v600 = vshrl.u32 2102212464, %v591
      %v601 = vor.u32 %v599, %v600
      %v602 = vshll.u32 2102212464, %v590
      %v603 = vshrl.u32 920167782, %v591
      %v604 = vor.u32 %v602, %v603
      %v605 = vshll.u32 920167782, %v590
      %v606 = vshrl.u32 1326507024, %v591
      %v607 = vor.u32 %v605, %v606
      %vm608 = vcmp.lt.s32.totalorder %v589, 1
      %vm609 = vcmp.lt.s32.totalorder %v589, 2
      %vm610 = vcmp.lt.s32.totalorder %v589, 3
      %vm611 = vcmp.lt.s32.totalorder %v589, 4
      %v612 = vsel %vm608, %v592, %v595
      %v613 = vsel %vm611, %v601, 2102212464
      %v614 = vsel %vm610, %v598, %v613
      %v615 = vsel %vm609, %v612, %v614
      %v616 = vsel %vm608, %v595, %v598
      %v617 = vsel %vm611, %v604, 920167782
      %v618 = vsel %vm610, %v601, %v617
      %v619 = vsel %vm609, %v616, %v618
      %v620 = vsel %vm608, %v598, %v601
      %v621 = vsel %vm611, %v607, 1326507024
      %v622 = vsel %vm610, %v604, %v621
      %v623 = vsel %vm609, %v620, %v622
      %v624 = vshll.u32 %v584, 8
      %v625 = vmul.u32.u64.compose %v624, %v623
      %v626 = vextract.low.u32 %v625
      %v627 = vextract.high.u32 %v625
      %v628 = vmul.u32.u64.compose %v624, %v619
      %v629 = vextract.low.u32 %v628
      %v630 = vextract.high.u32 %v628
      %v631 = vmul.u32 %v624, %v615
      %v632 = vadd.s32 %v627, %v629
      %vm633 = vc.u32 %v627, %v629
      %v634 = vadd.s32 %v630, 1
      %v635 = vsel %vm633, %v634, %v630
      %v636 = vadd.s32 %v631, %v635
      %v637 = vadd.s32 %v636, 536870912
      %v638 = vshrl.u32 %v637, 30
      %v639 = vshll.u32 %v638, 30
      %v640 = vsub.s32 %v636, %v639
      %vm641 = vcmp.lt.s32.totalorder %v640, 0
      %v642 = vsub.s32 0, %v640
      %v643 = vsel %vm641, %v642, %v640
      %v644 = vclz %v643
      %v645 = vsub.s32 %v644, 2
      %vm646 = vcmp.gt.s32.totalorder 0, %v645
      %v647 = vsel %vm646, 0, %v645
      %v648 = vsub.s32 32, %v647
      %v649 = vshll.u32 %v640, %v647
      %v650 = vshrl.u32 %v632, %v648
      %v651 = vor.u32 %v649, %v650
      %v652 = vsub.s32 4294967266, %v647
      %v653 = vadd.s32 %v652, 127
      %v654 = vshll.u32 %v653, 23
      %v655 = vor.u32 4788187, %v654
      %v656 = vand.u32 2147483647, %v655
      %v658 = vcvt.s32.f32 %v651
      %v659 = vmul.f32 %v658, %v656
      %v660 = vxor.u32 %v659, 2147483648
      %v661 = vsel %vm578, %v660, %v659
      %v662 = vsub.s32 4, %v638
      %v663 = vsel %vm578, %v662, %v638
      %v664 = vsel %vm577, %v560, %v661
      %v665 = vsel %vm577, 0, %v663
      %v666 = vcosq.f32.pop %v664
      %v667 = vsinq.f32.pop %v664
      %vm668 = vweird.f32 %v560
      %v669 = vadd.s32 %v665, 3
      %v670 = vand.u32 %v669, 3
      %vm671 = vcmp.lt.s32.totalorder %v670, 2
      %vm672 = vcmp.eq.s32.totalorder %v670, 0
      %v673 = vxor.u32 %v667, 2147483648
      %v674 = vsel %vm672, %v666, %v673
      %vm675 = vcmp.eq.s32.totalorder %v670, 2
      %v676 = vxor.u32 %v666, 2147483648
      %v677 = vsel %vm675, %v676, %v667
      %v678 = vsel %vm671, %v674, %v677
      %v679 = vsel %vm668, nan, %v678
      %v680 = vand.u32 2147483647, %v561
      %vm681 = vcmp.le.f32.partialorder %v680, 0.7853982
      %vm682 = vcmp.lt.s32.totalorder %v561, 0
      %v683 = vand.u32 %v561, 2139095040
      %v684 = vshrl.u32 %v683, 23
      %v685 = vsub.s32 %v684, 127
      %v686 = vand.u32 2147483647, %v561
      %v687 = vand.u32 %v686, 8388607
      %v688 = vor.u32 %v687, 8388608
      %v689 = vsub.s32 0, %v688
      %v690 = vadd.s32 %v685, 1
      %vm691 = vcmp.gt.s32.totalorder %v690, 0
      %v692 = vsel %vm691, %v690, 0
      %v693 = vshrl.u32 %v692, 5
      %v694 = vand.u32 %v692, 31
      %v695 = vsub.s32 32, %v694
      %v696 = vshrl.u32 683565275, %v695
      %v697 = vshll.u32 683565275, %v694
      %v698 = vshrl.u32 2475754826, %v695
      %v699 = vor.u32 %v697, %v698
      %v700 = vshll.u32 2475754826, %v694
      %v701 = vshrl.u32 2131351028, %v695
      %v702 = vor.u32 %v700, %v701
      %v703 = vshll.u32 2131351028, %v694
      %v704 = vshrl.u32 2102212464, %v695
      %v705 = vor.u32 %v703, %v704
      %v706 = vshll.u32 2102212464, %v694
      %v707 = vshrl.u32 920167782, %v695
      %v708 = vor.u32 %v706, %v707
      %v709 = vshll.u32 920167782, %v694
      %v710 = vshrl.u32 1326507024, %v695
      %v711 = vor.u32 %v709, %v710
      %vm712 = vcmp.lt.s32.totalorder %v693, 1
      %vm713 = vcmp.lt.s32.totalorder %v693, 2
      %vm714 = vcmp.lt.s32.totalorder %v693, 3
      %vm715 = vcmp.lt.s32.totalorder %v693, 4
      %v716 = vsel %vm712, %v696, %v699
      %v717 = vsel %vm715, %v705, 2102212464
      %v718 = vsel %vm714, %v702, %v717
      %v719 = vsel %vm713, %v716, %v718
      %v720 = vsel %vm712, %v699, %v702
      %v721 = vsel %vm715, %v708, 920167782
      %v722 = vsel %vm714, %v705, %v721
      %v723 = vsel %vm713, %v720, %v722
      %v724 = vsel %vm712, %v702, %v705
      %v725 = vsel %vm715, %v711, 1326507024
      %v726 = vsel %vm714, %v708, %v725
      %v727 = vsel %vm713, %v724, %v726
      %v728 = vshll.u32 %v688, 8
      %v729 = vmul.u32.u64.compose %v728, %v727
      %v730 = vextract.low.u32 %v729
      %v731 = vextract.high.u32 %v729
      %v732 = vmul.u32.u64.compose %v728, %v723
      %v733 = vextract.low.u32 %v732
      %v734 = vextract.high.u32 %v732
      %v735 = vmul.u32 %v728, %v719
      %v736 = vadd.s32 %v731, %v733
      %vm737 = vc.u32 %v731, %v733
      %v738 = vadd.s32 %v734, 1
      %v739 = vsel %vm737, %v738, %v734
      %v740 = vadd.s32 %v735, %v739
      %v741 = vadd.s32 %v740, 536870912
      %v742 = vshrl.u32 %v741, 30
      %v743 = vshll.u32 %v742, 30
      %v744 = vsub.s32 %v740, %v743
      %vm745 = vcmp.lt.s32.totalorder %v744, 0
      %v746 = vsub.s32 0, %v744
      %v747 = vsel %vm745, %v746, %v744
      %v748 = vclz %v747
      %v749 = vsub.s32 %v748, 2
      %vm750 = vcmp.gt.s32.totalorder 0, %v749
      %v751 = vsel %vm750, 0, %v749
      %v752 = vsub.s32 32, %v751
      %v753 = vshll.u32 %v744, %v751
      %v754 = vshrl.u32 %v736, %v752
      %v755 = vor.u32 %v753, %v754
      %v756 = vsub.s32 4294967266, %v751
      %v757 = vadd.s32 %v756, 127
      %v758 = vshll.u32 %v757, 23
      %v759 = vor.u32 4788187, %v758
      %v760 = vand.u32 2147483647, %v759
      %v762 = vcvt.s32.f32 %v755
      %v763 = vmul.f32 %v762, %v760
      %v764 = vxor.u32 %v763, 2147483648
      %v765 = vsel %vm682, %v764, %v763
      %v766 = vsub.s32 4, %v742
      %v767 = vsel %vm682, %v766, %v742
      %v768 = vsel %vm681, %v561, %v765
      %v769 = vsel %vm681, 0, %v767
      %v770 = vcosq.f32.pop %v768
      %v771 = vsinq.f32.pop %v768
      %vm772 = vweird.f32 %v561
      %v773 = vadd.s32 %v769, 3
      %v774 = vand.u32 %v773, 3
      %vm775 = vcmp.lt.s32.totalorder %v774, 2
      %vm776 = vcmp.eq.s32.totalorder %v774, 0
      %v777 = vxor.u32 %v771, 2147483648
      %v778 = vsel %vm776, %v770, %v777
      %vm779 = vcmp.eq.s32.totalorder %v774, 2
      %v780 = vxor.u32 %v770, 2147483648
      %v781 = vsel %vm779, %v780, %v771
      %v782 = vsel %vm775, %v778, %v781
      %v783 = vsel %vm772, nan, %v782
      %v784 = vand.u32 2147483647, %v562
      %vm785 = vcmp.le.f32.partialorder %v784, 0.7853982
      %vm786 = vcmp.lt.s32.totalorder %v562, 0
      %v787 = vand.u32 %v562, 2139095040
      %v788 = vshrl.u32 %v787, 23
      %v789 = vsub.s32 %v788, 127
      %v790 = vand.u32 2147483647, %v562
      %v791 = vand.u32 %v790, 8388607
      %v792 = vor.u32 %v791, 8388608
      %v793 = vsub.s32 0, %v792
      %v794 = vadd.s32 %v789, 1
      %vm795 = vcmp.gt.s32.totalorder %v794, 0
      %v796 = vsel %vm795, %v794, 0
      %v797 = vshrl.u32 %v796, 5
      %v798 = vand.u32 %v796, 31
      %v799 = vsub.s32 32, %v798
      %v800 = vshrl.u32 683565275, %v799
      %v801 = vshll.u32 683565275, %v798
      %v802 = vshrl.u32 2475754826, %v799
      %v803 = vor.u32 %v801, %v802
      %v804 = vshll.u32 2475754826, %v798
      %v805 = vshrl.u32 2131351028, %v799
      %v806 = vor.u32 %v804, %v805
      %v807 = vshll.u32 2131351028, %v798
      %v808 = vshrl.u32 2102212464, %v799
      %v809 = vor.u32 %v807, %v808
      %v810 = vshll.u32 2102212464, %v798
      %v811 = vshrl.u32 920167782, %v799
      %v812 = vor.u32 %v810, %v811
      %v813 = vshll.u32 920167782, %v798
      %v814 = vshrl.u32 1326507024, %v799
      %v815 = vor.u32 %v813, %v814
      %vm816 = vcmp.lt.s32.totalorder %v797, 1
      %vm817 = vcmp.lt.s32.totalorder %v797, 2
      %vm818 = vcmp.lt.s32.totalorder %v797, 3
      %vm819 = vcmp.lt.s32.totalorder %v797, 4
      %v820 = vsel %vm816, %v800, %v803
      %v821 = vsel %vm819, %v809, 2102212464
      %v822 = vsel %vm818, %v806, %v821
      %v823 = vsel %vm817, %v820, %v822
      %v824 = vsel %vm816, %v803, %v806
      %v825 = vsel %vm819, %v812, 920167782
      %v826 = vsel %vm818, %v809, %v825
      %v827 = vsel %vm817, %v824, %v826
      %v828 = vsel %vm816, %v806, %v809
      %v829 = vsel %vm819, %v815, 1326507024
      %v830 = vsel %vm818, %v812, %v829
      %v831 = vsel %vm817, %v828, %v830
      %v832 = vshll.u32 %v792, 8
      %v833 = vmul.u32.u64.compose %v832, %v831
      %v834 = vextract.low.u32 %v833
      %v835 = vextract.high.u32 %v833
      %v836 = vmul.u32.u64.compose %v832, %v827
      %v837 = vextract.low.u32 %v836
      %v838 = vextract.high.u32 %v836
      %v839 = vmul.u32 %v832, %v823
      %v840 = vadd.s32 %v835, %v837
      %vm841 = vc.u32 %v835, %v837
      %v842 = vadd.s32 %v838, 1
      %v843 = vsel %vm841, %v842, %v838
      %v844 = vadd.s32 %v839, %v843
      %v845 = vadd.s32 %v844, 536870912
      %v846 = vshrl.u32 %v845, 30
      %v847 = vshll.u32 %v846, 30
      %v848 = vsub.s32 %v844, %v847
      %vm849 = vcmp.lt.s32.totalorder %v848, 0
      %v850 = vsub.s32 0, %v848
      %v851 = vsel %vm849, %v850, %v848
      %v852 = vclz %v851
      %v853 = vsub.s32 %v852, 2
      %vm854 = vcmp.gt.s32.totalorder 0, %v853
      %v855 = vsel %vm854, 0, %v853
      %v856 = vsub.s32 32, %v855
      %v857 = vshll.u32 %v848, %v855
      %v858 = vshrl.u32 %v840, %v856
      %v859 = vor.u32 %v857, %v858
      %v860 = vsub.s32 4294967266, %v855
      %v861 = vadd.s32 %v860, 127
      %v862 = vshll.u32 %v861, 23
      %v863 = vor.u32 4788187, %v862
      %v864 = vand.u32 2147483647, %v863
      %v866 = vcvt.s32.f32 %v859
      %v867 = vmul.f32 %v866, %v864
      %v868 = vxor.u32 %v867, 2147483648
      %v869 = vsel %vm786, %v868, %v867
      %v870 = vsub.s32 4, %v846
      %v871 = vsel %vm786, %v870, %v846
      %v872 = vsel %vm785, %v562, %v869
      %v873 = vsel %vm785, 0, %v871
      %v874 = vcosq.f32.pop %v872
      %v875 = vsinq.f32.pop %v872
      %vm876 = vweird.f32 %v562
      %v877 = vadd.s32 %v873, 3
      %v878 = vand.u32 %v877, 3
      %vm879 = vcmp.lt.s32.totalorder %v878, 2
      %vm880 = vcmp.eq.s32.totalorder %v878, 0
      %v881 = vxor.u32 %v875, 2147483648
      %v882 = vsel %vm880, %v874, %v881
      %vm883 = vcmp.eq.s32.totalorder %v878, 2
      %v884 = vxor.u32 %v874, 2147483648
      %v885 = vsel %vm883, %v884, %v875
      %v886 = vsel %vm879, %v882, %v885
      %v887 = vsel %vm876, nan, %v886
      %v888 = vand.u32 2147483647, %v563
      %vm889 = vcmp.le.f32.partialorder %v888, 0.7853982
      %vm890 = vcmp.lt.s32.totalorder %v563, 0
      %v891 = vand.u32 %v563, 2139095040
      %v892 = vshrl.u32 %v891, 23
      %v893 = vsub.s32 %v892, 127
      %v894 = vand.u32 2147483647, %v563
      %v895 = vand.u32 %v894, 8388607
      %v896 = vor.u32 %v895, 8388608
      %v897 = vsub.s32 0, %v896
      %v898 = vadd.s32 %v893, 1
      %vm899 = vcmp.gt.s32.totalorder %v898, 0
      %v900 = vsel %vm899, %v898, 0
      %v901 = vshrl.u32 %v900, 5
      %v902 = vand.u32 %v900, 31
      %v903 = vsub.s32 32, %v902
      %v904 = vshrl.u32 683565275, %v903
      %v905 = vshll.u32 683565275, %v902
      %v906 = vshrl.u32 2475754826, %v903
      %v907 = vor.u32 %v905, %v906
      %v908 = vshll.u32 2475754826, %v902
      %v909 = vshrl.u32 2131351028, %v903
      %v910 = vor.u32 %v908, %v909
      %v911 = vshll.u32 2131351028, %v902
      %v912 = vshrl.u32 2102212464, %v903
      %v913 = vor.u32 %v911, %v912
      %v914 = vshll.u32 2102212464, %v902
      %v915 = vshrl.u32 920167782, %v903
      %v916 = vor.u32 %v914, %v915
      %v917 = vshll.u32 920167782, %v902
      %v918 = vshrl.u32 1326507024, %v903
      %v919 = vor.u32 %v917, %v918
      %vm920 = vcmp.lt.s32.totalorder %v901, 1
      %vm921 = vcmp.lt.s32.totalorder %v901, 2
      %vm922 = vcmp.lt.s32.totalorder %v901, 3
      %vm923 = vcmp.lt.s32.totalorder %v901, 4
      %v924 = vsel %vm920, %v904, %v907
      %v925 = vsel %vm923, %v913, 2102212464
      %v926 = vsel %vm922, %v910, %v925
      %v927 = vsel %vm921, %v924, %v926
      %v928 = vsel %vm920, %v907, %v910
      %v929 = vsel %vm923, %v916, 920167782
      %v930 = vsel %vm922, %v913, %v929
      %v931 = vsel %vm921, %v928, %v930
      %v932 = vsel %vm920, %v910, %v913
      %v933 = vsel %vm923, %v919, 1326507024
      %v934 = vsel %vm922, %v916, %v933
      %v935 = vsel %vm921, %v932, %v934
      %v936 = vshll.u32 %v896, 8
      %v937 = vmul.u32.u64.compose %v936, %v935
      %v938 = vextract.low.u32 %v937
      %v939 = vextract.high.u32 %v937
      %v940 = vmul.u32.u64.compose %v936, %v931
      %v941 = vextract.low.u32 %v940
      %v942 = vextract.high.u32 %v940
      %v943 = vmul.u32 %v936, %v927
      %v944 = vadd.s32 %v939, %v941
      %vm945 = vc.u32 %v939, %v941
      %v946 = vadd.s32 %v942, 1
      %v947 = vsel %vm945, %v946, %v942
      %v948 = vadd.s32 %v943, %v947
      %v949 = vadd.s32 %v948, 536870912
      %v950 = vshrl.u32 %v949, 30
      %v951 = vshll.u32 %v950, 30
      %v952 = vsub.s32 %v948, %v951
      %vm953 = vcmp.lt.s32.totalorder %v952, 0
      %v954 = vsub.s32 0, %v952
      %v955 = vsel %vm953, %v954, %v952
      %v956 = vclz %v955
      %v957 = vsub.s32 %v956, 2
      %vm958 = vcmp.gt.s32.totalorder 0, %v957
      %v959 = vsel %vm958, 0, %v957
      %v960 = vsub.s32 32, %v959
      %v961 = vshll.u32 %v952, %v959
      %v962 = vshrl.u32 %v944, %v960
      %v963 = vor.u32 %v961, %v962
      %v964 = vsub.s32 4294967266, %v959
      %v965 = vadd.s32 %v964, 127
      %v966 = vshll.u32 %v965, 23
      %v967 = vor.u32 4788187, %v966
      %v968 = vand.u32 2147483647, %v967
      %v970 = vcvt.s32.f32 %v963
      %v971 = vmul.f32 %v970, %v968
      %v972 = vxor.u32 %v971, 2147483648
      %v973 = vsel %vm890, %v972, %v971
      %v974 = vsub.s32 4, %v950
      %v975 = vsel %vm890, %v974, %v950
      %v976 = vsel %vm889, %v563, %v973
      %v977 = vsel %vm889, 0, %v975
      %v978 = vcosq.f32.pop %v976
      %v979 = vsinq.f32.pop %v976
      %vm980 = vweird.f32 %v563
      %v981 = vadd.s32 %v977, 3
      %v982 = vand.u32 %v981, 3
      %vm983 = vcmp.lt.s32.totalorder %v982, 2
      %vm984 = vcmp.eq.s32.totalorder %v982, 0
      %v985 = vxor.u32 %v979, 2147483648
      %v986 = vsel %vm984, %v978, %v985
      %vm987 = vcmp.eq.s32.totalorder %v982, 2
      %v988 = vxor.u32 %v978, 2147483648
      %v989 = vsel %vm987, %v988, %v979
      %v990 = vsel %vm983, %v986, %v989
      %v991 = vsel %vm980, nan, %v990
      %v992 = vand.u32 2147483647, %v564
      %vm993 = vcmp.le.f32.partialorder %v992, 0.7853982
      %vm994 = vcmp.lt.s32.totalorder %v564, 0
      %v995 = vand.u32 %v564, 2139095040
      %v996 = vshrl.u32 %v995, 23
      %v997 = vsub.s32 %v996, 127
      %v998 = vand.u32 2147483647, %v564
      %v999 = vand.u32 %v998, 8388607
      %v1000 = vor.u32 %v999, 8388608
      %v1001 = vsub.s32 0, %v1000
      %v1002 = vadd.s32 %v997, 1
      %vm1003 = vcmp.gt.s32.totalorder %v1002, 0
      %v1004 = vsel %vm1003, %v1002, 0
      %v1005 = vshrl.u32 %v1004, 5
      %v1006 = vand.u32 %v1004, 31
      %v1007 = vsub.s32 32, %v1006
      %v1008 = vshrl.u32 683565275, %v1007
      %v1009 = vshll.u32 683565275, %v1006
      %v1010 = vshrl.u32 2475754826, %v1007
      %v1011 = vor.u32 %v1009, %v1010
      %v1012 = vshll.u32 2475754826, %v1006
      %v1013 = vshrl.u32 2131351028, %v1007
      %v1014 = vor.u32 %v1012, %v1013
      %v1015 = vshll.u32 2131351028, %v1006
      %v1016 = vshrl.u32 2102212464, %v1007
      %v1017 = vor.u32 %v1015, %v1016
      %v1018 = vshll.u32 2102212464, %v1006
      %v1019 = vshrl.u32 920167782, %v1007
      %v1020 = vor.u32 %v1018, %v1019
      %v1021 = vshll.u32 920167782, %v1006
      %v1022 = vshrl.u32 1326507024, %v1007
      %v1023 = vor.u32 %v1021, %v1022
      %vm1024 = vcmp.lt.s32.totalorder %v1005, 1
      %vm1025 = vcmp.lt.s32.totalorder %v1005, 2
      %vm1026 = vcmp.lt.s32.totalorder %v1005, 3
      %vm1027 = vcmp.lt.s32.totalorder %v1005, 4
      %v1028 = vsel %vm1024, %v1008, %v1011
      %v1029 = vsel %vm1027, %v1017, 2102212464
      %v1030 = vsel %vm1026, %v1014, %v1029
      %v1031 = vsel %vm1025, %v1028, %v1030
      %v1032 = vsel %vm1024, %v1011, %v1014
      %v1033 = vsel %vm1027, %v1020, 920167782
      %v1034 = vsel %vm1026, %v1017, %v1033
      %v1035 = vsel %vm1025, %v1032, %v1034
      %v1036 = vsel %vm1024, %v1014, %v1017
      %v1037 = vsel %vm1027, %v1023, 1326507024
      %v1038 = vsel %vm1026, %v1020, %v1037
      %v1039 = vsel %vm1025, %v1036, %v1038
      %v1040 = vshll.u32 %v1000, 8
      %v1041 = vmul.u32.u64.compose %v1040, %v1039
      %v1042 = vextract.low.u32 %v1041
      %v1043 = vextract.high.u32 %v1041
      %v1044 = vmul.u32.u64.compose %v1040, %v1035
      %v1045 = vextract.low.u32 %v1044
      %v1046 = vextract.high.u32 %v1044
      %v1047 = vmul.u32 %v1040, %v1031
      %v1048 = vadd.s32 %v1043, %v1045
      %vm1049 = vc.u32 %v1043, %v1045
      %v1050 = vadd.s32 %v1046, 1
      %v1051 = vsel %vm1049, %v1050, %v1046
      %v1052 = vadd.s32 %v1047, %v1051
      %v1053 = vadd.s32 %v1052, 536870912
      %v1054 = vshrl.u32 %v1053, 30
      %v1055 = vshll.u32 %v1054, 30
      %v1056 = vsub.s32 %v1052, %v1055
      %vm1057 = vcmp.lt.s32.totalorder %v1056, 0
      %v1058 = vsub.s32 0, %v1056
      %v1059 = vsel %vm1057, %v1058, %v1056
      %v1060 = vclz %v1059
      %v1061 = vsub.s32 %v1060, 2
      %vm1062 = vcmp.gt.s32.totalorder 0, %v1061
      %v1063 = vsel %vm1062, 0, %v1061
      %v1064 = vsub.s32 32, %v1063
      %v1065 = vshll.u32 %v1056, %v1063
      %v1066 = vshrl.u32 %v1048, %v1064
      %v1067 = vor.u32 %v1065, %v1066
      %v1068 = vsub.s32 4294967266, %v1063
      %v1069 = vadd.s32 %v1068, 127
      %v1070 = vshll.u32 %v1069, 23
      %v1071 = vor.u32 4788187, %v1070
      %v1072 = vand.u32 2147483647, %v1071
      %v1074 = vcvt.s32.f32 %v1067
      %v1075 = vmul.f32 %v1074, %v1072
      %v1076 = vxor.u32 %v1075, 2147483648
      %v1077 = vsel %vm994, %v1076, %v1075
      %v1078 = vsub.s32 4, %v1054
      %v1079 = vsel %vm994, %v1078, %v1054
      %v1080 = vsel %vm993, %v564, %v1077
      %v1081 = vsel %vm993, 0, %v1079
      %v1082 = vcosq.f32.pop %v1080
      %v1083 = vsinq.f32.pop %v1080
      %vm1084 = vweird.f32 %v564
      %v1085 = vadd.s32 %v1081, 3
      %v1086 = vand.u32 %v1085, 3
      %vm1087 = vcmp.lt.s32.totalorder %v1086, 2
      %vm1088 = vcmp.eq.s32.totalorder %v1086, 0
      %v1089 = vxor.u32 %v1083, 2147483648
      %v1090 = vsel %vm1088, %v1082, %v1089
      %vm1091 = vcmp.eq.s32.totalorder %v1086, 2
      %v1092 = vxor.u32 %v1082, 2147483648
      %v1093 = vsel %vm1091, %v1092, %v1083
      %v1094 = vsel %vm1087, %v1090, %v1093
      %v1095 = vsel %vm1084, nan, %v1094
      %v1096 = vand.u32 2147483647, %v565
      %vm1097 = vcmp.le.f32.partialorder %v1096, 0.7853982
      %vm1098 = vcmp.lt.s32.totalorder %v565, 0
      %v1099 = vand.u32 %v565, 2139095040
      %v1100 = vshrl.u32 %v1099, 23
      %v1101 = vsub.s32 %v1100, 127
      %v1102 = vand.u32 2147483647, %v565
      %v1103 = vand.u32 %v1102, 8388607
      %v1104 = vor.u32 %v1103, 8388608
      %v1105 = vsub.s32 0, %v1104
      %v1106 = vadd.s32 %v1101, 1
      %vm1107 = vcmp.gt.s32.totalorder %v1106, 0
      %v1108 = vsel %vm1107, %v1106, 0
      %v1109 = vshrl.u32 %v1108, 5
      %v1110 = vand.u32 %v1108, 31
      %v1111 = vsub.s32 32, %v1110
      %v1112 = vshrl.u32 683565275, %v1111
      %v1113 = vshll.u32 683565275, %v1110
      %v1114 = vshrl.u32 2475754826, %v1111
      %v1115 = vor.u32 %v1113, %v1114
      %v1116 = vshll.u32 2475754826, %v1110
      %v1117 = vshrl.u32 2131351028, %v1111
      %v1118 = vor.u32 %v1116, %v1117
      %v1119 = vshll.u32 2131351028, %v1110
      %v1120 = vshrl.u32 2102212464, %v1111
      %v1121 = vor.u32 %v1119, %v1120
      %v1122 = vshll.u32 2102212464, %v1110
      %v1123 = vshrl.u32 920167782, %v1111
      %v1124 = vor.u32 %v1122, %v1123
      %v1125 = vshll.u32 920167782, %v1110
      %v1126 = vshrl.u32 1326507024, %v1111
      %v1127 = vor.u32 %v1125, %v1126
      %vm1128 = vcmp.lt.s32.totalorder %v1109, 1
      %vm1129 = vcmp.lt.s32.totalorder %v1109, 2
      %vm1130 = vcmp.lt.s32.totalorder %v1109, 3
      %vm1131 = vcmp.lt.s32.totalorder %v1109, 4
      %v1132 = vsel %vm1128, %v1112, %v1115
      %v1133 = vsel %vm1131, %v1121, 2102212464
      %v1134 = vsel %vm1130, %v1118, %v1133
      %v1135 = vsel %vm1129, %v1132, %v1134
      %v1136 = vsel %vm1128, %v1115, %v1118
      %v1137 = vsel %vm1131, %v1124, 920167782
      %v1138 = vsel %vm1130, %v1121, %v1137
      %v1139 = vsel %vm1129, %v1136, %v1138
      %v1140 = vsel %vm1128, %v1118, %v1121
      %v1141 = vsel %vm1131, %v1127, 1326507024
      %v1142 = vsel %vm1130, %v1124, %v1141
      %v1143 = vsel %vm1129, %v1140, %v1142
      %v1144 = vshll.u32 %v1104, 8
      %v1145 = vmul.u32.u64.compose %v1144, %v1143
      %v1146 = vextract.low.u32 %v1145
      %v1147 = vextract.high.u32 %v1145
      %v1148 = vmul.u32.u64.compose %v1144, %v1139
      %v1149 = vextract.low.u32 %v1148
      %v1150 = vextract.high.u32 %v1148
      %v1151 = vmul.u32 %v1144, %v1135
      %v1152 = vadd.s32 %v1147, %v1149
      %vm1153 = vc.u32 %v1147, %v1149
      %v1154 = vadd.s32 %v1150, 1
      %v1155 = vsel %vm1153, %v1154, %v1150
      %v1156 = vadd.s32 %v1151, %v1155
      %v1157 = vadd.s32 %v1156, 536870912
      %v1158 = vshrl.u32 %v1157, 30
      %v1159 = vshll.u32 %v1158, 30
      %v1160 = vsub.s32 %v1156, %v1159
      %vm1161 = vcmp.lt.s32.totalorder %v1160, 0
      %v1162 = vsub.s32 0, %v1160
      %v1163 = vsel %vm1161, %v1162, %v1160
      %v1164 = vclz %v1163
      %v1165 = vsub.s32 %v1164, 2
      %vm1166 = vcmp.gt.s32.totalorder 0, %v1165
      %v1167 = vsel %vm1166, 0, %v1165
      %v1168 = vsub.s32 32, %v1167
      %v1169 = vshll.u32 %v1160, %v1167
      %v1170 = vshrl.u32 %v1152, %v1168
      %v1171 = vor.u32 %v1169, %v1170
      %v1172 = vsub.s32 4294967266, %v1167
      %v1173 = vadd.s32 %v1172, 127
      %v1174 = vshll.u32 %v1173, 23
      %v1175 = vor.u32 4788187, %v1174
      %v1176 = vand.u32 2147483647, %v1175
      %v1178 = vcvt.s32.f32 %v1171
      %v1179 = vmul.f32 %v1178, %v1176
      %v1180 = vxor.u32 %v1179, 2147483648
      %v1181 = vsel %vm1098, %v1180, %v1179
      %v1182 = vsub.s32 4, %v1158
      %v1183 = vsel %vm1098, %v1182, %v1158
      %v1184 = vsel %vm1097, %v565, %v1181
      %v1185 = vsel %vm1097, 0, %v1183
      %v1186 = vcosq.f32.pop %v1184
      %v1187 = vsinq.f32.pop %v1184
      %vm1188 = vweird.f32 %v565
      %v1189 = vadd.s32 %v1185, 3
      %v1190 = vand.u32 %v1189, 3
      %vm1191 = vcmp.lt.s32.totalorder %v1190, 2
      %vm1192 = vcmp.eq.s32.totalorder %v1190, 0
      %v1193 = vxor.u32 %v1187, 2147483648
      %v1194 = vsel %vm1192, %v1186, %v1193
      %vm1195 = vcmp.eq.s32.totalorder %v1190, 2
      %v1196 = vxor.u32 %v1186, 2147483648
      %v1197 = vsel %vm1195, %v1196, %v1187
      %v1198 = vsel %vm1191, %v1194, %v1197
      %v1199 = vsel %vm1188, nan, %v1198
      %v1200 = vand.u32 2147483647, %v566
      %vm1201 = vcmp.le.f32.partialorder %v1200, 0.7853982
      %vm1202 = vcmp.lt.s32.totalorder %v566, 0
      %v1203 = vand.u32 %v566, 2139095040
      %v1204 = vshrl.u32 %v1203, 23
      %v1205 = vsub.s32 %v1204, 127
      %v1206 = vand.u32 2147483647, %v566
      %v1207 = vand.u32 %v1206, 8388607
      %v1208 = vor.u32 %v1207, 8388608
      %v1209 = vsub.s32 0, %v1208
      %v1210 = vadd.s32 %v1205, 1
      %vm1211 = vcmp.gt.s32.totalorder %v1210, 0
      %v1212 = vsel %vm1211, %v1210, 0
      %v1213 = vshrl.u32 %v1212, 5
      %v1214 = vand.u32 %v1212, 31
      %v1215 = vsub.s32 32, %v1214
      %v1216 = vshrl.u32 683565275, %v1215
      %v1217 = vshll.u32 683565275, %v1214
      %v1218 = vshrl.u32 2475754826, %v1215
      %v1219 = vor.u32 %v1217, %v1218
      %v1220 = vshll.u32 2475754826, %v1214
      %v1221 = vshrl.u32 2131351028, %v1215
      %v1222 = vor.u32 %v1220, %v1221
      %v1223 = vshll.u32 2131351028, %v1214
      %v1224 = vshrl.u32 2102212464, %v1215
      %v1225 = vor.u32 %v1223, %v1224
      %v1226 = vshll.u32 2102212464, %v1214
      %v1227 = vshrl.u32 920167782, %v1215
      %v1228 = vor.u32 %v1226, %v1227
      %v1229 = vshll.u32 920167782, %v1214
      %v1230 = vshrl.u32 1326507024, %v1215
      %v1231 = vor.u32 %v1229, %v1230
      %vm1232 = vcmp.lt.s32.totalorder %v1213, 1
      %vm1233 = vcmp.lt.s32.totalorder %v1213, 2
      %vm1234 = vcmp.lt.s32.totalorder %v1213, 3
      %vm1235 = vcmp.lt.s32.totalorder %v1213, 4
      %v1236 = vsel %vm1232, %v1216, %v1219
      %v1237 = vsel %vm1235, %v1225, 2102212464
      %v1238 = vsel %vm1234, %v1222, %v1237
      %v1239 = vsel %vm1233, %v1236, %v1238
      %v1240 = vsel %vm1232, %v1219, %v1222
      %v1241 = vsel %vm1235, %v1228, 920167782
      %v1242 = vsel %vm1234, %v1225, %v1241
      %v1243 = vsel %vm1233, %v1240, %v1242
      %v1244 = vsel %vm1232, %v1222, %v1225
      %v1245 = vsel %vm1235, %v1231, 1326507024
      %v1246 = vsel %vm1234, %v1228, %v1245
      %v1247 = vsel %vm1233, %v1244, %v1246
      %v1248 = vshll.u32 %v1208, 8
      %v1249 = vmul.u32.u64.compose %v1248, %v1247
      %v1250 = vextract.low.u32 %v1249
      %v1251 = vextract.high.u32 %v1249
      %v1252 = vmul.u32.u64.compose %v1248, %v1243
      %v1253 = vextract.low.u32 %v1252
      %v1254 = vextract.high.u32 %v1252
      %v1255 = vmul.u32 %v1248, %v1239
      %v1256 = vadd.s32 %v1251, %v1253
      %vm1257 = vc.u32 %v1251, %v1253
      %v1258 = vadd.s32 %v1254, 1
      %v1259 = vsel %vm1257, %v1258, %v1254
      %v1260 = vadd.s32 %v1255, %v1259
      %v1261 = vadd.s32 %v1260, 536870912
      %v1262 = vshrl.u32 %v1261, 30
      %v1263 = vshll.u32 %v1262, 30
      %v1264 = vsub.s32 %v1260, %v1263
      %vm1265 = vcmp.lt.s32.totalorder %v1264, 0
      %v1266 = vsub.s32 0, %v1264
      %v1267 = vsel %vm1265, %v1266, %v1264
      %v1268 = vclz %v1267
      %v1269 = vsub.s32 %v1268, 2
      %vm1270 = vcmp.gt.s32.totalorder 0, %v1269
      %v1271 = vsel %vm1270, 0, %v1269
      %v1272 = vsub.s32 32, %v1271
      %v1273 = vshll.u32 %v1264, %v1271
      %v1274 = vshrl.u32 %v1256, %v1272
      %v1275 = vor.u32 %v1273, %v1274
      %v1276 = vsub.s32 4294967266, %v1271
      %v1277 = vadd.s32 %v1276, 127
      %v1278 = vshll.u32 %v1277, 23
      %v1279 = vor.u32 4788187, %v1278
      %v1280 = vand.u32 2147483647, %v1279
      %v1282 = vcvt.s32.f32 %v1275
      %v1283 = vmul.f32 %v1282, %v1280
      %v1284 = vxor.u32 %v1283, 2147483648
      %v1285 = vsel %vm1202, %v1284, %v1283
      %v1286 = vsub.s32 4, %v1262
      %v1287 = vsel %vm1202, %v1286, %v1262
      %v1288 = vsel %vm1201, %v566, %v1285
      %v1289 = vsel %vm1201, 0, %v1287
      %v1290 = vcosq.f32.pop %v1288
      %v1291 = vsinq.f32.pop %v1288
      %vm1292 = vweird.f32 %v566
      %v1293 = vadd.s32 %v1289, 3
      %v1294 = vand.u32 %v1293, 3
      %vm1295 = vcmp.lt.s32.totalorder %v1294, 2
      %vm1296 = vcmp.eq.s32.totalorder %v1294, 0
      %v1297 = vxor.u32 %v1291, 2147483648
      %v1298 = vsel %vm1296, %v1290, %v1297
      %vm1299 = vcmp.eq.s32.totalorder %v1294, 2
      %v1300 = vxor.u32 %v1290, 2147483648
      %v1301 = vsel %vm1299, %v1300, %v1291
      %v1302 = vsel %vm1295, %v1298, %v1301
      %v1303 = vsel %vm1292, nan, %v1302
      %v1304 = vand.u32 2147483647, %v567
      %vm1305 = vcmp.le.f32.partialorder %v1304, 0.7853982
      %vm1306 = vcmp.lt.s32.totalorder %v567, 0
      %v1307 = vand.u32 %v567, 2139095040
      %v1308 = vshrl.u32 %v1307, 23
      %v1309 = vsub.s32 %v1308, 127
      %v1310 = vand.u32 2147483647, %v567
      %v1311 = vand.u32 %v1310, 8388607
      %v1312 = vor.u32 %v1311, 8388608
      %v1313 = vsub.s32 0, %v1312
      %v1314 = vadd.s32 %v1309, 1
      %vm1315 = vcmp.gt.s32.totalorder %v1314, 0
      %v1316 = vsel %vm1315, %v1314, 0
      %v1317 = vshrl.u32 %v1316, 5
      %v1318 = vand.u32 %v1316, 31
      %v1319 = vsub.s32 32, %v1318
      %v1320 = vshrl.u32 683565275, %v1319
      %v1321 = vshll.u32 683565275, %v1318
      %v1322 = vshrl.u32 2475754826, %v1319
      %v1323 = vor.u32 %v1321, %v1322
      %v1324 = vshll.u32 2475754826, %v1318
      %v1325 = vshrl.u32 2131351028, %v1319
      %v1326 = vor.u32 %v1324, %v1325
      %v1327 = vshll.u32 2131351028, %v1318
      %v1328 = vshrl.u32 2102212464, %v1319
      %v1329 = vor.u32 %v1327, %v1328
      %v1330 = vshll.u32 2102212464, %v1318
      %v1331 = vshrl.u32 920167782, %v1319
      %v1332 = vor.u32 %v1330, %v1331
      %v1333 = vshll.u32 920167782, %v1318
      %v1334 = vshrl.u32 1326507024, %v1319
      %v1335 = vor.u32 %v1333, %v1334
      %vm1336 = vcmp.lt.s32.totalorder %v1317, 1
      %vm1337 = vcmp.lt.s32.totalorder %v1317, 2
      %vm1338 = vcmp.lt.s32.totalorder %v1317, 3
      %vm1339 = vcmp.lt.s32.totalorder %v1317, 4
      %v1340 = vsel %vm1336, %v1320, %v1323
      %v1341 = vsel %vm1339, %v1329, 2102212464
      %v1342 = vsel %vm1338, %v1326, %v1341
      %v1343 = vsel %vm1337, %v1340, %v1342
      %v1344 = vsel %vm1336, %v1323, %v1326
      %v1345 = vsel %vm1339, %v1332, 920167782
      %v1346 = vsel %vm1338, %v1329, %v1345
      %v1347 = vsel %vm1337, %v1344, %v1346
      %v1348 = vsel %vm1336, %v1326, %v1329
      %v1349 = vsel %vm1339, %v1335, 1326507024
      %v1350 = vsel %vm1338, %v1332, %v1349
      %v1351 = vsel %vm1337, %v1348, %v1350
      %v1352 = vshll.u32 %v1312, 8
      %v1353 = vmul.u32.u64.compose %v1352, %v1351
      %v1354 = vextract.low.u32 %v1353
      %v1355 = vextract.high.u32 %v1353
      %v1356 = vmul.u32.u64.compose %v1352, %v1347
      %v1357 = vextract.low.u32 %v1356
      %v1358 = vextract.high.u32 %v1356
      %v1359 = vmul.u32 %v1352, %v1343
      %v1360 = vadd.s32 %v1355, %v1357
      %vm1361 = vc.u32 %v1355, %v1357
      %v1362 = vadd.s32 %v1358, 1
      %v1363 = vsel %vm1361, %v1362, %v1358
      %v1364 = vadd.s32 %v1359, %v1363
      %v1365 = vadd.s32 %v1364, 536870912
      %v1366 = vshrl.u32 %v1365, 30
      %v1367 = vshll.u32 %v1366, 30
      %v1368 = vsub.s32 %v1364, %v1367
      %vm1369 = vcmp.lt.s32.totalorder %v1368, 0
      %v1370 = vsub.s32 0, %v1368
      %v1371 = vsel %vm1369, %v1370, %v1368
      %v1372 = vclz %v1371
      %v1373 = vsub.s32 %v1372, 2
      %vm1374 = vcmp.gt.s32.totalorder 0, %v1373
      %v1375 = vsel %vm1374, 0, %v1373
      %v1376 = vsub.s32 32, %v1375
      %v1377 = vshll.u32 %v1368, %v1375
      %v1378 = vshrl.u32 %v1360, %v1376
      %v1379 = vor.u32 %v1377, %v1378
      %v1380 = vsub.s32 4294967266, %v1375
      %v1381 = vadd.s32 %v1380, 127
      %v1382 = vshll.u32 %v1381, 23
      %v1383 = vor.u32 4788187, %v1382
      %v1384 = vand.u32 2147483647, %v1383
      %v1386 = vcvt.s32.f32 %v1379
      %v1387 = vmul.f32 %v1386, %v1384
      %v1388 = vxor.u32 %v1387, 2147483648
      %v1389 = vsel %vm1306, %v1388, %v1387
      %v1390 = vsub.s32 4, %v1366
      %v1391 = vsel %vm1306, %v1390, %v1366
      %v1392 = vsel %vm1305, %v567, %v1389
      %v1393 = vsel %vm1305, 0, %v1391
      %v1394 = vcosq.f32.pop %v1392
      %v1395 = vsinq.f32.pop %v1392
      %vm1396 = vweird.f32 %v567
      %v1397 = vadd.s32 %v1393, 3
      %v1398 = vand.u32 %v1397, 3
      %vm1399 = vcmp.lt.s32.totalorder %v1398, 2
      %vm1400 = vcmp.eq.s32.totalorder %v1398, 0
      %v1401 = vxor.u32 %v1395, 2147483648
      %v1402 = vsel %vm1400, %v1394, %v1401
      %vm1403 = vcmp.eq.s32.totalorder %v1398, 2
      %v1404 = vxor.u32 %v1394, 2147483648
      %v1405 = vsel %vm1403, %v1404, %v1395
      %v1406 = vsel %vm1399, %v1402, %v1405
      %v1407 = vsel %vm1396, nan, %v1406
      %v1408 = vand.u32 2147483647, %v568
      %vm1409 = vcmp.le.f32.partialorder %v1408, 0.7853982
      %vm1410 = vcmp.lt.s32.totalorder %v568, 0
      %v1411 = vand.u32 %v568, 2139095040
      %v1412 = vshrl.u32 %v1411, 23
      %v1413 = vsub.s32 %v1412, 127
      %v1414 = vand.u32 2147483647, %v568
      %v1415 = vand.u32 %v1414, 8388607
      %v1416 = vor.u32 %v1415, 8388608
      %v1417 = vsub.s32 0, %v1416
      %v1418 = vadd.s32 %v1413, 1
      %vm1419 = vcmp.gt.s32.totalorder %v1418, 0
      %v1420 = vsel %vm1419, %v1418, 0
      %v1421 = vshrl.u32 %v1420, 5
      %v1422 = vand.u32 %v1420, 31
      %v1423 = vsub.s32 32, %v1422
      %v1424 = vshrl.u32 683565275, %v1423
      %v1425 = vshll.u32 683565275, %v1422
      %v1426 = vshrl.u32 2475754826, %v1423
      %v1427 = vor.u32 %v1425, %v1426
      %v1428 = vshll.u32 2475754826, %v1422
      %v1429 = vshrl.u32 2131351028, %v1423
      %v1430 = vor.u32 %v1428, %v1429
      %v1431 = vshll.u32 2131351028, %v1422
      %v1432 = vshrl.u32 2102212464, %v1423
      %v1433 = vor.u32 %v1431, %v1432
      %v1434 = vshll.u32 2102212464, %v1422
      %v1435 = vshrl.u32 920167782, %v1423
      %v1436 = vor.u32 %v1434, %v1435
      %v1437 = vshll.u32 920167782, %v1422
      %v1438 = vshrl.u32 1326507024, %v1423
      %v1439 = vor.u32 %v1437, %v1438
      %vm1440 = vcmp.lt.s32.totalorder %v1421, 1
      %vm1441 = vcmp.lt.s32.totalorder %v1421, 2
      %vm1442 = vcmp.lt.s32.totalorder %v1421, 3
      %vm1443 = vcmp.lt.s32.totalorder %v1421, 4
      %v1444 = vsel %vm1440, %v1424, %v1427
      %v1445 = vsel %vm1443, %v1433, 2102212464
      %v1446 = vsel %vm1442, %v1430, %v1445
      %v1447 = vsel %vm1441, %v1444, %v1446
      %v1448 = vsel %vm1440, %v1427, %v1430
      %v1449 = vsel %vm1443, %v1436, 920167782
      %v1450 = vsel %vm1442, %v1433, %v1449
      %v1451 = vsel %vm1441, %v1448, %v1450
      %v1452 = vsel %vm1440, %v1430, %v1433
      %v1453 = vsel %vm1443, %v1439, 1326507024
      %v1454 = vsel %vm1442, %v1436, %v1453
      %v1455 = vsel %vm1441, %v1452, %v1454
      %v1456 = vshll.u32 %v1416, 8
      %v1457 = vmul.u32.u64.compose %v1456, %v1455
      %v1458 = vextract.low.u32 %v1457
      %v1459 = vextract.high.u32 %v1457
      %v1460 = vmul.u32.u64.compose %v1456, %v1451
      %v1461 = vextract.low.u32 %v1460
      %v1462 = vextract.high.u32 %v1460
      %v1463 = vmul.u32 %v1456, %v1447
      %v1464 = vadd.s32 %v1459, %v1461
      %vm1465 = vc.u32 %v1459, %v1461
      %v1466 = vadd.s32 %v1462, 1
      %v1467 = vsel %vm1465, %v1466, %v1462
      %v1468 = vadd.s32 %v1463, %v1467
      %v1469 = vadd.s32 %v1468, 536870912
      %v1470 = vshrl.u32 %v1469, 30
      %v1471 = vshll.u32 %v1470, 30
      %v1472 = vsub.s32 %v1468, %v1471
      %vm1473 = vcmp.lt.s32.totalorder %v1472, 0
      %v1474 = vsub.s32 0, %v1472
      %v1475 = vsel %vm1473, %v1474, %v1472
      %v1476 = vclz %v1475
      %v1477 = vsub.s32 %v1476, 2
      %vm1478 = vcmp.gt.s32.totalorder 0, %v1477
      %v1479 = vsel %vm1478, 0, %v1477
      %v1480 = vsub.s32 32, %v1479
      %v1481 = vshll.u32 %v1472, %v1479
      %v1482 = vshrl.u32 %v1464, %v1480
      %v1483 = vor.u32 %v1481, %v1482
      %v1484 = vsub.s32 4294967266, %v1479
      %v1485 = vadd.s32 %v1484, 127
      %v1486 = vshll.u32 %v1485, 23
      %v1487 = vor.u32 4788187, %v1486
      %v1488 = vand.u32 2147483647, %v1487
      %v1490 = vcvt.s32.f32 %v1483
      %v1491 = vmul.f32 %v1490, %v1488
      %v1492 = vxor.u32 %v1491, 2147483648
      %v1493 = vsel %vm1410, %v1492, %v1491
      %v1494 = vsub.s32 4, %v1470
      %v1495 = vsel %vm1410, %v1494, %v1470
      %v1496 = vsel %vm1409, %v568, %v1493
      %v1497 = vsel %vm1409, 0, %v1495
      %v1498 = vcosq.f32.pop %v1496
      %v1499 = vsinq.f32.pop %v1496
      %vm1500 = vweird.f32 %v568
      %v1501 = vadd.s32 %v1497, 3
      %v1502 = vand.u32 %v1501, 3
      %vm1503 = vcmp.lt.s32.totalorder %v1502, 2
      %vm1504 = vcmp.eq.s32.totalorder %v1502, 0
      %v1505 = vxor.u32 %v1499, 2147483648
      %v1506 = vsel %vm1504, %v1498, %v1505
      %vm1507 = vcmp.eq.s32.totalorder %v1502, 2
      %v1508 = vxor.u32 %v1498, 2147483648
      %v1509 = vsel %vm1507, %v1508, %v1499
      %v1510 = vsel %vm1503, %v1506, %v1509
      %v1511 = vsel %vm1500, nan, %v1510
      %v1512 = vand.u32 2147483647, %v569
      %vm1513 = vcmp.le.f32.partialorder %v1512, 0.7853982
      %vm1514 = vcmp.lt.s32.totalorder %v569, 0
      %v1515 = vand.u32 %v569, 2139095040
      %v1516 = vshrl.u32 %v1515, 23
      %v1517 = vsub.s32 %v1516, 127
      %v1518 = vand.u32 2147483647, %v569
      %v1519 = vand.u32 %v1518, 8388607
      %v1520 = vor.u32 %v1519, 8388608
      %v1521 = vsub.s32 0, %v1520
      %v1522 = vadd.s32 %v1517, 1
      %vm1523 = vcmp.gt.s32.totalorder %v1522, 0
      %v1524 = vsel %vm1523, %v1522, 0
      %v1525 = vshrl.u32 %v1524, 5
      %v1526 = vand.u32 %v1524, 31
      %v1527 = vsub.s32 32, %v1526
      %v1528 = vshrl.u32 683565275, %v1527
      %v1529 = vshll.u32 683565275, %v1526
      %v1530 = vshrl.u32 2475754826, %v1527
      %v1531 = vor.u32 %v1529, %v1530
      %v1532 = vshll.u32 2475754826, %v1526
      %v1533 = vshrl.u32 2131351028, %v1527
      %v1534 = vor.u32 %v1532, %v1533
      %v1535 = vshll.u32 2131351028, %v1526
      %v1536 = vshrl.u32 2102212464, %v1527
      %v1537 = vor.u32 %v1535, %v1536
      %v1538 = vshll.u32 2102212464, %v1526
      %v1539 = vshrl.u32 920167782, %v1527
      %v1540 = vor.u32 %v1538, %v1539
      %v1541 = vshll.u32 920167782, %v1526
      %v1542 = vshrl.u32 1326507024, %v1527
      %v1543 = vor.u32 %v1541, %v1542
      %vm1544 = vcmp.lt.s32.totalorder %v1525, 1
      %vm1545 = vcmp.lt.s32.totalorder %v1525, 2
      %vm1546 = vcmp.lt.s32.totalorder %v1525, 3
      %vm1547 = vcmp.lt.s32.totalorder %v1525, 4
      %v1548 = vsel %vm1544, %v1528, %v1531
      %v1549 = vsel %vm1547, %v1537, 2102212464
      %v1550 = vsel %vm1546, %v1534, %v1549
      %v1551 = vsel %vm1545, %v1548, %v1550
      %v1552 = vsel %vm1544, %v1531, %v1534
      %v1553 = vsel %vm1547, %v1540, 920167782
      %v1554 = vsel %vm1546, %v1537, %v1553
      %v1555 = vsel %vm1545, %v1552, %v1554
      %v1556 = vsel %vm1544, %v1534, %v1537
      %v1557 = vsel %vm1547, %v1543, 1326507024
      %v1558 = vsel %vm1546, %v1540, %v1557
      %v1559 = vsel %vm1545, %v1556, %v1558
      %v1560 = vshll.u32 %v1520, 8
      %v1561 = vmul.u32.u64.compose %v1560, %v1559
      %v1562 = vextract.low.u32 %v1561
      %v1563 = vextract.high.u32 %v1561
      %v1564 = vmul.u32.u64.compose %v1560, %v1555
      %v1565 = vextract.low.u32 %v1564
      %v1566 = vextract.high.u32 %v1564
      %v1567 = vmul.u32 %v1560, %v1551
      %v1568 = vadd.s32 %v1563, %v1565
      %vm1569 = vc.u32 %v1563, %v1565
      %v1570 = vadd.s32 %v1566, 1
      %v1571 = vsel %vm1569, %v1570, %v1566
      %v1572 = vadd.s32 %v1567, %v1571
      %v1573 = vadd.s32 %v1572, 536870912
      %v1574 = vshrl.u32 %v1573, 30
      %v1575 = vshll.u32 %v1574, 30
      %v1576 = vsub.s32 %v1572, %v1575
      %vm1577 = vcmp.lt.s32.totalorder %v1576, 0
      %v1578 = vsub.s32 0, %v1576
      %v1579 = vsel %vm1577, %v1578, %v1576
      %v1580 = vclz %v1579
      %v1581 = vsub.s32 %v1580, 2
      %vm1582 = vcmp.gt.s32.totalorder 0, %v1581
      %v1583 = vsel %vm1582, 0, %v1581
      %v1584 = vsub.s32 32, %v1583
      %v1585 = vshll.u32 %v1576, %v1583
      %v1586 = vshrl.u32 %v1568, %v1584
      %v1587 = vor.u32 %v1585, %v1586
      %v1588 = vsub.s32 4294967266, %v1583
      %v1589 = vadd.s32 %v1588, 127
      %v1590 = vshll.u32 %v1589, 23
      %v1591 = vor.u32 4788187, %v1590
      %v1592 = vand.u32 2147483647, %v1591
      %v1594 = vcvt.s32.f32 %v1587
      %v1595 = vmul.f32 %v1594, %v1592
      %v1596 = vxor.u32 %v1595, 2147483648
      %v1597 = vsel %vm1514, %v1596, %v1595
      %v1598 = vsub.s32 4, %v1574
      %v1599 = vsel %vm1514, %v1598, %v1574
      %v1600 = vsel %vm1513, %v569, %v1597
      %v1601 = vsel %vm1513, 0, %v1599
      %v1602 = vcosq.f32.pop %v1600
      %v1603 = vsinq.f32.pop %v1600
      %vm1604 = vweird.f32 %v569
      %v1605 = vadd.s32 %v1601, 3
      %v1606 = vand.u32 %v1605, 3
      %vm1607 = vcmp.lt.s32.totalorder %v1606, 2
      %vm1608 = vcmp.eq.s32.totalorder %v1606, 0
      %v1609 = vxor.u32 %v1603, 2147483648
      %v1610 = vsel %vm1608, %v1602, %v1609
      %vm1611 = vcmp.eq.s32.totalorder %v1606, 2
      %v1612 = vxor.u32 %v1602, 2147483648
      %v1613 = vsel %vm1611, %v1612, %v1603
      %v1614 = vsel %vm1607, %v1610, %v1613
      %v1615 = vsel %vm1604, nan, %v1614
      %v1616 = vand.u32 2147483647, %v570
      %vm1617 = vcmp.le.f32.partialorder %v1616, 0.7853982
      %vm1618 = vcmp.lt.s32.totalorder %v570, 0
      %v1619 = vand.u32 %v570, 2139095040
      %v1620 = vshrl.u32 %v1619, 23
      %v1621 = vsub.s32 %v1620, 127
      %v1622 = vand.u32 2147483647, %v570
      %v1623 = vand.u32 %v1622, 8388607
      %v1624 = vor.u32 %v1623, 8388608
      %v1625 = vsub.s32 0, %v1624
      %v1626 = vadd.s32 %v1621, 1
      %vm1627 = vcmp.gt.s32.totalorder %v1626, 0
      %v1628 = vsel %vm1627, %v1626, 0
      %v1629 = vshrl.u32 %v1628, 5
      %v1630 = vand.u32 %v1628, 31
      %v1631 = vsub.s32 32, %v1630
      %v1632 = vshrl.u32 683565275, %v1631
      %v1633 = vshll.u32 683565275, %v1630
      %v1634 = vshrl.u32 2475754826, %v1631
      %v1635 = vor.u32 %v1633, %v1634
      %v1636 = vshll.u32 2475754826, %v1630
      %v1637 = vshrl.u32 2131351028, %v1631
      %v1638 = vor.u32 %v1636, %v1637
      %v1639 = vshll.u32 2131351028, %v1630
      %v1640 = vshrl.u32 2102212464, %v1631
      %v1641 = vor.u32 %v1639, %v1640
      %v1642 = vshll.u32 2102212464, %v1630
      %v1643 = vshrl.u32 920167782, %v1631
      %v1644 = vor.u32 %v1642, %v1643
      %v1645 = vshll.u32 920167782, %v1630
      %v1646 = vshrl.u32 1326507024, %v1631
      %v1647 = vor.u32 %v1645, %v1646
      %vm1648 = vcmp.lt.s32.totalorder %v1629, 1
      %vm1649 = vcmp.lt.s32.totalorder %v1629, 2
      %vm1650 = vcmp.lt.s32.totalorder %v1629, 3
      %vm1651 = vcmp.lt.s32.totalorder %v1629, 4
      %v1652 = vsel %vm1648, %v1632, %v1635
      %v1653 = vsel %vm1651, %v1641, 2102212464
      %v1654 = vsel %vm1650, %v1638, %v1653
      %v1655 = vsel %vm1649, %v1652, %v1654
      %v1656 = vsel %vm1648, %v1635, %v1638
      %v1657 = vsel %vm1651, %v1644, 920167782
      %v1658 = vsel %vm1650, %v1641, %v1657
      %v1659 = vsel %vm1649, %v1656, %v1658
      %v1660 = vsel %vm1648, %v1638, %v1641
      %v1661 = vsel %vm1651, %v1647, 1326507024
      %v1662 = vsel %vm1650, %v1644, %v1661
      %v1663 = vsel %vm1649, %v1660, %v1662
      %v1664 = vshll.u32 %v1624, 8
      %v1665 = vmul.u32.u64.compose %v1664, %v1663
      %v1666 = vextract.low.u32 %v1665
      %v1667 = vextract.high.u32 %v1665
      %v1668 = vmul.u32.u64.compose %v1664, %v1659
      %v1669 = vextract.low.u32 %v1668
      %v1670 = vextract.high.u32 %v1668
      %v1671 = vmul.u32 %v1664, %v1655
      %v1672 = vadd.s32 %v1667, %v1669
      %vm1673 = vc.u32 %v1667, %v1669
      %v1674 = vadd.s32 %v1670, 1
      %v1675 = vsel %vm1673, %v1674, %v1670
      %v1676 = vadd.s32 %v1671, %v1675
      %v1677 = vadd.s32 %v1676, 536870912
      %v1678 = vshrl.u32 %v1677, 30
      %v1679 = vshll.u32 %v1678, 30
      %v1680 = vsub.s32 %v1676, %v1679
      %vm1681 = vcmp.lt.s32.totalorder %v1680, 0
      %v1682 = vsub.s32 0, %v1680
      %v1683 = vsel %vm1681, %v1682, %v1680
      %v1684 = vclz %v1683
      %v1685 = vsub.s32 %v1684, 2
      %vm1686 = vcmp.gt.s32.totalorder 0, %v1685
      %v1687 = vsel %vm1686, 0, %v1685
      %v1688 = vsub.s32 32, %v1687
      %v1689 = vshll.u32 %v1680, %v1687
      %v1690 = vshrl.u32 %v1672, %v1688
      %v1691 = vor.u32 %v1689, %v1690
      %v1692 = vsub.s32 4294967266, %v1687
      %v1693 = vadd.s32 %v1692, 127
      %v1694 = vshll.u32 %v1693, 23
      %v1695 = vor.u32 4788187, %v1694
      %v1696 = vand.u32 2147483647, %v1695
      %v1698 = vcvt.s32.f32 %v1691
      %v1699 = vmul.f32 %v1698, %v1696
      %v1700 = vxor.u32 %v1699, 2147483648
      %v1701 = vsel %vm1618, %v1700, %v1699
      %v1702 = vsub.s32 4, %v1678
      %v1703 = vsel %vm1618, %v1702, %v1678
      %v1704 = vsel %vm1617, %v570, %v1701
      %v1705 = vsel %vm1617, 0, %v1703
      %v1706 = vcosq.f32.pop %v1704
      %v1707 = vsinq.f32.pop %v1704
      %vm1708 = vweird.f32 %v570
      %v1709 = vadd.s32 %v1705, 3
      %v1710 = vand.u32 %v1709, 3
      %vm1711 = vcmp.lt.s32.totalorder %v1710, 2
      %vm1712 = vcmp.eq.s32.totalorder %v1710, 0
      %v1713 = vxor.u32 %v1707, 2147483648
      %v1714 = vsel %vm1712, %v1706, %v1713
      %vm1715 = vcmp.eq.s32.totalorder %v1710, 2
      %v1716 = vxor.u32 %v1706, 2147483648
      %v1717 = vsel %vm1715, %v1716, %v1707
      %v1718 = vsel %vm1711, %v1714, %v1717
      %v1719 = vsel %vm1708, nan, %v1718
      %v1720 = vand.u32 2147483647, %v571
      %vm1721 = vcmp.le.f32.partialorder %v1720, 0.7853982
      %vm1722 = vcmp.lt.s32.totalorder %v571, 0
      %v1723 = vand.u32 %v571, 2139095040
      %v1724 = vshrl.u32 %v1723, 23
      %v1725 = vsub.s32 %v1724, 127
      %v1726 = vand.u32 2147483647, %v571
      %v1727 = vand.u32 %v1726, 8388607
      %v1728 = vor.u32 %v1727, 8388608
      %v1729 = vsub.s32 0, %v1728
      %v1730 = vadd.s32 %v1725, 1
      %vm1731 = vcmp.gt.s32.totalorder %v1730, 0
      %v1732 = vsel %vm1731, %v1730, 0
      %v1733 = vshrl.u32 %v1732, 5
      %v1734 = vand.u32 %v1732, 31
      %v1735 = vsub.s32 32, %v1734
      %v1736 = vshrl.u32 683565275, %v1735
      %v1737 = vshll.u32 683565275, %v1734
      %v1738 = vshrl.u32 2475754826, %v1735
      %v1739 = vor.u32 %v1737, %v1738
      %v1740 = vshll.u32 2475754826, %v1734
      %v1741 = vshrl.u32 2131351028, %v1735
      %v1742 = vor.u32 %v1740, %v1741
      %v1743 = vshll.u32 2131351028, %v1734
      %v1744 = vshrl.u32 2102212464, %v1735
      %v1745 = vor.u32 %v1743, %v1744
      %v1746 = vshll.u32 2102212464, %v1734
      %v1747 = vshrl.u32 920167782, %v1735
      %v1748 = vor.u32 %v1746, %v1747
      %v1749 = vshll.u32 920167782, %v1734
      %v1750 = vshrl.u32 1326507024, %v1735
      %v1751 = vor.u32 %v1749, %v1750
      %vm1752 = vcmp.lt.s32.totalorder %v1733, 1
      %vm1753 = vcmp.lt.s32.totalorder %v1733, 2
      %vm1754 = vcmp.lt.s32.totalorder %v1733, 3
      %vm1755 = vcmp.lt.s32.totalorder %v1733, 4
      %v1756 = vsel %vm1752, %v1736, %v1739
      %v1757 = vsel %vm1755, %v1745, 2102212464
      %v1758 = vsel %vm1754, %v1742, %v1757
      %v1759 = vsel %vm1753, %v1756, %v1758
      %v1760 = vsel %vm1752, %v1739, %v1742
      %v1761 = vsel %vm1755, %v1748, 920167782
      %v1762 = vsel %vm1754, %v1745, %v1761
      %v1763 = vsel %vm1753, %v1760, %v1762
      %v1764 = vsel %vm1752, %v1742, %v1745
      %v1765 = vsel %vm1755, %v1751, 1326507024
      %v1766 = vsel %vm1754, %v1748, %v1765
      %v1767 = vsel %vm1753, %v1764, %v1766
      %v1768 = vshll.u32 %v1728, 8
      %v1769 = vmul.u32.u64.compose %v1768, %v1767
      %v1770 = vextract.low.u32 %v1769
      %v1771 = vextract.high.u32 %v1769
      %v1772 = vmul.u32.u64.compose %v1768, %v1763
      %v1773 = vextract.low.u32 %v1772
      %v1774 = vextract.high.u32 %v1772
      %v1775 = vmul.u32 %v1768, %v1759
      %v1776 = vadd.s32 %v1771, %v1773
      %vm1777 = vc.u32 %v1771, %v1773
      %v1778 = vadd.s32 %v1774, 1
      %v1779 = vsel %vm1777, %v1778, %v1774
      %v1780 = vadd.s32 %v1775, %v1779
      %v1781 = vadd.s32 %v1780, 536870912
      %v1782 = vshrl.u32 %v1781, 30
      %v1783 = vshll.u32 %v1782, 30
      %v1784 = vsub.s32 %v1780, %v1783
      %vm1785 = vcmp.lt.s32.totalorder %v1784, 0
      %v1786 = vsub.s32 0, %v1784
      %v1787 = vsel %vm1785, %v1786, %v1784
      %v1788 = vclz %v1787
      %v1789 = vsub.s32 %v1788, 2
      %vm1790 = vcmp.gt.s32.totalorder 0, %v1789
      %v1791 = vsel %vm1790, 0, %v1789
      %v1792 = vsub.s32 32, %v1791
      %v1793 = vshll.u32 %v1784, %v1791
      %v1794 = vshrl.u32 %v1776, %v1792
      %v1795 = vor.u32 %v1793, %v1794
      %v1796 = vsub.s32 4294967266, %v1791
      %v1797 = vadd.s32 %v1796, 127
      %v1798 = vshll.u32 %v1797, 23
      %v1799 = vor.u32 4788187, %v1798
      %v1800 = vand.u32 2147483647, %v1799
      %v1802 = vcvt.s32.f32 %v1795
      %v1803 = vmul.f32 %v1802, %v1800
      %v1804 = vxor.u32 %v1803, 2147483648
      %v1805 = vsel %vm1722, %v1804, %v1803
      %v1806 = vsub.s32 4, %v1782
      %v1807 = vsel %vm1722, %v1806, %v1782
      %v1808 = vsel %vm1721, %v571, %v1805
      %v1809 = vsel %vm1721, 0, %v1807
      %v1810 = vcosq.f32.pop %v1808
      %v1811 = vsinq.f32.pop %v1808
      %vm1812 = vweird.f32 %v571
      %v1813 = vadd.s32 %v1809, 3
      %v1814 = vand.u32 %v1813, 3
      %vm1815 = vcmp.lt.s32.totalorder %v1814, 2
      %vm1816 = vcmp.eq.s32.totalorder %v1814, 0
      %v1817 = vxor.u32 %v1811, 2147483648
      %v1818 = vsel %vm1816, %v1810, %v1817
      %vm1819 = vcmp.eq.s32.totalorder %v1814, 2
      %v1820 = vxor.u32 %v1810, 2147483648
      %v1821 = vsel %vm1819, %v1820, %v1811
      %v1822 = vsel %vm1815, %v1818, %v1821
      %v1823 = vsel %vm1812, nan, %v1822
      %v1824 = vand.u32 2147483647, %v572
      %vm1825 = vcmp.le.f32.partialorder %v1824, 0.7853982
      %vm1826 = vcmp.lt.s32.totalorder %v572, 0
      %v1827 = vand.u32 %v572, 2139095040
      %v1828 = vshrl.u32 %v1827, 23
      %v1829 = vsub.s32 %v1828, 127
      %v1830 = vand.u32 2147483647, %v572
      %v1831 = vand.u32 %v1830, 8388607
      %v1832 = vor.u32 %v1831, 8388608
      %v1833 = vsub.s32 0, %v1832
      %v1834 = vadd.s32 %v1829, 1
      %vm1835 = vcmp.gt.s32.totalorder %v1834, 0
      %v1836 = vsel %vm1835, %v1834, 0
      %v1837 = vshrl.u32 %v1836, 5
      %v1838 = vand.u32 %v1836, 31
      %v1839 = vsub.s32 32, %v1838
      %v1840 = vshrl.u32 683565275, %v1839
      %v1841 = vshll.u32 683565275, %v1838
      %v1842 = vshrl.u32 2475754826, %v1839
      %v1843 = vor.u32 %v1841, %v1842
      %v1844 = vshll.u32 2475754826, %v1838
      %v1845 = vshrl.u32 2131351028, %v1839
      %v1846 = vor.u32 %v1844, %v1845
      %v1847 = vshll.u32 2131351028, %v1838
      %v1848 = vshrl.u32 2102212464, %v1839
      %v1849 = vor.u32 %v1847, %v1848
      %v1850 = vshll.u32 2102212464, %v1838
      %v1851 = vshrl.u32 920167782, %v1839
      %v1852 = vor.u32 %v1850, %v1851
      %v1853 = vshll.u32 920167782, %v1838
      %v1854 = vshrl.u32 1326507024, %v1839
      %v1855 = vor.u32 %v1853, %v1854
      %vm1856 = vcmp.lt.s32.totalorder %v1837, 1
      %vm1857 = vcmp.lt.s32.totalorder %v1837, 2
      %vm1858 = vcmp.lt.s32.totalorder %v1837, 3
      %vm1859 = vcmp.lt.s32.totalorder %v1837, 4
      %v1860 = vsel %vm1856, %v1840, %v1843
      %v1861 = vsel %vm1859, %v1849, 2102212464
      %v1862 = vsel %vm1858, %v1846, %v1861
      %v1863 = vsel %vm1857, %v1860, %v1862
      %v1864 = vsel %vm1856, %v1843, %v1846
      %v1865 = vsel %vm1859, %v1852, 920167782
      %v1866 = vsel %vm1858, %v1849, %v1865
      %v1867 = vsel %vm1857, %v1864, %v1866
      %v1868 = vsel %vm1856, %v1846, %v1849
      %v1869 = vsel %vm1859, %v1855, 1326507024
      %v1870 = vsel %vm1858, %v1852, %v1869
      %v1871 = vsel %vm1857, %v1868, %v1870
      %v1872 = vshll.u32 %v1832, 8
      %v1873 = vmul.u32.u64.compose %v1872, %v1871
      %v1874 = vextract.low.u32 %v1873
      %v1875 = vextract.high.u32 %v1873
      %v1876 = vmul.u32.u64.compose %v1872, %v1867
      %v1877 = vextract.low.u32 %v1876
      %v1878 = vextract.high.u32 %v1876
      %v1879 = vmul.u32 %v1872, %v1863
      %v1880 = vadd.s32 %v1875, %v1877
      %vm1881 = vc.u32 %v1875, %v1877
      %v1882 = vadd.s32 %v1878, 1
      %v1883 = vsel %vm1881, %v1882, %v1878
      %v1884 = vadd.s32 %v1879, %v1883
      %v1885 = vadd.s32 %v1884, 536870912
      %v1886 = vshrl.u32 %v1885, 30
      %v1887 = vshll.u32 %v1886, 30
      %v1888 = vsub.s32 %v1884, %v1887
      %vm1889 = vcmp.lt.s32.totalorder %v1888, 0
      %v1890 = vsub.s32 0, %v1888
      %v1891 = vsel %vm1889, %v1890, %v1888
      %v1892 = vclz %v1891
      %v1893 = vsub.s32 %v1892, 2
      %vm1894 = vcmp.gt.s32.totalorder 0, %v1893
      %v1895 = vsel %vm1894, 0, %v1893
      %v1896 = vsub.s32 32, %v1895
      %v1897 = vshll.u32 %v1888, %v1895
      %v1898 = vshrl.u32 %v1880, %v1896
      %v1899 = vor.u32 %v1897, %v1898
      %v1900 = vsub.s32 4294967266, %v1895
      %v1901 = vadd.s32 %v1900, 127
      %v1902 = vshll.u32 %v1901, 23
      %v1903 = vor.u32 4788187, %v1902
      %v1904 = vand.u32 2147483647, %v1903
      %v1906 = vcvt.s32.f32 %v1899
      %v1907 = vmul.f32 %v1906, %v1904
      %v1908 = vxor.u32 %v1907, 2147483648
      %v1909 = vsel %vm1826, %v1908, %v1907
      %v1910 = vsub.s32 4, %v1886
      %v1911 = vsel %vm1826, %v1910, %v1886
      %v1912 = vsel %vm1825, %v572, %v1909
      %v1913 = vsel %vm1825, 0, %v1911
      %v1914 = vcosq.f32.pop %v1912
      %v1915 = vsinq.f32.pop %v1912
      %vm1916 = vweird.f32 %v572
      %v1917 = vadd.s32 %v1913, 3
      %v1918 = vand.u32 %v1917, 3
      %vm1919 = vcmp.lt.s32.totalorder %v1918, 2
      %vm1920 = vcmp.eq.s32.totalorder %v1918, 0
      %v1921 = vxor.u32 %v1915, 2147483648
      %v1922 = vsel %vm1920, %v1914, %v1921
      %vm1923 = vcmp.eq.s32.totalorder %v1918, 2
      %v1924 = vxor.u32 %v1914, 2147483648
      %v1925 = vsel %vm1923, %v1924, %v1915
      %v1926 = vsel %vm1919, %v1922, %v1925
      %v1927 = vsel %vm1916, nan, %v1926
      %v1928 = vand.u32 2147483647, %v573
      %vm1929 = vcmp.le.f32.partialorder %v1928, 0.7853982
      %vm1930 = vcmp.lt.s32.totalorder %v573, 0
      %v1931 = vand.u32 %v573, 2139095040
      %v1932 = vshrl.u32 %v1931, 23
      %v1933 = vsub.s32 %v1932, 127
      %v1934 = vand.u32 2147483647, %v573
      %v1935 = vand.u32 %v1934, 8388607
      %v1936 = vor.u32 %v1935, 8388608
      %v1937 = vsub.s32 0, %v1936
      %v1938 = vadd.s32 %v1933, 1
      %vm1939 = vcmp.gt.s32.totalorder %v1938, 0
      %v1940 = vsel %vm1939, %v1938, 0
      %v1941 = vshrl.u32 %v1940, 5
      %v1942 = vand.u32 %v1940, 31
      %v1943 = vsub.s32 32, %v1942
      %v1944 = vshrl.u32 683565275, %v1943
      %v1945 = vshll.u32 683565275, %v1942
      %v1946 = vshrl.u32 2475754826, %v1943
      %v1947 = vor.u32 %v1945, %v1946
      %v1948 = vshll.u32 2475754826, %v1942
      %v1949 = vshrl.u32 2131351028, %v1943
      %v1950 = vor.u32 %v1948, %v1949
      %v1951 = vshll.u32 2131351028, %v1942
      %v1952 = vshrl.u32 2102212464, %v1943
      %v1953 = vor.u32 %v1951, %v1952
      %v1954 = vshll.u32 2102212464, %v1942
      %v1955 = vshrl.u32 920167782, %v1943
      %v1956 = vor.u32 %v1954, %v1955
      %v1957 = vshll.u32 920167782, %v1942
      %v1958 = vshrl.u32 1326507024, %v1943
      %v1959 = vor.u32 %v1957, %v1958
      %vm1960 = vcmp.lt.s32.totalorder %v1941, 1
      %vm1961 = vcmp.lt.s32.totalorder %v1941, 2
      %vm1962 = vcmp.lt.s32.totalorder %v1941, 3
      %vm1963 = vcmp.lt.s32.totalorder %v1941, 4
      %v1964 = vsel %vm1960, %v1944, %v1947
      %v1965 = vsel %vm1963, %v1953, 2102212464
      %v1966 = vsel %vm1962, %v1950, %v1965
      %v1967 = vsel %vm1961, %v1964, %v1966
      %v1968 = vsel %vm1960, %v1947, %v1950
      %v1969 = vsel %vm1963, %v1956, 920167782
      %v1970 = vsel %vm1962, %v1953, %v1969
      %v1971 = vsel %vm1961, %v1968, %v1970
      %v1972 = vsel %vm1960, %v1950, %v1953
      %v1973 = vsel %vm1963, %v1959, 1326507024
      %v1974 = vsel %vm1962, %v1956, %v1973
      %v1975 = vsel %vm1961, %v1972, %v1974
      %v1976 = vshll.u32 %v1936, 8
      %v1977 = vmul.u32.u64.compose %v1976, %v1975
      %v1978 = vextract.low.u32 %v1977
      %v1979 = vextract.high.u32 %v1977
      %v1980 = vmul.u32.u64.compose %v1976, %v1971
      %v1981 = vextract.low.u32 %v1980
      %v1982 = vextract.high.u32 %v1980
      %v1983 = vmul.u32 %v1976, %v1967
      %v1984 = vadd.s32 %v1979, %v1981
      %vm1985 = vc.u32 %v1979, %v1981
      %v1986 = vadd.s32 %v1982, 1
      %v1987 = vsel %vm1985, %v1986, %v1982
      %v1988 = vadd.s32 %v1983, %v1987
      %v1989 = vadd.s32 %v1988, 536870912
      %v1990 = vshrl.u32 %v1989, 30
      %v1991 = vshll.u32 %v1990, 30
      %v1992 = vsub.s32 %v1988, %v1991
      %vm1993 = vcmp.lt.s32.totalorder %v1992, 0
      %v1994 = vsub.s32 0, %v1992
      %v1995 = vsel %vm1993, %v1994, %v1992
      %v1996 = vclz %v1995
      %v1997 = vsub.s32 %v1996, 2
      %vm1998 = vcmp.gt.s32.totalorder 0, %v1997
      %v1999 = vsel %vm1998, 0, %v1997
      %v2000 = vsub.s32 32, %v1999
      %v2001 = vshll.u32 %v1992, %v1999
      %v2002 = vshrl.u32 %v1984, %v2000
      %v2003 = vor.u32 %v2001, %v2002
      %v2004 = vsub.s32 4294967266, %v1999
      %v2005 = vadd.s32 %v2004, 127
      %v2006 = vshll.u32 %v2005, 23
      %v2007 = vor.u32 4788187, %v2006
      %v2008 = vand.u32 2147483647, %v2007
      %v2010 = vcvt.s32.f32 %v2003
      %v2011 = vmul.f32 %v2010, %v2008
      %v2012 = vxor.u32 %v2011, 2147483648
      %v2013 = vsel %vm1930, %v2012, %v2011
      %v2014 = vsub.s32 4, %v1990
      %v2015 = vsel %vm1930, %v2014, %v1990
      %v2016 = vsel %vm1929, %v573, %v2013
      %v2017 = vsel %vm1929, 0, %v2015
      %v2018 = vcosq.f32.pop %v2016
      %v2019 = vsinq.f32.pop %v2016
      %vm2020 = vweird.f32 %v573
      %v2021 = vadd.s32 %v2017, 3
      %v2022 = vand.u32 %v2021, 3
      %vm2023 = vcmp.lt.s32.totalorder %v2022, 2
      %vm2024 = vcmp.eq.s32.totalorder %v2022, 0
      %v2025 = vxor.u32 %v2019, 2147483648
      %v2026 = vsel %vm2024, %v2018, %v2025
      %vm2027 = vcmp.eq.s32.totalorder %v2022, 2
      %v2028 = vxor.u32 %v2018, 2147483648
      %v2029 = vsel %vm2027, %v2028, %v2019
      %v2030 = vsel %vm2023, %v2026, %v2029
      %v2031 = vsel %vm2020, nan, %v2030
      %v2032 = vand.u32 2147483647, %v574
      %vm2033 = vcmp.le.f32.partialorder %v2032, 0.7853982
      %vm2034 = vcmp.lt.s32.totalorder %v574, 0
      %v2035 = vand.u32 %v574, 2139095040
      %v2036 = vshrl.u32 %v2035, 23
      %v2037 = vsub.s32 %v2036, 127
      %v2038 = vand.u32 2147483647, %v574
      %v2039 = vand.u32 %v2038, 8388607
      %v2040 = vor.u32 %v2039, 8388608
      %v2041 = vsub.s32 0, %v2040
      %v2042 = vadd.s32 %v2037, 1
      %vm2043 = vcmp.gt.s32.totalorder %v2042, 0
      %v2044 = vsel %vm2043, %v2042, 0
      %v2045 = vshrl.u32 %v2044, 5
      %v2046 = vand.u32 %v2044, 31
      %v2047 = vsub.s32 32, %v2046
      %v2048 = vshrl.u32 683565275, %v2047
      %v2049 = vshll.u32 683565275, %v2046
      %v2050 = vshrl.u32 2475754826, %v2047
      %v2051 = vor.u32 %v2049, %v2050
      %v2052 = vshll.u32 2475754826, %v2046
      %v2053 = vshrl.u32 2131351028, %v2047
      %v2054 = vor.u32 %v2052, %v2053
      %v2055 = vshll.u32 2131351028, %v2046
      %v2056 = vshrl.u32 2102212464, %v2047
      %v2057 = vor.u32 %v2055, %v2056
      %v2058 = vshll.u32 2102212464, %v2046
      %v2059 = vshrl.u32 920167782, %v2047
      %v2060 = vor.u32 %v2058, %v2059
      %v2061 = vshll.u32 920167782, %v2046
      %v2062 = vshrl.u32 1326507024, %v2047
      %v2063 = vor.u32 %v2061, %v2062
      %vm2064 = vcmp.lt.s32.totalorder %v2045, 1
      %vm2065 = vcmp.lt.s32.totalorder %v2045, 2
      %vm2066 = vcmp.lt.s32.totalorder %v2045, 3
      %vm2067 = vcmp.lt.s32.totalorder %v2045, 4
      %v2068 = vsel %vm2064, %v2048, %v2051
      %v2069 = vsel %vm2067, %v2057, 2102212464
      %v2070 = vsel %vm2066, %v2054, %v2069
      %v2071 = vsel %vm2065, %v2068, %v2070
      %v2072 = vsel %vm2064, %v2051, %v2054
      %v2073 = vsel %vm2067, %v2060, 920167782
      %v2074 = vsel %vm2066, %v2057, %v2073
      %v2075 = vsel %vm2065, %v2072, %v2074
      %v2076 = vsel %vm2064, %v2054, %v2057
      %v2077 = vsel %vm2067, %v2063, 1326507024
      %v2078 = vsel %vm2066, %v2060, %v2077
      %v2079 = vsel %vm2065, %v2076, %v2078
      %v2080 = vshll.u32 %v2040, 8
      %v2081 = vmul.u32.u64.compose %v2080, %v2079
      %v2082 = vextract.low.u32 %v2081
      %v2083 = vextract.high.u32 %v2081
      %v2084 = vmul.u32.u64.compose %v2080, %v2075
      %v2085 = vextract.low.u32 %v2084
      %v2086 = vextract.high.u32 %v2084
      %v2087 = vmul.u32 %v2080, %v2071
      %v2088 = vadd.s32 %v2083, %v2085
      %vm2089 = vc.u32 %v2083, %v2085
      %v2090 = vadd.s32 %v2086, 1
      %v2091 = vsel %vm2089, %v2090, %v2086
      %v2092 = vadd.s32 %v2087, %v2091
      %v2093 = vadd.s32 %v2092, 536870912
      %v2094 = vshrl.u32 %v2093, 30
      %v2095 = vshll.u32 %v2094, 30
      %v2096 = vsub.s32 %v2092, %v2095
      %vm2097 = vcmp.lt.s32.totalorder %v2096, 0
      %v2098 = vsub.s32 0, %v2096
      %v2099 = vsel %vm2097, %v2098, %v2096
      %v2100 = vclz %v2099
      %v2101 = vsub.s32 %v2100, 2
      %vm2102 = vcmp.gt.s32.totalorder 0, %v2101
      %v2103 = vsel %vm2102, 0, %v2101
      %v2104 = vsub.s32 32, %v2103
      %v2105 = vshll.u32 %v2096, %v2103
      %v2106 = vshrl.u32 %v2088, %v2104
      %v2107 = vor.u32 %v2105, %v2106
      %v2108 = vsub.s32 4294967266, %v2103
      %v2109 = vadd.s32 %v2108, 127
      %v2110 = vshll.u32 %v2109, 23
      %v2111 = vor.u32 4788187, %v2110
      %v2112 = vand.u32 2147483647, %v2111
      %v2114 = vcvt.s32.f32 %v2107
      %v2115 = vmul.f32 %v2114, %v2112
      %v2116 = vxor.u32 %v2115, 2147483648
      %v2117 = vsel %vm2034, %v2116, %v2115
      %v2118 = vsub.s32 4, %v2094
      %v2119 = vsel %vm2034, %v2118, %v2094
      %v2120 = vsel %vm2033, %v574, %v2117
      %v2121 = vsel %vm2033, 0, %v2119
      %v2122 = vcosq.f32.pop %v2120
      %v2123 = vsinq.f32.pop %v2120
      %vm2124 = vweird.f32 %v574
      %v2125 = vadd.s32 %v2121, 3
      %v2126 = vand.u32 %v2125, 3
      %vm2127 = vcmp.lt.s32.totalorder %v2126, 2
      %vm2128 = vcmp.eq.s32.totalorder %v2126, 0
      %v2129 = vxor.u32 %v2123, 2147483648
      %v2130 = vsel %vm2128, %v2122, %v2129
      %vm2131 = vcmp.eq.s32.totalorder %v2126, 2
      %v2132 = vxor.u32 %v2122, 2147483648
      %v2133 = vsel %vm2131, %v2132, %v2123
      %v2134 = vsel %vm2127, %v2130, %v2133
      %v2135 = vsel %vm2124, nan, %v2134
      %v2136 = vand.u32 2147483647, %v575
      %vm2137 = vcmp.le.f32.partialorder %v2136, 0.7853982
      %vm2138 = vcmp.lt.s32.totalorder %v575, 0
      %v2139 = vand.u32 %v575, 2139095040
      %v2140 = vshrl.u32 %v2139, 23
      %v2141 = vsub.s32 %v2140, 127
      %v2142 = vand.u32 2147483647, %v575
      %v2143 = vand.u32 %v2142, 8388607
      %v2144 = vor.u32 %v2143, 8388608
      %v2145 = vsub.s32 0, %v2144
      %v2146 = vadd.s32 %v2141, 1
      %vm2147 = vcmp.gt.s32.totalorder %v2146, 0
      %v2148 = vsel %vm2147, %v2146, 0
      %v2149 = vshrl.u32 %v2148, 5
      %v2150 = vand.u32 %v2148, 31
      %v2151 = vsub.s32 32, %v2150
      %v2152 = vshrl.u32 683565275, %v2151
      %v2153 = vshll.u32 683565275, %v2150
      %v2154 = vshrl.u32 2475754826, %v2151
      %v2155 = vor.u32 %v2153, %v2154
      %v2156 = vshll.u32 2475754826, %v2150
      %v2157 = vshrl.u32 2131351028, %v2151
      %v2158 = vor.u32 %v2156, %v2157
      %v2159 = vshll.u32 2131351028, %v2150
      %v2160 = vshrl.u32 2102212464, %v2151
      %v2161 = vor.u32 %v2159, %v2160
      %v2162 = vshll.u32 2102212464, %v2150
      %v2163 = vshrl.u32 920167782, %v2151
      %v2164 = vor.u32 %v2162, %v2163
      %v2165 = vshll.u32 920167782, %v2150
      %v2166 = vshrl.u32 1326507024, %v2151
      %v2167 = vor.u32 %v2165, %v2166
      %vm2168 = vcmp.lt.s32.totalorder %v2149, 1
      %vm2169 = vcmp.lt.s32.totalorder %v2149, 2
      %vm2170 = vcmp.lt.s32.totalorder %v2149, 3
      %vm2171 = vcmp.lt.s32.totalorder %v2149, 4
      %v2172 = vsel %vm2168, %v2152, %v2155
      %v2173 = vsel %vm2171, %v2161, 2102212464
      %v2174 = vsel %vm2170, %v2158, %v2173
      %v2175 = vsel %vm2169, %v2172, %v2174
      %v2176 = vsel %vm2168, %v2155, %v2158
      %v2177 = vsel %vm2171, %v2164, 920167782
      %v2178 = vsel %vm2170, %v2161, %v2177
      %v2179 = vsel %vm2169, %v2176, %v2178
      %v2180 = vsel %vm2168, %v2158, %v2161
      %v2181 = vsel %vm2171, %v2167, 1326507024
      %v2182 = vsel %vm2170, %v2164, %v2181
      %v2183 = vsel %vm2169, %v2180, %v2182
      %v2184 = vshll.u32 %v2144, 8
      %v2185 = vmul.u32.u64.compose %v2184, %v2183
      %v2186 = vextract.low.u32 %v2185
      %v2187 = vextract.high.u32 %v2185
      %v2188 = vmul.u32.u64.compose %v2184, %v2179
      %v2189 = vextract.low.u32 %v2188
      %v2190 = vextract.high.u32 %v2188
      %v2191 = vmul.u32 %v2184, %v2175
      %v2192 = vadd.s32 %v2187, %v2189
      %vm2193 = vc.u32 %v2187, %v2189
      %v2194 = vadd.s32 %v2190, 1
      %v2195 = vsel %vm2193, %v2194, %v2190
      %v2196 = vadd.s32 %v2191, %v2195
      %v2197 = vadd.s32 %v2196, 536870912
      %v2198 = vshrl.u32 %v2197, 30
      %v2199 = vshll.u32 %v2198, 30
      %v2200 = vsub.s32 %v2196, %v2199
      %vm2201 = vcmp.lt.s32.totalorder %v2200, 0
      %v2202 = vsub.s32 0, %v2200
      %v2203 = vsel %vm2201, %v2202, %v2200
      %v2204 = vclz %v2203
      %v2205 = vsub.s32 %v2204, 2
      %vm2206 = vcmp.gt.s32.totalorder 0, %v2205
      %v2207 = vsel %vm2206, 0, %v2205
      %v2208 = vsub.s32 32, %v2207
      %v2209 = vshll.u32 %v2200, %v2207
      %v2210 = vshrl.u32 %v2192, %v2208
      %v2211 = vor.u32 %v2209, %v2210
      %v2212 = vsub.s32 4294967266, %v2207
      %v2213 = vadd.s32 %v2212, 127
      %v2214 = vshll.u32 %v2213, 23
      %v2215 = vor.u32 4788187, %v2214
      %v2216 = vand.u32 2147483647, %v2215
      %v2218 = vcvt.s32.f32 %v2211
      %v2219 = vmul.f32 %v2218, %v2216
      %v2220 = vxor.u32 %v2219, 2147483648
      %v2221 = vsel %vm2138, %v2220, %v2219
      %v2222 = vsub.s32 4, %v2198
      %v2223 = vsel %vm2138, %v2222, %v2198
      %v2224 = vsel %vm2137, %v575, %v2221
      %v2225 = vsel %vm2137, 0, %v2223
      %v2226 = vcosq.f32.pop %v2224
      %v2227 = vsinq.f32.pop %v2224
      %vm2228 = vweird.f32 %v575
      %v2229 = vadd.s32 %v2225, 3
      %v2230 = vand.u32 %v2229, 3
      %vm2231 = vcmp.lt.s32.totalorder %v2230, 2
      %vm2232 = vcmp.eq.s32.totalorder %v2230, 0
      %v2233 = vxor.u32 %v2227, 2147483648
      %v2234 = vsel %vm2232, %v2226, %v2233
      %vm2235 = vcmp.eq.s32.totalorder %v2230, 2
      %v2236 = vxor.u32 %v2226, 2147483648
      %v2237 = vsel %vm2235, %v2236, %v2227
      %v2238 = vsel %vm2231, %v2234, %v2237
      %v2239 = vsel %vm2228, nan, %v2238
      %v2240 = vand.u32 2147483647, %v560
      %vm2241 = vcmp.le.f32.partialorder %v2240, 0.7853982
      %vm2242 = vcmp.lt.s32.totalorder %v560, 0
      %v2243 = vand.u32 %v560, 2139095040
      %v2244 = vshrl.u32 %v2243, 23
      %v2245 = vsub.s32 %v2244, 127
      %v2246 = vand.u32 2147483647, %v560
      %v2247 = vand.u32 %v2246, 8388607
      %v2248 = vor.u32 %v2247, 8388608
      %v2249 = vsub.s32 0, %v2248
      %v2250 = vadd.s32 %v2245, 1
      %vm2251 = vcmp.gt.s32.totalorder %v2250, 0
      %v2252 = vsel %vm2251, %v2250, 0
      %v2253 = vshrl.u32 %v2252, 5
      %v2254 = vand.u32 %v2252, 31
      %v2255 = vsub.s32 32, %v2254
      %v2256 = vshrl.u32 683565275, %v2255
      %v2257 = vshll.u32 683565275, %v2254
      %v2258 = vshrl.u32 2475754826, %v2255
      %v2259 = vor.u32 %v2257, %v2258
      %v2260 = vshll.u32 2475754826, %v2254
      %v2261 = vshrl.u32 2131351028, %v2255
      %v2262 = vor.u32 %v2260, %v2261
      %v2263 = vshll.u32 2131351028, %v2254
      %v2264 = vshrl.u32 2102212464, %v2255
      %v2265 = vor.u32 %v2263, %v2264
      %v2266 = vshll.u32 2102212464, %v2254
      %v2267 = vshrl.u32 920167782, %v2255
      %v2268 = vor.u32 %v2266, %v2267
      %v2269 = vshll.u32 920167782, %v2254
      %v2270 = vshrl.u32 1326507024, %v2255
      %v2271 = vor.u32 %v2269, %v2270
      %vm2272 = vcmp.lt.s32.totalorder %v2253, 1
      %vm2273 = vcmp.lt.s32.totalorder %v2253, 2
      %vm2274 = vcmp.lt.s32.totalorder %v2253, 3
      %vm2275 = vcmp.lt.s32.totalorder %v2253, 4
      %v2276 = vsel %vm2272, %v2256, %v2259
      %v2277 = vsel %vm2275, %v2265, 2102212464
      %v2278 = vsel %vm2274, %v2262, %v2277
      %v2279 = vsel %vm2273, %v2276, %v2278
      %v2280 = vsel %vm2272, %v2259, %v2262
      %v2281 = vsel %vm2275, %v2268, 920167782
      %v2282 = vsel %vm2274, %v2265, %v2281
      %v2283 = vsel %vm2273, %v2280, %v2282
      %v2284 = vsel %vm2272, %v2262, %v2265
      %v2285 = vsel %vm2275, %v2271, 1326507024
      %v2286 = vsel %vm2274, %v2268, %v2285
      %v2287 = vsel %vm2273, %v2284, %v2286
      %v2288 = vshll.u32 %v2248, 8
      %v2289 = vmul.u32.u64.compose %v2288, %v2287
      %v2290 = vextract.low.u32 %v2289
      %v2291 = vextract.high.u32 %v2289
      %v2292 = vmul.u32.u64.compose %v2288, %v2283
      %v2293 = vextract.low.u32 %v2292
      %v2294 = vextract.high.u32 %v2292
      %v2295 = vmul.u32 %v2288, %v2279
      %v2296 = vadd.s32 %v2291, %v2293
      %vm2297 = vc.u32 %v2291, %v2293
      %v2298 = vadd.s32 %v2294, 1
      %v2299 = vsel %vm2297, %v2298, %v2294
      %v2300 = vadd.s32 %v2295, %v2299
      %v2301 = vadd.s32 %v2300, 536870912
      %v2302 = vshrl.u32 %v2301, 30
      %v2303 = vshll.u32 %v2302, 30
      %v2304 = vsub.s32 %v2300, %v2303
      %vm2305 = vcmp.lt.s32.totalorder %v2304, 0
      %v2306 = vsub.s32 0, %v2304
      %v2307 = vsel %vm2305, %v2306, %v2304
      %v2308 = vclz %v2307
      %v2309 = vsub.s32 %v2308, 2
      %vm2310 = vcmp.gt.s32.totalorder 0, %v2309
      %v2311 = vsel %vm2310, 0, %v2309
      %v2312 = vsub.s32 32, %v2311
      %v2313 = vshll.u32 %v2304, %v2311
      %v2314 = vshrl.u32 %v2296, %v2312
      %v2315 = vor.u32 %v2313, %v2314
      %v2316 = vsub.s32 4294967266, %v2311
      %v2317 = vadd.s32 %v2316, 127
      %v2318 = vshll.u32 %v2317, 23
      %v2319 = vor.u32 4788187, %v2318
      %v2320 = vand.u32 2147483647, %v2319
      %v2322 = vcvt.s32.f32 %v2315
      %v2323 = vmul.f32 %v2322, %v2320
      %v2324 = vxor.u32 %v2323, 2147483648
      %v2325 = vsel %vm2242, %v2324, %v2323
      %v2326 = vsub.s32 4, %v2302
      %v2327 = vsel %vm2242, %v2326, %v2302
      %v2328 = vsel %vm2241, %v560, %v2325
      %v2329 = vsel %vm2241, 0, %v2327
      %v2330 = vcosq.f32.pop %v2328
      %v2331 = vsinq.f32.pop %v2328
      %vm2332 = vweird.f32 %v560
      %v2333 = vand.u32 %v2329, 3
      %vm2334 = vcmp.lt.s32.totalorder %v2333, 2
      %vm2335 = vcmp.eq.s32.totalorder %v2333, 0
      %v2336 = vxor.u32 %v2331, 2147483648
      %v2337 = vsel %vm2335, %v2330, %v2336
      %vm2338 = vcmp.eq.s32.totalorder %v2333, 2
      %v2339 = vxor.u32 %v2330, 2147483648
      %v2340 = vsel %vm2338, %v2339, %v2331
      %v2341 = vsel %vm2334, %v2337, %v2340
      %v2342 = vsel %vm2332, nan, %v2341
      %v2343 = vand.u32 2147483647, %v561
      %vm2344 = vcmp.le.f32.partialorder %v2343, 0.7853982
      %vm2345 = vcmp.lt.s32.totalorder %v561, 0
      %v2346 = vand.u32 %v561, 2139095040
      %v2347 = vshrl.u32 %v2346, 23
      %v2348 = vsub.s32 %v2347, 127
      %v2349 = vand.u32 2147483647, %v561
      %v2350 = vand.u32 %v2349, 8388607
      %v2351 = vor.u32 %v2350, 8388608
      %v2352 = vsub.s32 0, %v2351
      %v2353 = vadd.s32 %v2348, 1
      %vm2354 = vcmp.gt.s32.totalorder %v2353, 0
      %v2355 = vsel %vm2354, %v2353, 0
      %v2356 = vshrl.u32 %v2355, 5
      %v2357 = vand.u32 %v2355, 31
      %v2358 = vsub.s32 32, %v2357
      %v2359 = vshrl.u32 683565275, %v2358
      %v2360 = vshll.u32 683565275, %v2357
      %v2361 = vshrl.u32 2475754826, %v2358
      %v2362 = vor.u32 %v2360, %v2361
      %v2363 = vshll.u32 2475754826, %v2357
      %v2364 = vshrl.u32 2131351028, %v2358
      %v2365 = vor.u32 %v2363, %v2364
      %v2366 = vshll.u32 2131351028, %v2357
      %v2367 = vshrl.u32 2102212464, %v2358
      %v2368 = vor.u32 %v2366, %v2367
      %v2369 = vshll.u32 2102212464, %v2357
      %v2370 = vshrl.u32 920167782, %v2358
      %v2371 = vor.u32 %v2369, %v2370
      %v2372 = vshll.u32 920167782, %v2357
      %v2373 = vshrl.u32 1326507024, %v2358
      %v2374 = vor.u32 %v2372, %v2373
      %vm2375 = vcmp.lt.s32.totalorder %v2356, 1
      %vm2376 = vcmp.lt.s32.totalorder %v2356, 2
      %vm2377 = vcmp.lt.s32.totalorder %v2356, 3
      %vm2378 = vcmp.lt.s32.totalorder %v2356, 4
      %v2379 = vsel %vm2375, %v2359, %v2362
      %v2380 = vsel %vm2378, %v2368, 2102212464
      %v2381 = vsel %vm2377, %v2365, %v2380
      %v2382 = vsel %vm2376, %v2379, %v2381
      %v2383 = vsel %vm2375, %v2362, %v2365
      %v2384 = vsel %vm2378, %v2371, 920167782
      %v2385 = vsel %vm2377, %v2368, %v2384
      %v2386 = vsel %vm2376, %v2383, %v2385
      %v2387 = vsel %vm2375, %v2365, %v2368
      %v2388 = vsel %vm2378, %v2374, 1326507024
      %v2389 = vsel %vm2377, %v2371, %v2388
      %v2390 = vsel %vm2376, %v2387, %v2389
      %v2391 = vshll.u32 %v2351, 8
      %v2392 = vmul.u32.u64.compose %v2391, %v2390
      %v2393 = vextract.low.u32 %v2392
      %v2394 = vextract.high.u32 %v2392
      %v2395 = vmul.u32.u64.compose %v2391, %v2386
      %v2396 = vextract.low.u32 %v2395
      %v2397 = vextract.high.u32 %v2395
      %v2398 = vmul.u32 %v2391, %v2382
      %v2399 = vadd.s32 %v2394, %v2396
      %vm2400 = vc.u32 %v2394, %v2396
      %v2401 = vadd.s32 %v2397, 1
      %v2402 = vsel %vm2400, %v2401, %v2397
      %v2403 = vadd.s32 %v2398, %v2402
      %v2404 = vadd.s32 %v2403, 536870912
      %v2405 = vshrl.u32 %v2404, 30
      %v2406 = vshll.u32 %v2405, 30
      %v2407 = vsub.s32 %v2403, %v2406
      %vm2408 = vcmp.lt.s32.totalorder %v2407, 0
      %v2409 = vsub.s32 0, %v2407
      %v2410 = vsel %vm2408, %v2409, %v2407
      %v2411 = vclz %v2410
      %v2412 = vsub.s32 %v2411, 2
      %vm2413 = vcmp.gt.s32.totalorder 0, %v2412
      %v2414 = vsel %vm2413, 0, %v2412
      %v2415 = vsub.s32 32, %v2414
      %v2416 = vshll.u32 %v2407, %v2414
      %v2417 = vshrl.u32 %v2399, %v2415
      %v2418 = vor.u32 %v2416, %v2417
      %v2419 = vsub.s32 4294967266, %v2414
      %v2420 = vadd.s32 %v2419, 127
      %v2421 = vshll.u32 %v2420, 23
      %v2422 = vor.u32 4788187, %v2421
      %v2423 = vand.u32 2147483647, %v2422
      %v2425 = vcvt.s32.f32 %v2418
      %v2426 = vmul.f32 %v2425, %v2423
      %v2427 = vxor.u32 %v2426, 2147483648
      %v2428 = vsel %vm2345, %v2427, %v2426
      %v2429 = vsub.s32 4, %v2405
      %v2430 = vsel %vm2345, %v2429, %v2405
      %v2431 = vsel %vm2344, %v561, %v2428
      %v2432 = vsel %vm2344, 0, %v2430
      %v2433 = vcosq.f32.pop %v2431
      %v2434 = vsinq.f32.pop %v2431
      %vm2435 = vweird.f32 %v561
      %v2436 = vand.u32 %v2432, 3
      %vm2437 = vcmp.lt.s32.totalorder %v2436, 2
      %vm2438 = vcmp.eq.s32.totalorder %v2436, 0
      %v2439 = vxor.u32 %v2434, 2147483648
      %v2440 = vsel %vm2438, %v2433, %v2439
      %vm2441 = vcmp.eq.s32.totalorder %v2436, 2
      %v2442 = vxor.u32 %v2433, 2147483648
      %v2443 = vsel %vm2441, %v2442, %v2434
      %v2444 = vsel %vm2437, %v2440, %v2443
      %v2445 = vsel %vm2435, nan, %v2444
      %v2446 = vand.u32 2147483647, %v562
      %vm2447 = vcmp.le.f32.partialorder %v2446, 0.7853982
      %vm2448 = vcmp.lt.s32.totalorder %v562, 0
      %v2449 = vand.u32 %v562, 2139095040
      %v2450 = vshrl.u32 %v2449, 23
      %v2451 = vsub.s32 %v2450, 127
      %v2452 = vand.u32 2147483647, %v562
      %v2453 = vand.u32 %v2452, 8388607
      %v2454 = vor.u32 %v2453, 8388608
      %v2455 = vsub.s32 0, %v2454
      %v2456 = vadd.s32 %v2451, 1
      %vm2457 = vcmp.gt.s32.totalorder %v2456, 0
      %v2458 = vsel %vm2457, %v2456, 0
      %v2459 = vshrl.u32 %v2458, 5
      %v2460 = vand.u32 %v2458, 31
      %v2461 = vsub.s32 32, %v2460
      %v2462 = vshrl.u32 683565275, %v2461
      %v2463 = vshll.u32 683565275, %v2460
      %v2464 = vshrl.u32 2475754826, %v2461
      %v2465 = vor.u32 %v2463, %v2464
      %v2466 = vshll.u32 2475754826, %v2460
      %v2467 = vshrl.u32 2131351028, %v2461
      %v2468 = vor.u32 %v2466, %v2467
      %v2469 = vshll.u32 2131351028, %v2460
      %v2470 = vshrl.u32 2102212464, %v2461
      %v2471 = vor.u32 %v2469, %v2470
      %v2472 = vshll.u32 2102212464, %v2460
      %v2473 = vshrl.u32 920167782, %v2461
      %v2474 = vor.u32 %v2472, %v2473
      %v2475 = vshll.u32 920167782, %v2460
      %v2476 = vshrl.u32 1326507024, %v2461
      %v2477 = vor.u32 %v2475, %v2476
      %vm2478 = vcmp.lt.s32.totalorder %v2459, 1
      %vm2479 = vcmp.lt.s32.totalorder %v2459, 2
      %vm2480 = vcmp.lt.s32.totalorder %v2459, 3
      %vm2481 = vcmp.lt.s32.totalorder %v2459, 4
      %v2482 = vsel %vm2478, %v2462, %v2465
      %v2483 = vsel %vm2481, %v2471, 2102212464
      %v2484 = vsel %vm2480, %v2468, %v2483
      %v2485 = vsel %vm2479, %v2482, %v2484
      %v2486 = vsel %vm2478, %v2465, %v2468
      %v2487 = vsel %vm2481, %v2474, 920167782
      %v2488 = vsel %vm2480, %v2471, %v2487
      %v2489 = vsel %vm2479, %v2486, %v2488
      %v2490 = vsel %vm2478, %v2468, %v2471
      %v2491 = vsel %vm2481, %v2477, 1326507024
      %v2492 = vsel %vm2480, %v2474, %v2491
      %v2493 = vsel %vm2479, %v2490, %v2492
      %v2494 = vshll.u32 %v2454, 8
      %v2495 = vmul.u32.u64.compose %v2494, %v2493
      %v2496 = vextract.low.u32 %v2495
      %v2497 = vextract.high.u32 %v2495
      %v2498 = vmul.u32.u64.compose %v2494, %v2489
      %v2499 = vextract.low.u32 %v2498
      %v2500 = vextract.high.u32 %v2498
      %v2501 = vmul.u32 %v2494, %v2485
      %v2502 = vadd.s32 %v2497, %v2499
      %vm2503 = vc.u32 %v2497, %v2499
      %v2504 = vadd.s32 %v2500, 1
      %v2505 = vsel %vm2503, %v2504, %v2500
      %v2506 = vadd.s32 %v2501, %v2505
      %v2507 = vadd.s32 %v2506, 536870912
      %v2508 = vshrl.u32 %v2507, 30
      %v2509 = vshll.u32 %v2508, 30
      %v2510 = vsub.s32 %v2506, %v2509
      %vm2511 = vcmp.lt.s32.totalorder %v2510, 0
      %v2512 = vsub.s32 0, %v2510
      %v2513 = vsel %vm2511, %v2512, %v2510
      %v2514 = vclz %v2513
      %v2515 = vsub.s32 %v2514, 2
      %vm2516 = vcmp.gt.s32.totalorder 0, %v2515
      %v2517 = vsel %vm2516, 0, %v2515
      %v2518 = vsub.s32 32, %v2517
      %v2519 = vshll.u32 %v2510, %v2517
      %v2520 = vshrl.u32 %v2502, %v2518
      %v2521 = vor.u32 %v2519, %v2520
      %v2522 = vsub.s32 4294967266, %v2517
      %v2523 = vadd.s32 %v2522, 127
      %v2524 = vshll.u32 %v2523, 23
      %v2525 = vor.u32 4788187, %v2524
      %v2526 = vand.u32 2147483647, %v2525
      %v2528 = vcvt.s32.f32 %v2521
      %v2529 = vmul.f32 %v2528, %v2526
      %v2530 = vxor.u32 %v2529, 2147483648
      %v2531 = vsel %vm2448, %v2530, %v2529
      %v2532 = vsub.s32 4, %v2508
      %v2533 = vsel %vm2448, %v2532, %v2508
      %v2534 = vsel %vm2447, %v562, %v2531
      %v2535 = vsel %vm2447, 0, %v2533
      %v2536 = vcosq.f32.pop %v2534
      %v2537 = vsinq.f32.pop %v2534
      %vm2538 = vweird.f32 %v562
      %v2539 = vand.u32 %v2535, 3
      %vm2540 = vcmp.lt.s32.totalorder %v2539, 2
      %vm2541 = vcmp.eq.s32.totalorder %v2539, 0
      %v2542 = vxor.u32 %v2537, 2147483648
      %v2543 = vsel %vm2541, %v2536, %v2542
      %vm2544 = vcmp.eq.s32.totalorder %v2539, 2
      %v2545 = vxor.u32 %v2536, 2147483648
      %v2546 = vsel %vm2544, %v2545, %v2537
      %v2547 = vsel %vm2540, %v2543, %v2546
      %v2548 = vsel %vm2538, nan, %v2547
      %v2549 = vand.u32 2147483647, %v563
      %vm2550 = vcmp.le.f32.partialorder %v2549, 0.7853982
      %vm2551 = vcmp.lt.s32.totalorder %v563, 0
      %v2552 = vand.u32 %v563, 2139095040
      %v2553 = vshrl.u32 %v2552, 23
      %v2554 = vsub.s32 %v2553, 127
      %v2555 = vand.u32 2147483647, %v563
      %v2556 = vand.u32 %v2555, 8388607
      %v2557 = vor.u32 %v2556, 8388608
      %v2558 = vsub.s32 0, %v2557
      %v2559 = vadd.s32 %v2554, 1
      %vm2560 = vcmp.gt.s32.totalorder %v2559, 0
      %v2561 = vsel %vm2560, %v2559, 0
      %v2562 = vshrl.u32 %v2561, 5
      %v2563 = vand.u32 %v2561, 31
      %v2564 = vsub.s32 32, %v2563
      %v2565 = vshrl.u32 683565275, %v2564
      %v2566 = vshll.u32 683565275, %v2563
      %v2567 = vshrl.u32 2475754826, %v2564
      %v2568 = vor.u32 %v2566, %v2567
      %v2569 = vshll.u32 2475754826, %v2563
      %v2570 = vshrl.u32 2131351028, %v2564
      %v2571 = vor.u32 %v2569, %v2570
      %v2572 = vshll.u32 2131351028, %v2563
      %v2573 = vshrl.u32 2102212464, %v2564
      %v2574 = vor.u32 %v2572, %v2573
      %v2575 = vshll.u32 2102212464, %v2563
      %v2576 = vshrl.u32 920167782, %v2564
      %v2577 = vor.u32 %v2575, %v2576
      %v2578 = vshll.u32 920167782, %v2563
      %v2579 = vshrl.u32 1326507024, %v2564
      %v2580 = vor.u32 %v2578, %v2579
      %vm2581 = vcmp.lt.s32.totalorder %v2562, 1
      %vm2582 = vcmp.lt.s32.totalorder %v2562, 2
      %vm2583 = vcmp.lt.s32.totalorder %v2562, 3
      %vm2584 = vcmp.lt.s32.totalorder %v2562, 4
      %v2585 = vsel %vm2581, %v2565, %v2568
      %v2586 = vsel %vm2584, %v2574, 2102212464
      %v2587 = vsel %vm2583, %v2571, %v2586
      %v2588 = vsel %vm2582, %v2585, %v2587
      %v2589 = vsel %vm2581, %v2568, %v2571
      %v2590 = vsel %vm2584, %v2577, 920167782
      %v2591 = vsel %vm2583, %v2574, %v2590
      %v2592 = vsel %vm2582, %v2589, %v2591
      %v2593 = vsel %vm2581, %v2571, %v2574
      %v2594 = vsel %vm2584, %v2580, 1326507024
      %v2595 = vsel %vm2583, %v2577, %v2594
      %v2596 = vsel %vm2582, %v2593, %v2595
      %v2597 = vshll.u32 %v2557, 8
      %v2598 = vmul.u32.u64.compose %v2597, %v2596
      %v2599 = vextract.low.u32 %v2598
      %v2600 = vextract.high.u32 %v2598
      %v2601 = vmul.u32.u64.compose %v2597, %v2592
      %v2602 = vextract.low.u32 %v2601
      %v2603 = vextract.high.u32 %v2601
      %v2604 = vmul.u32 %v2597, %v2588
      %v2605 = vadd.s32 %v2600, %v2602
      %vm2606 = vc.u32 %v2600, %v2602
      %v2607 = vadd.s32 %v2603, 1
      %v2608 = vsel %vm2606, %v2607, %v2603
      %v2609 = vadd.s32 %v2604, %v2608
      %v2610 = vadd.s32 %v2609, 536870912
      %v2611 = vshrl.u32 %v2610, 30
      %v2612 = vshll.u32 %v2611, 30
      %v2613 = vsub.s32 %v2609, %v2612
      %vm2614 = vcmp.lt.s32.totalorder %v2613, 0
      %v2615 = vsub.s32 0, %v2613
      %v2616 = vsel %vm2614, %v2615, %v2613
      %v2617 = vclz %v2616
      %v2618 = vsub.s32 %v2617, 2
      %vm2619 = vcmp.gt.s32.totalorder 0, %v2618
      %v2620 = vsel %vm2619, 0, %v2618
      %v2621 = vsub.s32 32, %v2620
      %v2622 = vshll.u32 %v2613, %v2620
      %v2623 = vshrl.u32 %v2605, %v2621
      %v2624 = vor.u32 %v2622, %v2623
      %v2625 = vsub.s32 4294967266, %v2620
      %v2626 = vadd.s32 %v2625, 127
      %v2627 = vshll.u32 %v2626, 23
      %v2628 = vor.u32 4788187, %v2627
      %v2629 = vand.u32 2147483647, %v2628
      %v2631 = vcvt.s32.f32 %v2624
      %v2632 = vmul.f32 %v2631, %v2629
      %v2633 = vxor.u32 %v2632, 2147483648
      %v2634 = vsel %vm2551, %v2633, %v2632
      %v2635 = vsub.s32 4, %v2611
      %v2636 = vsel %vm2551, %v2635, %v2611
      %v2637 = vsel %vm2550, %v563, %v2634
      %v2638 = vsel %vm2550, 0, %v2636
      %v2639 = vcosq.f32.pop %v2637
      %v2640 = vsinq.f32.pop %v2637
      %vm2641 = vweird.f32 %v563
      %v2642 = vand.u32 %v2638, 3
      %vm2643 = vcmp.lt.s32.totalorder %v2642, 2
      %vm2644 = vcmp.eq.s32.totalorder %v2642, 0
      %v2645 = vxor.u32 %v2640, 2147483648
      %v2646 = vsel %vm2644, %v2639, %v2645
      %vm2647 = vcmp.eq.s32.totalorder %v2642, 2
      %v2648 = vxor.u32 %v2639, 2147483648
      %v2649 = vsel %vm2647, %v2648, %v2640
      %v2650 = vsel %vm2643, %v2646, %v2649
      %v2651 = vsel %vm2641, nan, %v2650
      %v2652 = vand.u32 2147483647, %v564
      %vm2653 = vcmp.le.f32.partialorder %v2652, 0.7853982
      %vm2654 = vcmp.lt.s32.totalorder %v564, 0
      %v2655 = vand.u32 %v564, 2139095040
      %v2656 = vshrl.u32 %v2655, 23
      %v2657 = vsub.s32 %v2656, 127
      %v2658 = vand.u32 2147483647, %v564
      %v2659 = vand.u32 %v2658, 8388607
      %v2660 = vor.u32 %v2659, 8388608
      %v2661 = vsub.s32 0, %v2660
      %v2662 = vadd.s32 %v2657, 1
      %vm2663 = vcmp.gt.s32.totalorder %v2662, 0
      %v2664 = vsel %vm2663, %v2662, 0
      %v2665 = vshrl.u32 %v2664, 5
      %v2666 = vand.u32 %v2664, 31
      %v2667 = vsub.s32 32, %v2666
      %v2668 = vshrl.u32 683565275, %v2667
      %v2669 = vshll.u32 683565275, %v2666
      %v2670 = vshrl.u32 2475754826, %v2667
      %v2671 = vor.u32 %v2669, %v2670
      %v2672 = vshll.u32 2475754826, %v2666
      %v2673 = vshrl.u32 2131351028, %v2667
      %v2674 = vor.u32 %v2672, %v2673
      %v2675 = vshll.u32 2131351028, %v2666
      %v2676 = vshrl.u32 2102212464, %v2667
      %v2677 = vor.u32 %v2675, %v2676
      %v2678 = vshll.u32 2102212464, %v2666
      %v2679 = vshrl.u32 920167782, %v2667
      %v2680 = vor.u32 %v2678, %v2679
      %v2681 = vshll.u32 920167782, %v2666
      %v2682 = vshrl.u32 1326507024, %v2667
      %v2683 = vor.u32 %v2681, %v2682
      %vm2684 = vcmp.lt.s32.totalorder %v2665, 1
      %vm2685 = vcmp.lt.s32.totalorder %v2665, 2
      %vm2686 = vcmp.lt.s32.totalorder %v2665, 3
      %vm2687 = vcmp.lt.s32.totalorder %v2665, 4
      %v2688 = vsel %vm2684, %v2668, %v2671
      %v2689 = vsel %vm2687, %v2677, 2102212464
      %v2690 = vsel %vm2686, %v2674, %v2689
      %v2691 = vsel %vm2685, %v2688, %v2690
      %v2692 = vsel %vm2684, %v2671, %v2674
      %v2693 = vsel %vm2687, %v2680, 920167782
      %v2694 = vsel %vm2686, %v2677, %v2693
      %v2695 = vsel %vm2685, %v2692, %v2694
      %v2696 = vsel %vm2684, %v2674, %v2677
      %v2697 = vsel %vm2687, %v2683, 1326507024
      %v2698 = vsel %vm2686, %v2680, %v2697
      %v2699 = vsel %vm2685, %v2696, %v2698
      %v2700 = vshll.u32 %v2660, 8
      %v2701 = vmul.u32.u64.compose %v2700, %v2699
      %v2702 = vextract.low.u32 %v2701
      %v2703 = vextract.high.u32 %v2701
      %v2704 = vmul.u32.u64.compose %v2700, %v2695
      %v2705 = vextract.low.u32 %v2704
      %v2706 = vextract.high.u32 %v2704
      %v2707 = vmul.u32 %v2700, %v2691
      %v2708 = vadd.s32 %v2703, %v2705
      %vm2709 = vc.u32 %v2703, %v2705
      %v2710 = vadd.s32 %v2706, 1
      %v2711 = vsel %vm2709, %v2710, %v2706
      %v2712 = vadd.s32 %v2707, %v2711
      %v2713 = vadd.s32 %v2712, 536870912
      %v2714 = vshrl.u32 %v2713, 30
      %v2715 = vshll.u32 %v2714, 30
      %v2716 = vsub.s32 %v2712, %v2715
      %vm2717 = vcmp.lt.s32.totalorder %v2716, 0
      %v2718 = vsub.s32 0, %v2716
      %v2719 = vsel %vm2717, %v2718, %v2716
      %v2720 = vclz %v2719
      %v2721 = vsub.s32 %v2720, 2
      %vm2722 = vcmp.gt.s32.totalorder 0, %v2721
      %v2723 = vsel %vm2722, 0, %v2721
      %v2724 = vsub.s32 32, %v2723
      %v2725 = vshll.u32 %v2716, %v2723
      %v2726 = vshrl.u32 %v2708, %v2724
      %v2727 = vor.u32 %v2725, %v2726
      %v2728 = vsub.s32 4294967266, %v2723
      %v2729 = vadd.s32 %v2728, 127
      %v2730 = vshll.u32 %v2729, 23
      %v2731 = vor.u32 4788187, %v2730
      %v2732 = vand.u32 2147483647, %v2731
      %v2734 = vcvt.s32.f32 %v2727
      %v2735 = vmul.f32 %v2734, %v2732
      %v2736 = vxor.u32 %v2735, 2147483648
      %v2737 = vsel %vm2654, %v2736, %v2735
      %v2738 = vsub.s32 4, %v2714
      %v2739 = vsel %vm2654, %v2738, %v2714
      %v2740 = vsel %vm2653, %v564, %v2737
      %v2741 = vsel %vm2653, 0, %v2739
      %v2742 = vcosq.f32.pop %v2740
      %v2743 = vsinq.f32.pop %v2740
      %vm2744 = vweird.f32 %v564
      %v2745 = vand.u32 %v2741, 3
      %vm2746 = vcmp.lt.s32.totalorder %v2745, 2
      %vm2747 = vcmp.eq.s32.totalorder %v2745, 0
      %v2748 = vxor.u32 %v2743, 2147483648
      %v2749 = vsel %vm2747, %v2742, %v2748
      %vm2750 = vcmp.eq.s32.totalorder %v2745, 2
      %v2751 = vxor.u32 %v2742, 2147483648
      %v2752 = vsel %vm2750, %v2751, %v2743
      %v2753 = vsel %vm2746, %v2749, %v2752
      %v2754 = vsel %vm2744, nan, %v2753
      %v2755 = vand.u32 2147483647, %v565
      %vm2756 = vcmp.le.f32.partialorder %v2755, 0.7853982
      %vm2757 = vcmp.lt.s32.totalorder %v565, 0
      %v2758 = vand.u32 %v565, 2139095040
      %v2759 = vshrl.u32 %v2758, 23
      %v2760 = vsub.s32 %v2759, 127
      %v2761 = vand.u32 2147483647, %v565
      %v2762 = vand.u32 %v2761, 8388607
      %v2763 = vor.u32 %v2762, 8388608
      %v2764 = vsub.s32 0, %v2763
      %v2765 = vadd.s32 %v2760, 1
      %vm2766 = vcmp.gt.s32.totalorder %v2765, 0
      %v2767 = vsel %vm2766, %v2765, 0
      %v2768 = vshrl.u32 %v2767, 5
      %v2769 = vand.u32 %v2767, 31
      %v2770 = vsub.s32 32, %v2769
      %v2771 = vshrl.u32 683565275, %v2770
      %v2772 = vshll.u32 683565275, %v2769
      %v2773 = vshrl.u32 2475754826, %v2770
      %v2774 = vor.u32 %v2772, %v2773
      %v2775 = vshll.u32 2475754826, %v2769
      %v2776 = vshrl.u32 2131351028, %v2770
      %v2777 = vor.u32 %v2775, %v2776
      %v2778 = vshll.u32 2131351028, %v2769
      %v2779 = vshrl.u32 2102212464, %v2770
      %v2780 = vor.u32 %v2778, %v2779
      %v2781 = vshll.u32 2102212464, %v2769
      %v2782 = vshrl.u32 920167782, %v2770
      %v2783 = vor.u32 %v2781, %v2782
      %v2784 = vshll.u32 920167782, %v2769
      %v2785 = vshrl.u32 1326507024, %v2770
      %v2786 = vor.u32 %v2784, %v2785
      %vm2787 = vcmp.lt.s32.totalorder %v2768, 1
      %vm2788 = vcmp.lt.s32.totalorder %v2768, 2
      %vm2789 = vcmp.lt.s32.totalorder %v2768, 3
      %vm2790 = vcmp.lt.s32.totalorder %v2768, 4
      %v2791 = vsel %vm2787, %v2771, %v2774
      %v2792 = vsel %vm2790, %v2780, 2102212464
      %v2793 = vsel %vm2789, %v2777, %v2792
      %v2794 = vsel %vm2788, %v2791, %v2793
      %v2795 = vsel %vm2787, %v2774, %v2777
      %v2796 = vsel %vm2790, %v2783, 920167782
      %v2797 = vsel %vm2789, %v2780, %v2796
      %v2798 = vsel %vm2788, %v2795, %v2797
      %v2799 = vsel %vm2787, %v2777, %v2780
      %v2800 = vsel %vm2790, %v2786, 1326507024
      %v2801 = vsel %vm2789, %v2783, %v2800
      %v2802 = vsel %vm2788, %v2799, %v2801
      %v2803 = vshll.u32 %v2763, 8
      %v2804 = vmul.u32.u64.compose %v2803, %v2802
      %v2805 = vextract.low.u32 %v2804
      %v2806 = vextract.high.u32 %v2804
      %v2807 = vmul.u32.u64.compose %v2803, %v2798
      %v2808 = vextract.low.u32 %v2807
      %v2809 = vextract.high.u32 %v2807
      %v2810 = vmul.u32 %v2803, %v2794
      %v2811 = vadd.s32 %v2806, %v2808
      %vm2812 = vc.u32 %v2806, %v2808
      %v2813 = vadd.s32 %v2809, 1
      %v2814 = vsel %vm2812, %v2813, %v2809
      %v2815 = vadd.s32 %v2810, %v2814
      %v2816 = vadd.s32 %v2815, 536870912
      %v2817 = vshrl.u32 %v2816, 30
      %v2818 = vshll.u32 %v2817, 30
      %v2819 = vsub.s32 %v2815, %v2818
      %vm2820 = vcmp.lt.s32.totalorder %v2819, 0
      %v2821 = vsub.s32 0, %v2819
      %v2822 = vsel %vm2820, %v2821, %v2819
      %v2823 = vclz %v2822
      %v2824 = vsub.s32 %v2823, 2
      %vm2825 = vcmp.gt.s32.totalorder 0, %v2824
      %v2826 = vsel %vm2825, 0, %v2824
      %v2827 = vsub.s32 32, %v2826
      %v2828 = vshll.u32 %v2819, %v2826
      %v2829 = vshrl.u32 %v2811, %v2827
      %v2830 = vor.u32 %v2828, %v2829
      %v2831 = vsub.s32 4294967266, %v2826
      %v2832 = vadd.s32 %v2831, 127
      %v2833 = vshll.u32 %v2832, 23
      %v2834 = vor.u32 4788187, %v2833
      %v2835 = vand.u32 2147483647, %v2834
      %v2837 = vcvt.s32.f32 %v2830
      %v2838 = vmul.f32 %v2837, %v2835
      %v2839 = vxor.u32 %v2838, 2147483648
      %v2840 = vsel %vm2757, %v2839, %v2838
      %v2841 = vsub.s32 4, %v2817
      %v2842 = vsel %vm2757, %v2841, %v2817
      %v2843 = vsel %vm2756, %v565, %v2840
      %v2844 = vsel %vm2756, 0, %v2842
      %v2845 = vcosq.f32.pop %v2843
      %v2846 = vsinq.f32.pop %v2843
      %vm2847 = vweird.f32 %v565
      %v2848 = vand.u32 %v2844, 3
      %vm2849 = vcmp.lt.s32.totalorder %v2848, 2
      %vm2850 = vcmp.eq.s32.totalorder %v2848, 0
      %v2851 = vxor.u32 %v2846, 2147483648
      %v2852 = vsel %vm2850, %v2845, %v2851
      %vm2853 = vcmp.eq.s32.totalorder %v2848, 2
      %v2854 = vxor.u32 %v2845, 2147483648
      %v2855 = vsel %vm2853, %v2854, %v2846
      %v2856 = vsel %vm2849, %v2852, %v2855
      %v2857 = vsel %vm2847, nan, %v2856
      %v2858 = vand.u32 2147483647, %v566
      %vm2859 = vcmp.le.f32.partialorder %v2858, 0.7853982
      %vm2860 = vcmp.lt.s32.totalorder %v566, 0
      %v2861 = vand.u32 %v566, 2139095040
      %v2862 = vshrl.u32 %v2861, 23
      %v2863 = vsub.s32 %v2862, 127
      %v2864 = vand.u32 2147483647, %v566
      %v2865 = vand.u32 %v2864, 8388607
      %v2866 = vor.u32 %v2865, 8388608
      %v2867 = vsub.s32 0, %v2866
      %v2868 = vadd.s32 %v2863, 1
      %vm2869 = vcmp.gt.s32.totalorder %v2868, 0
      %v2870 = vsel %vm2869, %v2868, 0
      %v2871 = vshrl.u32 %v2870, 5
      %v2872 = vand.u32 %v2870, 31
      %v2873 = vsub.s32 32, %v2872
      %v2874 = vshrl.u32 683565275, %v2873
      %v2875 = vshll.u32 683565275, %v2872
      %v2876 = vshrl.u32 2475754826, %v2873
      %v2877 = vor.u32 %v2875, %v2876
      %v2878 = vshll.u32 2475754826, %v2872
      %v2879 = vshrl.u32 2131351028, %v2873
      %v2880 = vor.u32 %v2878, %v2879
      %v2881 = vshll.u32 2131351028, %v2872
      %v2882 = vshrl.u32 2102212464, %v2873
      %v2883 = vor.u32 %v2881, %v2882
      %v2884 = vshll.u32 2102212464, %v2872
      %v2885 = vshrl.u32 920167782, %v2873
      %v2886 = vor.u32 %v2884, %v2885
      %v2887 = vshll.u32 920167782, %v2872
      %v2888 = vshrl.u32 1326507024, %v2873
      %v2889 = vor.u32 %v2887, %v2888
      %vm2890 = vcmp.lt.s32.totalorder %v2871, 1
      %vm2891 = vcmp.lt.s32.totalorder %v2871, 2
      %vm2892 = vcmp.lt.s32.totalorder %v2871, 3
      %vm2893 = vcmp.lt.s32.totalorder %v2871, 4
      %v2894 = vsel %vm2890, %v2874, %v2877
      %v2895 = vsel %vm2893, %v2883, 2102212464
      %v2896 = vsel %vm2892, %v2880, %v2895
      %v2897 = vsel %vm2891, %v2894, %v2896
      %v2898 = vsel %vm2890, %v2877, %v2880
      %v2899 = vsel %vm2893, %v2886, 920167782
      %v2900 = vsel %vm2892, %v2883, %v2899
      %v2901 = vsel %vm2891, %v2898, %v2900
      %v2902 = vsel %vm2890, %v2880, %v2883
      %v2903 = vsel %vm2893, %v2889, 1326507024
      %v2904 = vsel %vm2892, %v2886, %v2903
      %v2905 = vsel %vm2891, %v2902, %v2904
      %v2906 = vshll.u32 %v2866, 8
      %v2907 = vmul.u32.u64.compose %v2906, %v2905
      %v2908 = vextract.low.u32 %v2907
      %v2909 = vextract.high.u32 %v2907
      %v2910 = vmul.u32.u64.compose %v2906, %v2901
      %v2911 = vextract.low.u32 %v2910
      %v2912 = vextract.high.u32 %v2910
      %v2913 = vmul.u32 %v2906, %v2897
      %v2914 = vadd.s32 %v2909, %v2911
      %vm2915 = vc.u32 %v2909, %v2911
      %v2916 = vadd.s32 %v2912, 1
      %v2917 = vsel %vm2915, %v2916, %v2912
      %v2918 = vadd.s32 %v2913, %v2917
      %v2919 = vadd.s32 %v2918, 536870912
      %v2920 = vshrl.u32 %v2919, 30
      %v2921 = vshll.u32 %v2920, 30
      %v2922 = vsub.s32 %v2918, %v2921
      %vm2923 = vcmp.lt.s32.totalorder %v2922, 0
      %v2924 = vsub.s32 0, %v2922
      %v2925 = vsel %vm2923, %v2924, %v2922
      %v2926 = vclz %v2925
      %v2927 = vsub.s32 %v2926, 2
      %vm2928 = vcmp.gt.s32.totalorder 0, %v2927
      %v2929 = vsel %vm2928, 0, %v2927
      %v2930 = vsub.s32 32, %v2929
      %v2931 = vshll.u32 %v2922, %v2929
      %v2932 = vshrl.u32 %v2914, %v2930
      %v2933 = vor.u32 %v2931, %v2932
      %v2934 = vsub.s32 4294967266, %v2929
      %v2935 = vadd.s32 %v2934, 127
      %v2936 = vshll.u32 %v2935, 23
      %v2937 = vor.u32 4788187, %v2936
      %v2938 = vand.u32 2147483647, %v2937
      %v2940 = vcvt.s32.f32 %v2933
      %v2941 = vmul.f32 %v2940, %v2938
      %v2942 = vxor.u32 %v2941, 2147483648
      %v2943 = vsel %vm2860, %v2942, %v2941
      %v2944 = vsub.s32 4, %v2920
      %v2945 = vsel %vm2860, %v2944, %v2920
      %v2946 = vsel %vm2859, %v566, %v2943
      %v2947 = vsel %vm2859, 0, %v2945
      %v2948 = vcosq.f32.pop %v2946
      %v2949 = vsinq.f32.pop %v2946
      %vm2950 = vweird.f32 %v566
      %v2951 = vand.u32 %v2947, 3
      %vm2952 = vcmp.lt.s32.totalorder %v2951, 2
      %vm2953 = vcmp.eq.s32.totalorder %v2951, 0
      %v2954 = vxor.u32 %v2949, 2147483648
      %v2955 = vsel %vm2953, %v2948, %v2954
      %vm2956 = vcmp.eq.s32.totalorder %v2951, 2
      %v2957 = vxor.u32 %v2948, 2147483648
      %v2958 = vsel %vm2956, %v2957, %v2949
      %v2959 = vsel %vm2952, %v2955, %v2958
      %v2960 = vsel %vm2950, nan, %v2959
      %v2961 = vand.u32 2147483647, %v567
      %vm2962 = vcmp.le.f32.partialorder %v2961, 0.7853982
      %vm2963 = vcmp.lt.s32.totalorder %v567, 0
      %v2964 = vand.u32 %v567, 2139095040
      %v2965 = vshrl.u32 %v2964, 23
      %v2966 = vsub.s32 %v2965, 127
      %v2967 = vand.u32 2147483647, %v567
      %v2968 = vand.u32 %v2967, 8388607
      %v2969 = vor.u32 %v2968, 8388608
      %v2970 = vsub.s32 0, %v2969
      %v2971 = vadd.s32 %v2966, 1
      %vm2972 = vcmp.gt.s32.totalorder %v2971, 0
      %v2973 = vsel %vm2972, %v2971, 0
      %v2974 = vshrl.u32 %v2973, 5
      %v2975 = vand.u32 %v2973, 31
      %v2976 = vsub.s32 32, %v2975
      %v2977 = vshrl.u32 683565275, %v2976
      %v2978 = vshll.u32 683565275, %v2975
      %v2979 = vshrl.u32 2475754826, %v2976
      %v2980 = vor.u32 %v2978, %v2979
      %v2981 = vshll.u32 2475754826, %v2975
      %v2982 = vshrl.u32 2131351028, %v2976
      %v2983 = vor.u32 %v2981, %v2982
      %v2984 = vshll.u32 2131351028, %v2975
      %v2985 = vshrl.u32 2102212464, %v2976
      %v2986 = vor.u32 %v2984, %v2985
      %v2987 = vshll.u32 2102212464, %v2975
      %v2988 = vshrl.u32 920167782, %v2976
      %v2989 = vor.u32 %v2987, %v2988
      %v2990 = vshll.u32 920167782, %v2975
      %v2991 = vshrl.u32 1326507024, %v2976
      %v2992 = vor.u32 %v2990, %v2991
      %vm2993 = vcmp.lt.s32.totalorder %v2974, 1
      %vm2994 = vcmp.lt.s32.totalorder %v2974, 2
      %vm2995 = vcmp.lt.s32.totalorder %v2974, 3
      %vm2996 = vcmp.lt.s32.totalorder %v2974, 4
      %v2997 = vsel %vm2993, %v2977, %v2980
      %v2998 = vsel %vm2996, %v2986, 2102212464
      %v2999 = vsel %vm2995, %v2983, %v2998
      %v3000 = vsel %vm2994, %v2997, %v2999
      %v3001 = vsel %vm2993, %v2980, %v2983
      %v3002 = vsel %vm2996, %v2989, 920167782
      %v3003 = vsel %vm2995, %v2986, %v3002
      %v3004 = vsel %vm2994, %v3001, %v3003
      %v3005 = vsel %vm2993, %v2983, %v2986
      %v3006 = vsel %vm2996, %v2992, 1326507024
      %v3007 = vsel %vm2995, %v2989, %v3006
      %v3008 = vsel %vm2994, %v3005, %v3007
      %v3009 = vshll.u32 %v2969, 8
      %v3010 = vmul.u32.u64.compose %v3009, %v3008
      %v3011 = vextract.low.u32 %v3010
      %v3012 = vextract.high.u32 %v3010
      %v3013 = vmul.u32.u64.compose %v3009, %v3004
      %v3014 = vextract.low.u32 %v3013
      %v3015 = vextract.high.u32 %v3013
      %v3016 = vmul.u32 %v3009, %v3000
      %v3017 = vadd.s32 %v3012, %v3014
      %vm3018 = vc.u32 %v3012, %v3014
      %v3019 = vadd.s32 %v3015, 1
      %v3020 = vsel %vm3018, %v3019, %v3015
      %v3021 = vadd.s32 %v3016, %v3020
      %v3022 = vadd.s32 %v3021, 536870912
      %v3023 = vshrl.u32 %v3022, 30
      %v3024 = vshll.u32 %v3023, 30
      %v3025 = vsub.s32 %v3021, %v3024
      %vm3026 = vcmp.lt.s32.totalorder %v3025, 0
      %v3027 = vsub.s32 0, %v3025
      %v3028 = vsel %vm3026, %v3027, %v3025
      %v3029 = vclz %v3028
      %v3030 = vsub.s32 %v3029, 2
      %vm3031 = vcmp.gt.s32.totalorder 0, %v3030
      %v3032 = vsel %vm3031, 0, %v3030
      %v3033 = vsub.s32 32, %v3032
      %v3034 = vshll.u32 %v3025, %v3032
      %v3035 = vshrl.u32 %v3017, %v3033
      %v3036 = vor.u32 %v3034, %v3035
      %v3037 = vsub.s32 4294967266, %v3032
      %v3038 = vadd.s32 %v3037, 127
      %v3039 = vshll.u32 %v3038, 23
      %v3040 = vor.u32 4788187, %v3039
      %v3041 = vand.u32 2147483647, %v3040
      %v3043 = vcvt.s32.f32 %v3036
      %v3044 = vmul.f32 %v3043, %v3041
      %v3045 = vxor.u32 %v3044, 2147483648
      %v3046 = vsel %vm2963, %v3045, %v3044
      %v3047 = vsub.s32 4, %v3023
      %v3048 = vsel %vm2963, %v3047, %v3023
      %v3049 = vsel %vm2962, %v567, %v3046
      %v3050 = vsel %vm2962, 0, %v3048
      %v3051 = vcosq.f32.pop %v3049
      %v3052 = vsinq.f32.pop %v3049
      %vm3053 = vweird.f32 %v567
      %v3054 = vand.u32 %v3050, 3
      %vm3055 = vcmp.lt.s32.totalorder %v3054, 2
      %vm3056 = vcmp.eq.s32.totalorder %v3054, 0
      %v3057 = vxor.u32 %v3052, 2147483648
      %v3058 = vsel %vm3056, %v3051, %v3057
      %vm3059 = vcmp.eq.s32.totalorder %v3054, 2
      %v3060 = vxor.u32 %v3051, 2147483648
      %v3061 = vsel %vm3059, %v3060, %v3052
      %v3062 = vsel %vm3055, %v3058, %v3061
      %v3063 = vsel %vm3053, nan, %v3062
      %v3064 = vand.u32 2147483647, %v568
      %vm3065 = vcmp.le.f32.partialorder %v3064, 0.7853982
      %vm3066 = vcmp.lt.s32.totalorder %v568, 0
      %v3067 = vand.u32 %v568, 2139095040
      %v3068 = vshrl.u32 %v3067, 23
      %v3069 = vsub.s32 %v3068, 127
      %v3070 = vand.u32 2147483647, %v568
      %v3071 = vand.u32 %v3070, 8388607
      %v3072 = vor.u32 %v3071, 8388608
      %v3073 = vsub.s32 0, %v3072
      %v3074 = vadd.s32 %v3069, 1
      %vm3075 = vcmp.gt.s32.totalorder %v3074, 0
      %v3076 = vsel %vm3075, %v3074, 0
      %v3077 = vshrl.u32 %v3076, 5
      %v3078 = vand.u32 %v3076, 31
      %v3079 = vsub.s32 32, %v3078
      %v3080 = vshrl.u32 683565275, %v3079
      %v3081 = vshll.u32 683565275, %v3078
      %v3082 = vshrl.u32 2475754826, %v3079
      %v3083 = vor.u32 %v3081, %v3082
      %v3084 = vshll.u32 2475754826, %v3078
      %v3085 = vshrl.u32 2131351028, %v3079
      %v3086 = vor.u32 %v3084, %v3085
      %v3087 = vshll.u32 2131351028, %v3078
      %v3088 = vshrl.u32 2102212464, %v3079
      %v3089 = vor.u32 %v3087, %v3088
      %v3090 = vshll.u32 2102212464, %v3078
      %v3091 = vshrl.u32 920167782, %v3079
      %v3092 = vor.u32 %v3090, %v3091
      %v3093 = vshll.u32 920167782, %v3078
      %v3094 = vshrl.u32 1326507024, %v3079
      %v3095 = vor.u32 %v3093, %v3094
      %vm3096 = vcmp.lt.s32.totalorder %v3077, 1
      %vm3097 = vcmp.lt.s32.totalorder %v3077, 2
      %vm3098 = vcmp.lt.s32.totalorder %v3077, 3
      %vm3099 = vcmp.lt.s32.totalorder %v3077, 4
      %v3100 = vsel %vm3096, %v3080, %v3083
      %v3101 = vsel %vm3099, %v3089, 2102212464
      %v3102 = vsel %vm3098, %v3086, %v3101
      %v3103 = vsel %vm3097, %v3100, %v3102
      %v3104 = vsel %vm3096, %v3083, %v3086
      %v3105 = vsel %vm3099, %v3092, 920167782
      %v3106 = vsel %vm3098, %v3089, %v3105
      %v3107 = vsel %vm3097, %v3104, %v3106
      %v3108 = vsel %vm3096, %v3086, %v3089
      %v3109 = vsel %vm3099, %v3095, 1326507024
      %v3110 = vsel %vm3098, %v3092, %v3109
      %v3111 = vsel %vm3097, %v3108, %v3110
      %v3112 = vshll.u32 %v3072, 8
      %v3113 = vmul.u32.u64.compose %v3112, %v3111
      %v3114 = vextract.low.u32 %v3113
      %v3115 = vextract.high.u32 %v3113
      %v3116 = vmul.u32.u64.compose %v3112, %v3107
      %v3117 = vextract.low.u32 %v3116
      %v3118 = vextract.high.u32 %v3116
      %v3119 = vmul.u32 %v3112, %v3103
      %v3120 = vadd.s32 %v3115, %v3117
      %vm3121 = vc.u32 %v3115, %v3117
      %v3122 = vadd.s32 %v3118, 1
      %v3123 = vsel %vm3121, %v3122, %v3118
      %v3124 = vadd.s32 %v3119, %v3123
      %v3125 = vadd.s32 %v3124, 536870912
      %v3126 = vshrl.u32 %v3125, 30
      %v3127 = vshll.u32 %v3126, 30
      %v3128 = vsub.s32 %v3124, %v3127
      %vm3129 = vcmp.lt.s32.totalorder %v3128, 0
      %v3130 = vsub.s32 0, %v3128
      %v3131 = vsel %vm3129, %v3130, %v3128
      %v3132 = vclz %v3131
      %v3133 = vsub.s32 %v3132, 2
      %vm3134 = vcmp.gt.s32.totalorder 0, %v3133
      %v3135 = vsel %vm3134, 0, %v3133
      %v3136 = vsub.s32 32, %v3135
      %v3137 = vshll.u32 %v3128, %v3135
      %v3138 = vshrl.u32 %v3120, %v3136
      %v3139 = vor.u32 %v3137, %v3138
      %v3140 = vsub.s32 4294967266, %v3135
      %v3141 = vadd.s32 %v3140, 127
      %v3142 = vshll.u32 %v3141, 23
      %v3143 = vor.u32 4788187, %v3142
      %v3144 = vand.u32 2147483647, %v3143
      %v3146 = vcvt.s32.f32 %v3139
      %v3147 = vmul.f32 %v3146, %v3144
      %v3148 = vxor.u32 %v3147, 2147483648
      %v3149 = vsel %vm3066, %v3148, %v3147
      %v3150 = vsub.s32 4, %v3126
      %v3151 = vsel %vm3066, %v3150, %v3126
      %v3152 = vsel %vm3065, %v568, %v3149
      %v3153 = vsel %vm3065, 0, %v3151
      %v3154 = vcosq.f32.pop %v3152
      %v3155 = vsinq.f32.pop %v3152
      %vm3156 = vweird.f32 %v568
      %v3157 = vand.u32 %v3153, 3
      %vm3158 = vcmp.lt.s32.totalorder %v3157, 2
      %vm3159 = vcmp.eq.s32.totalorder %v3157, 0
      %v3160 = vxor.u32 %v3155, 2147483648
      %v3161 = vsel %vm3159, %v3154, %v3160
      %vm3162 = vcmp.eq.s32.totalorder %v3157, 2
      %v3163 = vxor.u32 %v3154, 2147483648
      %v3164 = vsel %vm3162, %v3163, %v3155
      %v3165 = vsel %vm3158, %v3161, %v3164
      %v3166 = vsel %vm3156, nan, %v3165
      %v3167 = vand.u32 2147483647, %v569
      %vm3168 = vcmp.le.f32.partialorder %v3167, 0.7853982
      %vm3169 = vcmp.lt.s32.totalorder %v569, 0
      %v3170 = vand.u32 %v569, 2139095040
      %v3171 = vshrl.u32 %v3170, 23
      %v3172 = vsub.s32 %v3171, 127
      %v3173 = vand.u32 2147483647, %v569
      %v3174 = vand.u32 %v3173, 8388607
      %v3175 = vor.u32 %v3174, 8388608
      %v3176 = vsub.s32 0, %v3175
      %v3177 = vadd.s32 %v3172, 1
      %vm3178 = vcmp.gt.s32.totalorder %v3177, 0
      %v3179 = vsel %vm3178, %v3177, 0
      %v3180 = vshrl.u32 %v3179, 5
      %v3181 = vand.u32 %v3179, 31
      %v3182 = vsub.s32 32, %v3181
      %v3183 = vshrl.u32 683565275, %v3182
      %v3184 = vshll.u32 683565275, %v3181
      %v3185 = vshrl.u32 2475754826, %v3182
      %v3186 = vor.u32 %v3184, %v3185
      %v3187 = vshll.u32 2475754826, %v3181
      %v3188 = vshrl.u32 2131351028, %v3182
      %v3189 = vor.u32 %v3187, %v3188
      %v3190 = vshll.u32 2131351028, %v3181
      %v3191 = vshrl.u32 2102212464, %v3182
      %v3192 = vor.u32 %v3190, %v3191
      %v3193 = vshll.u32 2102212464, %v3181
      %v3194 = vshrl.u32 920167782, %v3182
      %v3195 = vor.u32 %v3193, %v3194
      %v3196 = vshll.u32 920167782, %v3181
      %v3197 = vshrl.u32 1326507024, %v3182
      %v3198 = vor.u32 %v3196, %v3197
      %vm3199 = vcmp.lt.s32.totalorder %v3180, 1
      %vm3200 = vcmp.lt.s32.totalorder %v3180, 2
      %vm3201 = vcmp.lt.s32.totalorder %v3180, 3
      %vm3202 = vcmp.lt.s32.totalorder %v3180, 4
      %v3203 = vsel %vm3199, %v3183, %v3186
      %v3204 = vsel %vm3202, %v3192, 2102212464
      %v3205 = vsel %vm3201, %v3189, %v3204
      %v3206 = vsel %vm3200, %v3203, %v3205
      %v3207 = vsel %vm3199, %v3186, %v3189
      %v3208 = vsel %vm3202, %v3195, 920167782
      %v3209 = vsel %vm3201, %v3192, %v3208
      %v3210 = vsel %vm3200, %v3207, %v3209
      %v3211 = vsel %vm3199, %v3189, %v3192
      %v3212 = vsel %vm3202, %v3198, 1326507024
      %v3213 = vsel %vm3201, %v3195, %v3212
      %v3214 = vsel %vm3200, %v3211, %v3213
      %v3215 = vshll.u32 %v3175, 8
      %v3216 = vmul.u32.u64.compose %v3215, %v3214
      %v3217 = vextract.low.u32 %v3216
      %v3218 = vextract.high.u32 %v3216
      %v3219 = vmul.u32.u64.compose %v3215, %v3210
      %v3220 = vextract.low.u32 %v3219
      %v3221 = vextract.high.u32 %v3219
      %v3222 = vmul.u32 %v3215, %v3206
      %v3223 = vadd.s32 %v3218, %v3220
      %vm3224 = vc.u32 %v3218, %v3220
      %v3225 = vadd.s32 %v3221, 1
      %v3226 = vsel %vm3224, %v3225, %v3221
      %v3227 = vadd.s32 %v3222, %v3226
      %v3228 = vadd.s32 %v3227, 536870912
      %v3229 = vshrl.u32 %v3228, 30
      %v3230 = vshll.u32 %v3229, 30
      %v3231 = vsub.s32 %v3227, %v3230
      %vm3232 = vcmp.lt.s32.totalorder %v3231, 0
      %v3233 = vsub.s32 0, %v3231
      %v3234 = vsel %vm3232, %v3233, %v3231
      %v3235 = vclz %v3234
      %v3236 = vsub.s32 %v3235, 2
      %vm3237 = vcmp.gt.s32.totalorder 0, %v3236
      %v3238 = vsel %vm3237, 0, %v3236
      %v3239 = vsub.s32 32, %v3238
      %v3240 = vshll.u32 %v3231, %v3238
      %v3241 = vshrl.u32 %v3223, %v3239
      %v3242 = vor.u32 %v3240, %v3241
      %v3243 = vsub.s32 4294967266, %v3238
      %v3244 = vadd.s32 %v3243, 127
      %v3245 = vshll.u32 %v3244, 23
      %v3246 = vor.u32 4788187, %v3245
      %v3247 = vand.u32 2147483647, %v3246
      %v3249 = vcvt.s32.f32 %v3242
      %v3250 = vmul.f32 %v3249, %v3247
      %v3251 = vxor.u32 %v3250, 2147483648
      %v3252 = vsel %vm3169, %v3251, %v3250
      %v3253 = vsub.s32 4, %v3229
      %v3254 = vsel %vm3169, %v3253, %v3229
      %v3255 = vsel %vm3168, %v569, %v3252
      %v3256 = vsel %vm3168, 0, %v3254
      %v3257 = vcosq.f32.pop %v3255
      %v3258 = vsinq.f32.pop %v3255
      %vm3259 = vweird.f32 %v569
      %v3260 = vand.u32 %v3256, 3
      %vm3261 = vcmp.lt.s32.totalorder %v3260, 2
      %vm3262 = vcmp.eq.s32.totalorder %v3260, 0
      %v3263 = vxor.u32 %v3258, 2147483648
      %v3264 = vsel %vm3262, %v3257, %v3263
      %vm3265 = vcmp.eq.s32.totalorder %v3260, 2
      %v3266 = vxor.u32 %v3257, 2147483648
      %v3267 = vsel %vm3265, %v3266, %v3258
      %v3268 = vsel %vm3261, %v3264, %v3267
      %v3269 = vsel %vm3259, nan, %v3268
      %v3270 = vand.u32 2147483647, %v570
      %vm3271 = vcmp.le.f32.partialorder %v3270, 0.7853982
      %vm3272 = vcmp.lt.s32.totalorder %v570, 0
      %v3273 = vand.u32 %v570, 2139095040
      %v3274 = vshrl.u32 %v3273, 23
      %v3275 = vsub.s32 %v3274, 127
      %v3276 = vand.u32 2147483647, %v570
      %v3277 = vand.u32 %v3276, 8388607
      %v3278 = vor.u32 %v3277, 8388608
      %v3279 = vsub.s32 0, %v3278
      %v3280 = vadd.s32 %v3275, 1
      %vm3281 = vcmp.gt.s32.totalorder %v3280, 0
      %v3282 = vsel %vm3281, %v3280, 0
      %v3283 = vshrl.u32 %v3282, 5
      %v3284 = vand.u32 %v3282, 31
      %v3285 = vsub.s32 32, %v3284
      %v3286 = vshrl.u32 683565275, %v3285
      %v3287 = vshll.u32 683565275, %v3284
      %v3288 = vshrl.u32 2475754826, %v3285
      %v3289 = vor.u32 %v3287, %v3288
      %v3290 = vshll.u32 2475754826, %v3284
      %v3291 = vshrl.u32 2131351028, %v3285
      %v3292 = vor.u32 %v3290, %v3291
      %v3293 = vshll.u32 2131351028, %v3284
      %v3294 = vshrl.u32 2102212464, %v3285
      %v3295 = vor.u32 %v3293, %v3294
      %v3296 = vshll.u32 2102212464, %v3284
      %v3297 = vshrl.u32 920167782, %v3285
      %v3298 = vor.u32 %v3296, %v3297
      %v3299 = vshll.u32 920167782, %v3284
      %v3300 = vshrl.u32 1326507024, %v3285
      %v3301 = vor.u32 %v3299, %v3300
      %vm3302 = vcmp.lt.s32.totalorder %v3283, 1
      %vm3303 = vcmp.lt.s32.totalorder %v3283, 2
      %vm3304 = vcmp.lt.s32.totalorder %v3283, 3
      %vm3305 = vcmp.lt.s32.totalorder %v3283, 4
      %v3306 = vsel %vm3302, %v3286, %v3289
      %v3307 = vsel %vm3305, %v3295, 2102212464
      %v3308 = vsel %vm3304, %v3292, %v3307
      %v3309 = vsel %vm3303, %v3306, %v3308
      %v3310 = vsel %vm3302, %v3289, %v3292
      %v3311 = vsel %vm3305, %v3298, 920167782
      %v3312 = vsel %vm3304, %v3295, %v3311
      %v3313 = vsel %vm3303, %v3310, %v3312
      %v3314 = vsel %vm3302, %v3292, %v3295
      %v3315 = vsel %vm3305, %v3301, 1326507024
      %v3316 = vsel %vm3304, %v3298, %v3315
      %v3317 = vsel %vm3303, %v3314, %v3316
      %v3318 = vshll.u32 %v3278, 8
      %v3319 = vmul.u32.u64.compose %v3318, %v3317
      %v3320 = vextract.low.u32 %v3319
      %v3321 = vextract.high.u32 %v3319
      %v3322 = vmul.u32.u64.compose %v3318, %v3313
      %v3323 = vextract.low.u32 %v3322
      %v3324 = vextract.high.u32 %v3322
      %v3325 = vmul.u32 %v3318, %v3309
      %v3326 = vadd.s32 %v3321, %v3323
      %vm3327 = vc.u32 %v3321, %v3323
      %v3328 = vadd.s32 %v3324, 1
      %v3329 = vsel %vm3327, %v3328, %v3324
      %v3330 = vadd.s32 %v3325, %v3329
      %v3331 = vadd.s32 %v3330, 536870912
      %v3332 = vshrl.u32 %v3331, 30
      %v3333 = vshll.u32 %v3332, 30
      %v3334 = vsub.s32 %v3330, %v3333
      %vm3335 = vcmp.lt.s32.totalorder %v3334, 0
      %v3336 = vsub.s32 0, %v3334
      %v3337 = vsel %vm3335, %v3336, %v3334
      %v3338 = vclz %v3337
      %v3339 = vsub.s32 %v3338, 2
      %vm3340 = vcmp.gt.s32.totalorder 0, %v3339
      %v3341 = vsel %vm3340, 0, %v3339
      %v3342 = vsub.s32 32, %v3341
      %v3343 = vshll.u32 %v3334, %v3341
      %v3344 = vshrl.u32 %v3326, %v3342
      %v3345 = vor.u32 %v3343, %v3344
      %v3346 = vsub.s32 4294967266, %v3341
      %v3347 = vadd.s32 %v3346, 127
      %v3348 = vshll.u32 %v3347, 23
      %v3349 = vor.u32 4788187, %v3348
      %v3350 = vand.u32 2147483647, %v3349
      %v3352 = vcvt.s32.f32 %v3345
      %v3353 = vmul.f32 %v3352, %v3350
      %v3354 = vxor.u32 %v3353, 2147483648
      %v3355 = vsel %vm3272, %v3354, %v3353
      %v3356 = vsub.s32 4, %v3332
      %v3357 = vsel %vm3272, %v3356, %v3332
      %v3358 = vsel %vm3271, %v570, %v3355
      %v3359 = vsel %vm3271, 0, %v3357
      %v3360 = vcosq.f32.pop %v3358
      %v3361 = vsinq.f32.pop %v3358
      %vm3362 = vweird.f32 %v570
      %v3363 = vand.u32 %v3359, 3
      %vm3364 = vcmp.lt.s32.totalorder %v3363, 2
      %vm3365 = vcmp.eq.s32.totalorder %v3363, 0
      %v3366 = vxor.u32 %v3361, 2147483648
      %v3367 = vsel %vm3365, %v3360, %v3366
      %vm3368 = vcmp.eq.s32.totalorder %v3363, 2
      %v3369 = vxor.u32 %v3360, 2147483648
      %v3370 = vsel %vm3368, %v3369, %v3361
      %v3371 = vsel %vm3364, %v3367, %v3370
      %v3372 = vsel %vm3362, nan, %v3371
      %v3373 = vand.u32 2147483647, %v571
      %vm3374 = vcmp.le.f32.partialorder %v3373, 0.7853982
      %vm3375 = vcmp.lt.s32.totalorder %v571, 0
      %v3376 = vand.u32 %v571, 2139095040
      %v3377 = vshrl.u32 %v3376, 23
      %v3378 = vsub.s32 %v3377, 127
      %v3379 = vand.u32 2147483647, %v571
      %v3380 = vand.u32 %v3379, 8388607
      %v3381 = vor.u32 %v3380, 8388608
      %v3382 = vsub.s32 0, %v3381
      %v3383 = vadd.s32 %v3378, 1
      %vm3384 = vcmp.gt.s32.totalorder %v3383, 0
      %v3385 = vsel %vm3384, %v3383, 0
      %v3386 = vshrl.u32 %v3385, 5
      %v3387 = vand.u32 %v3385, 31
      %v3388 = vsub.s32 32, %v3387
      %v3389 = vshrl.u32 683565275, %v3388
      %v3390 = vshll.u32 683565275, %v3387
      %v3391 = vshrl.u32 2475754826, %v3388
      %v3392 = vor.u32 %v3390, %v3391
      %v3393 = vshll.u32 2475754826, %v3387
      %v3394 = vshrl.u32 2131351028, %v3388
      %v3395 = vor.u32 %v3393, %v3394
      %v3396 = vshll.u32 2131351028, %v3387
      %v3397 = vshrl.u32 2102212464, %v3388
      %v3398 = vor.u32 %v3396, %v3397
      %v3399 = vshll.u32 2102212464, %v3387
      %v3400 = vshrl.u32 920167782, %v3388
      %v3401 = vor.u32 %v3399, %v3400
      %v3402 = vshll.u32 920167782, %v3387
      %v3403 = vshrl.u32 1326507024, %v3388
      %v3404 = vor.u32 %v3402, %v3403
      %vm3405 = vcmp.lt.s32.totalorder %v3386, 1
      %vm3406 = vcmp.lt.s32.totalorder %v3386, 2
      %vm3407 = vcmp.lt.s32.totalorder %v3386, 3
      %vm3408 = vcmp.lt.s32.totalorder %v3386, 4
      %v3409 = vsel %vm3405, %v3389, %v3392
      %v3410 = vsel %vm3408, %v3398, 2102212464
      %v3411 = vsel %vm3407, %v3395, %v3410
      %v3412 = vsel %vm3406, %v3409, %v3411
      %v3413 = vsel %vm3405, %v3392, %v3395
      %v3414 = vsel %vm3408, %v3401, 920167782
      %v3415 = vsel %vm3407, %v3398, %v3414
      %v3416 = vsel %vm3406, %v3413, %v3415
      %v3417 = vsel %vm3405, %v3395, %v3398
      %v3418 = vsel %vm3408, %v3404, 1326507024
      %v3419 = vsel %vm3407, %v3401, %v3418
      %v3420 = vsel %vm3406, %v3417, %v3419
      %v3421 = vshll.u32 %v3381, 8
      %v3422 = vmul.u32.u64.compose %v3421, %v3420
      %v3423 = vextract.low.u32 %v3422
      %v3424 = vextract.high.u32 %v3422
      %v3425 = vmul.u32.u64.compose %v3421, %v3416
      %v3426 = vextract.low.u32 %v3425
      %v3427 = vextract.high.u32 %v3425
      %v3428 = vmul.u32 %v3421, %v3412
      %v3429 = vadd.s32 %v3424, %v3426
      %vm3430 = vc.u32 %v3424, %v3426
      %v3431 = vadd.s32 %v3427, 1
      %v3432 = vsel %vm3430, %v3431, %v3427
      %v3433 = vadd.s32 %v3428, %v3432
      %v3434 = vadd.s32 %v3433, 536870912
      %v3435 = vshrl.u32 %v3434, 30
      %v3436 = vshll.u32 %v3435, 30
      %v3437 = vsub.s32 %v3433, %v3436
      %vm3438 = vcmp.lt.s32.totalorder %v3437, 0
      %v3439 = vsub.s32 0, %v3437
      %v3440 = vsel %vm3438, %v3439, %v3437
      %v3441 = vclz %v3440
      %v3442 = vsub.s32 %v3441, 2
      %vm3443 = vcmp.gt.s32.totalorder 0, %v3442
      %v3444 = vsel %vm3443, 0, %v3442
      %v3445 = vsub.s32 32, %v3444
      %v3446 = vshll.u32 %v3437, %v3444
      %v3447 = vshrl.u32 %v3429, %v3445
      %v3448 = vor.u32 %v3446, %v3447
      %v3449 = vsub.s32 4294967266, %v3444
      %v3450 = vadd.s32 %v3449, 127
      %v3451 = vshll.u32 %v3450, 23
      %v3452 = vor.u32 4788187, %v3451
      %v3453 = vand.u32 2147483647, %v3452
      %v3455 = vcvt.s32.f32 %v3448
      %v3456 = vmul.f32 %v3455, %v3453
      %v3457 = vxor.u32 %v3456, 2147483648
      %v3458 = vsel %vm3375, %v3457, %v3456
      %v3459 = vsub.s32 4, %v3435
      %v3460 = vsel %vm3375, %v3459, %v3435
      %v3461 = vsel %vm3374, %v571, %v3458
      %v3462 = vsel %vm3374, 0, %v3460
      %v3463 = vcosq.f32.pop %v3461
      %v3464 = vsinq.f32.pop %v3461
      %vm3465 = vweird.f32 %v571
      %v3466 = vand.u32 %v3462, 3
      %vm3467 = vcmp.lt.s32.totalorder %v3466, 2
      %vm3468 = vcmp.eq.s32.totalorder %v3466, 0
      %v3469 = vxor.u32 %v3464, 2147483648
      %v3470 = vsel %vm3468, %v3463, %v3469
      %vm3471 = vcmp.eq.s32.totalorder %v3466, 2
      %v3472 = vxor.u32 %v3463, 2147483648
      %v3473 = vsel %vm3471, %v3472, %v3464
      %v3474 = vsel %vm3467, %v3470, %v3473
      %v3475 = vsel %vm3465, nan, %v3474
      %v3476 = vand.u32 2147483647, %v572
      %vm3477 = vcmp.le.f32.partialorder %v3476, 0.7853982
      %vm3478 = vcmp.lt.s32.totalorder %v572, 0
      %v3479 = vand.u32 %v572, 2139095040
      %v3480 = vshrl.u32 %v3479, 23
      %v3481 = vsub.s32 %v3480, 127
      %v3482 = vand.u32 2147483647, %v572
      %v3483 = vand.u32 %v3482, 8388607
      %v3484 = vor.u32 %v3483, 8388608
      %v3485 = vsub.s32 0, %v3484
      %v3486 = vadd.s32 %v3481, 1
      %vm3487 = vcmp.gt.s32.totalorder %v3486, 0
      %v3488 = vsel %vm3487, %v3486, 0
      %v3489 = vshrl.u32 %v3488, 5
      %v3490 = vand.u32 %v3488, 31
      %v3491 = vsub.s32 32, %v3490
      %v3492 = vshrl.u32 683565275, %v3491
      %v3493 = vshll.u32 683565275, %v3490
      %v3494 = vshrl.u32 2475754826, %v3491
      %v3495 = vor.u32 %v3493, %v3494
      %v3496 = vshll.u32 2475754826, %v3490
      %v3497 = vshrl.u32 2131351028, %v3491
      %v3498 = vor.u32 %v3496, %v3497
      %v3499 = vshll.u32 2131351028, %v3490
      %v3500 = vshrl.u32 2102212464, %v3491
      %v3501 = vor.u32 %v3499, %v3500
      %v3502 = vshll.u32 2102212464, %v3490
      %v3503 = vshrl.u32 920167782, %v3491
      %v3504 = vor.u32 %v3502, %v3503
      %v3505 = vshll.u32 920167782, %v3490
      %v3506 = vshrl.u32 1326507024, %v3491
      %v3507 = vor.u32 %v3505, %v3506
      %vm3508 = vcmp.lt.s32.totalorder %v3489, 1
      %vm3509 = vcmp.lt.s32.totalorder %v3489, 2
      %vm3510 = vcmp.lt.s32.totalorder %v3489, 3
      %vm3511 = vcmp.lt.s32.totalorder %v3489, 4
      %v3512 = vsel %vm3508, %v3492, %v3495
      %v3513 = vsel %vm3511, %v3501, 2102212464
      %v3514 = vsel %vm3510, %v3498, %v3513
      %v3515 = vsel %vm3509, %v3512, %v3514
      %v3516 = vsel %vm3508, %v3495, %v3498
      %v3517 = vsel %vm3511, %v3504, 920167782
      %v3518 = vsel %vm3510, %v3501, %v3517
      %v3519 = vsel %vm3509, %v3516, %v3518
      %v3520 = vsel %vm3508, %v3498, %v3501
      %v3521 = vsel %vm3511, %v3507, 1326507024
      %v3522 = vsel %vm3510, %v3504, %v3521
      %v3523 = vsel %vm3509, %v3520, %v3522
      %v3524 = vshll.u32 %v3484, 8
      %v3525 = vmul.u32.u64.compose %v3524, %v3523
      %v3526 = vextract.low.u32 %v3525
      %v3527 = vextract.high.u32 %v3525
      %v3528 = vmul.u32.u64.compose %v3524, %v3519
      %v3529 = vextract.low.u32 %v3528
      %v3530 = vextract.high.u32 %v3528
      %v3531 = vmul.u32 %v3524, %v3515
      %v3532 = vadd.s32 %v3527, %v3529
      %vm3533 = vc.u32 %v3527, %v3529
      %v3534 = vadd.s32 %v3530, 1
      %v3535 = vsel %vm3533, %v3534, %v3530
      %v3536 = vadd.s32 %v3531, %v3535
      %v3537 = vadd.s32 %v3536, 536870912
      %v3538 = vshrl.u32 %v3537, 30
      %v3539 = vshll.u32 %v3538, 30
      %v3540 = vsub.s32 %v3536, %v3539
      %vm3541 = vcmp.lt.s32.totalorder %v3540, 0
      %v3542 = vsub.s32 0, %v3540
      %v3543 = vsel %vm3541, %v3542, %v3540
      %v3544 = vclz %v3543
      %v3545 = vsub.s32 %v3544, 2
      %vm3546 = vcmp.gt.s32.totalorder 0, %v3545
      %v3547 = vsel %vm3546, 0, %v3545
      %v3548 = vsub.s32 32, %v3547
      %v3549 = vshll.u32 %v3540, %v3547
      %v3550 = vshrl.u32 %v3532, %v3548
      %v3551 = vor.u32 %v3549, %v3550
      %v3552 = vsub.s32 4294967266, %v3547
      %v3553 = vadd.s32 %v3552, 127
      %v3554 = vshll.u32 %v3553, 23
      %v3555 = vor.u32 4788187, %v3554
      %v3556 = vand.u32 2147483647, %v3555
      %v3558 = vcvt.s32.f32 %v3551
      %v3559 = vmul.f32 %v3558, %v3556
      %v3560 = vxor.u32 %v3559, 2147483648
      %v3561 = vsel %vm3478, %v3560, %v3559
      %v3562 = vsub.s32 4, %v3538
      %v3563 = vsel %vm3478, %v3562, %v3538
      %v3564 = vsel %vm3477, %v572, %v3561
      %v3565 = vsel %vm3477, 0, %v3563
      %v3566 = vcosq.f32.pop %v3564
      %v3567 = vsinq.f32.pop %v3564
      %vm3568 = vweird.f32 %v572
      %v3569 = vand.u32 %v3565, 3
      %vm3570 = vcmp.lt.s32.totalorder %v3569, 2
      %vm3571 = vcmp.eq.s32.totalorder %v3569, 0
      %v3572 = vxor.u32 %v3567, 2147483648
      %v3573 = vsel %vm3571, %v3566, %v3572
      %vm3574 = vcmp.eq.s32.totalorder %v3569, 2
      %v3575 = vxor.u32 %v3566, 2147483648
      %v3576 = vsel %vm3574, %v3575, %v3567
      %v3577 = vsel %vm3570, %v3573, %v3576
      %v3578 = vsel %vm3568, nan, %v3577
      %v3579 = vand.u32 2147483647, %v573
      %vm3580 = vcmp.le.f32.partialorder %v3579, 0.7853982
      %vm3581 = vcmp.lt.s32.totalorder %v573, 0
      %v3582 = vand.u32 %v573, 2139095040
      %v3583 = vshrl.u32 %v3582, 23
      %v3584 = vsub.s32 %v3583, 127
      %v3585 = vand.u32 2147483647, %v573
      %v3586 = vand.u32 %v3585, 8388607
      %v3587 = vor.u32 %v3586, 8388608
      %v3588 = vsub.s32 0, %v3587
      %v3589 = vadd.s32 %v3584, 1
      %vm3590 = vcmp.gt.s32.totalorder %v3589, 0
      %v3591 = vsel %vm3590, %v3589, 0
      %v3592 = vshrl.u32 %v3591, 5
      %v3593 = vand.u32 %v3591, 31
      %v3594 = vsub.s32 32, %v3593
      %v3595 = vshrl.u32 683565275, %v3594
      %v3596 = vshll.u32 683565275, %v3593
      %v3597 = vshrl.u32 2475754826, %v3594
      %v3598 = vor.u32 %v3596, %v3597
      %v3599 = vshll.u32 2475754826, %v3593
      %v3600 = vshrl.u32 2131351028, %v3594
      %v3601 = vor.u32 %v3599, %v3600
      %v3602 = vshll.u32 2131351028, %v3593
      %v3603 = vshrl.u32 2102212464, %v3594
      %v3604 = vor.u32 %v3602, %v3603
      %v3605 = vshll.u32 2102212464, %v3593
      %v3606 = vshrl.u32 920167782, %v3594
      %v3607 = vor.u32 %v3605, %v3606
      %v3608 = vshll.u32 920167782, %v3593
      %v3609 = vshrl.u32 1326507024, %v3594
      %v3610 = vor.u32 %v3608, %v3609
      %vm3611 = vcmp.lt.s32.totalorder %v3592, 1
      %vm3612 = vcmp.lt.s32.totalorder %v3592, 2
      %vm3613 = vcmp.lt.s32.totalorder %v3592, 3
      %vm3614 = vcmp.lt.s32.totalorder %v3592, 4
      %v3615 = vsel %vm3611, %v3595, %v3598
      %v3616 = vsel %vm3614, %v3604, 2102212464
      %v3617 = vsel %vm3613, %v3601, %v3616
      %v3618 = vsel %vm3612, %v3615, %v3617
      %v3619 = vsel %vm3611, %v3598, %v3601
      %v3620 = vsel %vm3614, %v3607, 920167782
      %v3621 = vsel %vm3613, %v3604, %v3620
      %v3622 = vsel %vm3612, %v3619, %v3621
      %v3623 = vsel %vm3611, %v3601, %v3604
      %v3624 = vsel %vm3614, %v3610, 1326507024
      %v3625 = vsel %vm3613, %v3607, %v3624
      %v3626 = vsel %vm3612, %v3623, %v3625
      %v3627 = vshll.u32 %v3587, 8
      %v3628 = vmul.u32.u64.compose %v3627, %v3626
      %v3629 = vextract.low.u32 %v3628
      %v3630 = vextract.high.u32 %v3628
      %v3631 = vmul.u32.u64.compose %v3627, %v3622
      %v3632 = vextract.low.u32 %v3631
      %v3633 = vextract.high.u32 %v3631
      %v3634 = vmul.u32 %v3627, %v3618
      %v3635 = vadd.s32 %v3630, %v3632
      %vm3636 = vc.u32 %v3630, %v3632
      %v3637 = vadd.s32 %v3633, 1
      %v3638 = vsel %vm3636, %v3637, %v3633
      %v3639 = vadd.s32 %v3634, %v3638
      %v3640 = vadd.s32 %v3639, 536870912
      %v3641 = vshrl.u32 %v3640, 30
      %v3642 = vshll.u32 %v3641, 30
      %v3643 = vsub.s32 %v3639, %v3642
      %vm3644 = vcmp.lt.s32.totalorder %v3643, 0
      %v3645 = vsub.s32 0, %v3643
      %v3646 = vsel %vm3644, %v3645, %v3643
      %v3647 = vclz %v3646
      %v3648 = vsub.s32 %v3647, 2
      %vm3649 = vcmp.gt.s32.totalorder 0, %v3648
      %v3650 = vsel %vm3649, 0, %v3648
      %v3651 = vsub.s32 32, %v3650
      %v3652 = vshll.u32 %v3643, %v3650
      %v3653 = vshrl.u32 %v3635, %v3651
      %v3654 = vor.u32 %v3652, %v3653
      %v3655 = vsub.s32 4294967266, %v3650
      %v3656 = vadd.s32 %v3655, 127
      %v3657 = vshll.u32 %v3656, 23
      %v3658 = vor.u32 4788187, %v3657
      %v3659 = vand.u32 2147483647, %v3658
      %v3661 = vcvt.s32.f32 %v3654
      %v3662 = vmul.f32 %v3661, %v3659
      %v3663 = vxor.u32 %v3662, 2147483648
      %v3664 = vsel %vm3581, %v3663, %v3662
      %v3665 = vsub.s32 4, %v3641
      %v3666 = vsel %vm3581, %v3665, %v3641
      %v3667 = vsel %vm3580, %v573, %v3664
      %v3668 = vsel %vm3580, 0, %v3666
      %v3669 = vcosq.f32.pop %v3667
      %v3670 = vsinq.f32.pop %v3667
      %vm3671 = vweird.f32 %v573
      %v3672 = vand.u32 %v3668, 3
      %vm3673 = vcmp.lt.s32.totalorder %v3672, 2
      %vm3674 = vcmp.eq.s32.totalorder %v3672, 0
      %v3675 = vxor.u32 %v3670, 2147483648
      %v3676 = vsel %vm3674, %v3669, %v3675
      %vm3677 = vcmp.eq.s32.totalorder %v3672, 2
      %v3678 = vxor.u32 %v3669, 2147483648
      %v3679 = vsel %vm3677, %v3678, %v3670
      %v3680 = vsel %vm3673, %v3676, %v3679
      %v3681 = vsel %vm3671, nan, %v3680
      %v3682 = vand.u32 2147483647, %v574
      %vm3683 = vcmp.le.f32.partialorder %v3682, 0.7853982
      %vm3684 = vcmp.lt.s32.totalorder %v574, 0
      %v3685 = vand.u32 %v574, 2139095040
      %v3686 = vshrl.u32 %v3685, 23
      %v3687 = vsub.s32 %v3686, 127
      %v3688 = vand.u32 2147483647, %v574
      %v3689 = vand.u32 %v3688, 8388607
      %v3690 = vor.u32 %v3689, 8388608
      %v3691 = vsub.s32 0, %v3690
      %v3692 = vadd.s32 %v3687, 1
      %vm3693 = vcmp.gt.s32.totalorder %v3692, 0
      %v3694 = vsel %vm3693, %v3692, 0
      %v3695 = vshrl.u32 %v3694, 5
      %v3696 = vand.u32 %v3694, 31
      %v3697 = vsub.s32 32, %v3696
      %v3698 = vshrl.u32 683565275, %v3697
      %v3699 = vshll.u32 683565275, %v3696
      %v3700 = vshrl.u32 2475754826, %v3697
      %v3701 = vor.u32 %v3699, %v3700
      %v3702 = vshll.u32 2475754826, %v3696
      %v3703 = vshrl.u32 2131351028, %v3697
      %v3704 = vor.u32 %v3702, %v3703
      %v3705 = vshll.u32 2131351028, %v3696
      %v3706 = vshrl.u32 2102212464, %v3697
      %v3707 = vor.u32 %v3705, %v3706
      %v3708 = vshll.u32 2102212464, %v3696
      %v3709 = vshrl.u32 920167782, %v3697
      %v3710 = vor.u32 %v3708, %v3709
      %v3711 = vshll.u32 920167782, %v3696
      %v3712 = vshrl.u32 1326507024, %v3697
      %v3713 = vor.u32 %v3711, %v3712
      %vm3714 = vcmp.lt.s32.totalorder %v3695, 1
      %vm3715 = vcmp.lt.s32.totalorder %v3695, 2
      %vm3716 = vcmp.lt.s32.totalorder %v3695, 3
      %vm3717 = vcmp.lt.s32.totalorder %v3695, 4
      %v3718 = vsel %vm3714, %v3698, %v3701
      %v3719 = vsel %vm3717, %v3707, 2102212464
      %v3720 = vsel %vm3716, %v3704, %v3719
      %v3721 = vsel %vm3715, %v3718, %v3720
      %v3722 = vsel %vm3714, %v3701, %v3704
      %v3723 = vsel %vm3717, %v3710, 920167782
      %v3724 = vsel %vm3716, %v3707, %v3723
      %v3725 = vsel %vm3715, %v3722, %v3724
      %v3726 = vsel %vm3714, %v3704, %v3707
      %v3727 = vsel %vm3717, %v3713, 1326507024
      %v3728 = vsel %vm3716, %v3710, %v3727
      %v3729 = vsel %vm3715, %v3726, %v3728
      %v3730 = vshll.u32 %v3690, 8
      %v3731 = vmul.u32.u64.compose %v3730, %v3729
      %v3732 = vextract.low.u32 %v3731
      %v3733 = vextract.high.u32 %v3731
      %v3734 = vmul.u32.u64.compose %v3730, %v3725
      %v3735 = vextract.low.u32 %v3734
      %v3736 = vextract.high.u32 %v3734
      %v3737 = vmul.u32 %v3730, %v3721
      %v3738 = vadd.s32 %v3733, %v3735
      %vm3739 = vc.u32 %v3733, %v3735
      %v3740 = vadd.s32 %v3736, 1
      %v3741 = vsel %vm3739, %v3740, %v3736
      %v3742 = vadd.s32 %v3737, %v3741
      %v3743 = vadd.s32 %v3742, 536870912
      %v3744 = vshrl.u32 %v3743, 30
      %v3745 = vshll.u32 %v3744, 30
      %v3746 = vsub.s32 %v3742, %v3745
      %vm3747 = vcmp.lt.s32.totalorder %v3746, 0
      %v3748 = vsub.s32 0, %v3746
      %v3749 = vsel %vm3747, %v3748, %v3746
      %v3750 = vclz %v3749
      %v3751 = vsub.s32 %v3750, 2
      %vm3752 = vcmp.gt.s32.totalorder 0, %v3751
      %v3753 = vsel %vm3752, 0, %v3751
      %v3754 = vsub.s32 32, %v3753
      %v3755 = vshll.u32 %v3746, %v3753
      %v3756 = vshrl.u32 %v3738, %v3754
      %v3757 = vor.u32 %v3755, %v3756
      %v3758 = vsub.s32 4294967266, %v3753
      %v3759 = vadd.s32 %v3758, 127
      %v3760 = vshll.u32 %v3759, 23
      %v3761 = vor.u32 4788187, %v3760
      %v3762 = vand.u32 2147483647, %v3761
      %v3764 = vcvt.s32.f32 %v3757
      %v3765 = vmul.f32 %v3764, %v3762
      %v3766 = vxor.u32 %v3765, 2147483648
      %v3767 = vsel %vm3684, %v3766, %v3765
      %v3768 = vsub.s32 4, %v3744
      %v3769 = vsel %vm3684, %v3768, %v3744
      %v3770 = vsel %vm3683, %v574, %v3767
      %v3771 = vsel %vm3683, 0, %v3769
      %v3772 = vcosq.f32.pop %v3770
      %v3773 = vsinq.f32.pop %v3770
      %vm3774 = vweird.f32 %v574
      %v3775 = vand.u32 %v3771, 3
      %vm3776 = vcmp.lt.s32.totalorder %v3775, 2
      %vm3777 = vcmp.eq.s32.totalorder %v3775, 0
      %v3778 = vxor.u32 %v3773, 2147483648
      %v3779 = vsel %vm3777, %v3772, %v3778
      %vm3780 = vcmp.eq.s32.totalorder %v3775, 2
      %v3781 = vxor.u32 %v3772, 2147483648
      %v3782 = vsel %vm3780, %v3781, %v3773
      %v3783 = vsel %vm3776, %v3779, %v3782
      %v3784 = vsel %vm3774, nan, %v3783
      %v3785 = vand.u32 2147483647, %v575
      %vm3786 = vcmp.le.f32.partialorder %v3785, 0.7853982
      %vm3787 = vcmp.lt.s32.totalorder %v575, 0
      %v3788 = vand.u32 %v575, 2139095040
      %v3789 = vshrl.u32 %v3788, 23
      %v3790 = vsub.s32 %v3789, 127
      %v3791 = vand.u32 2147483647, %v575
      %v3792 = vand.u32 %v3791, 8388607
      %v3793 = vor.u32 %v3792, 8388608
      %v3794 = vsub.s32 0, %v3793
      %v3795 = vadd.s32 %v3790, 1
      %vm3796 = vcmp.gt.s32.totalorder %v3795, 0
      %v3797 = vsel %vm3796, %v3795, 0
      %v3798 = vshrl.u32 %v3797, 5
      %v3799 = vand.u32 %v3797, 31
      %v3800 = vsub.s32 32, %v3799
      %v3801 = vshrl.u32 683565275, %v3800
      %v3802 = vshll.u32 683565275, %v3799
      %v3803 = vshrl.u32 2475754826, %v3800
      %v3804 = vor.u32 %v3802, %v3803
      %v3805 = vshll.u32 2475754826, %v3799
      %v3806 = vshrl.u32 2131351028, %v3800
      %v3807 = vor.u32 %v3805, %v3806
      %v3808 = vshll.u32 2131351028, %v3799
      %v3809 = vshrl.u32 2102212464, %v3800
      %v3810 = vor.u32 %v3808, %v3809
      %v3811 = vshll.u32 2102212464, %v3799
      %v3812 = vshrl.u32 920167782, %v3800
      %v3813 = vor.u32 %v3811, %v3812
      %v3814 = vshll.u32 920167782, %v3799
      %v3815 = vshrl.u32 1326507024, %v3800
      %v3816 = vor.u32 %v3814, %v3815
      %vm3817 = vcmp.lt.s32.totalorder %v3798, 1
      %vm3818 = vcmp.lt.s32.totalorder %v3798, 2
      %vm3819 = vcmp.lt.s32.totalorder %v3798, 3
      %vm3820 = vcmp.lt.s32.totalorder %v3798, 4
      %v3821 = vsel %vm3817, %v3801, %v3804
      %v3822 = vsel %vm3820, %v3810, 2102212464
      %v3823 = vsel %vm3819, %v3807, %v3822
      %v3824 = vsel %vm3818, %v3821, %v3823
      %v3825 = vsel %vm3817, %v3804, %v3807
      %v3826 = vsel %vm3820, %v3813, 920167782
      %v3827 = vsel %vm3819, %v3810, %v3826
      %v3828 = vsel %vm3818, %v3825, %v3827
      %v3829 = vsel %vm3817, %v3807, %v3810
      %v3830 = vsel %vm3820, %v3816, 1326507024
      %v3831 = vsel %vm3819, %v3813, %v3830
      %v3832 = vsel %vm3818, %v3829, %v3831
      %v3833 = vshll.u32 %v3793, 8
      %v3834 = vmul.u32.u64.compose %v3833, %v3832
      %v3835 = vextract.low.u32 %v3834
      %v3836 = vextract.high.u32 %v3834
      %v3837 = vmul.u32.u64.compose %v3833, %v3828
      %v3838 = vextract.low.u32 %v3837
      %v3839 = vextract.high.u32 %v3837
      %v3840 = vmul.u32 %v3833, %v3824
      %v3841 = vadd.s32 %v3836, %v3838
      %vm3842 = vc.u32 %v3836, %v3838
      %v3843 = vadd.s32 %v3839, 1
      %v3844 = vsel %vm3842, %v3843, %v3839
      %v3845 = vadd.s32 %v3840, %v3844
      %v3846 = vadd.s32 %v3845, 536870912
      %v3847 = vshrl.u32 %v3846, 30
      %v3848 = vshll.u32 %v3847, 30
      %v3849 = vsub.s32 %v3845, %v3848
      %vm3850 = vcmp.lt.s32.totalorder %v3849, 0
      %v3851 = vsub.s32 0, %v3849
      %v3852 = vsel %vm3850, %v3851, %v3849
      %v3853 = vclz %v3852
      %v3854 = vsub.s32 %v3853, 2
      %vm3855 = vcmp.gt.s32.totalorder 0, %v3854
      %v3856 = vsel %vm3855, 0, %v3854
      %v3857 = vsub.s32 32, %v3856
      %v3858 = vshll.u32 %v3849, %v3856
      %v3859 = vshrl.u32 %v3841, %v3857
      %v3860 = vor.u32 %v3858, %v3859
      %v3861 = vsub.s32 4294967266, %v3856
      %v3862 = vadd.s32 %v3861, 127
      %v3863 = vshll.u32 %v3862, 23
      %v3864 = vor.u32 4788187, %v3863
      %v3865 = vand.u32 2147483647, %v3864
      %v3867 = vcvt.s32.f32 %v3860
      %v3868 = vmul.f32 %v3867, %v3865
      %v3869 = vxor.u32 %v3868, 2147483648
      %v3870 = vsel %vm3787, %v3869, %v3868
      %v3871 = vsub.s32 4, %v3847
      %v3872 = vsel %vm3787, %v3871, %v3847
      %v3873 = vsel %vm3786, %v575, %v3870
      %v3874 = vsel %vm3786, 0, %v3872
      %v3875 = vcosq.f32.pop %v3873
      %v3876 = vsinq.f32.pop %v3873
      %vm3877 = vweird.f32 %v575
      %v3878 = vand.u32 %v3874, 3
      %vm3879 = vcmp.lt.s32.totalorder %v3878, 2
      %vm3880 = vcmp.eq.s32.totalorder %v3878, 0
      %v3881 = vxor.u32 %v3876, 2147483648
      %v3882 = vsel %vm3880, %v3875, %v3881
      %vm3883 = vcmp.eq.s32.totalorder %v3878, 2
      %v3884 = vxor.u32 %v3875, 2147483648
      %v3885 = vsel %vm3883, %v3884, %v3876
      %v3886 = vsel %vm3879, %v3882, %v3885
      %v3887 = vsel %vm3877, nan, %v3886
      %v3888 = vsel %vm441, 1, 0
      %vm3889 = vcmp.eq.s32.totalorder %v3888, 1
      %v3890 = vsel %vm3889, %v679, %v2342
      %v3891 = vsel %vm3889, %v783, %v2445
      %v3892 = vsel %vm3889, %v887, %v2548
      %v3893 = vsel %vm3889, %v991, %v2651
      %v3894 = vsel %vm3889, %v1095, %v2754
      %v3895 = vsel %vm3889, %v1199, %v2857
      %v3896 = vsel %vm3889, %v1303, %v2960
      %v3897 = vsel %vm3889, %v1407, %v3063
      %v3898 = vsel %vm3889, %v1511, %v3166
      %v3899 = vsel %vm3889, %v1615, %v3269
      %v3900 = vsel %vm3889, %v1719, %v3372
      %v3901 = vsel %vm3889, %v1823, %v3475
      %v3902 = vsel %vm3889, %v1927, %v3578
      %v3903 = vsel %vm3889, %v2031, %v3681
      %v3904 = vsel %vm3889, %v2135, %v3784
      %v3905 = vsel %vm3889, %v2239, %v3887
      %v3906 = vld [vmem:[%s2] sm:$0xff]
      %v3907 = vld [vmem:[%s2 + $0x8] sm:$0xff]
      %v3908 = vld [vmem:[%s2 + $0x10] sm:$0xff]
      %v3909 = vld [vmem:[%s2 + $0x18] sm:$0xff]
      %v3910 = vld [vmem:[%s3] sm:$0x1]
      %v3912 = vlaneseq
      %v3913 = vshrl.u32 %v3912, 7
      %v3914 = vsub.s32 0, %v3913
      %v3915 = vrot.slane %v3910, %v3914
      %vm3917 = vcmask 261120
      %v3919 = vsel %vm3917, %v3890, 0
      %v3922 = vsel %vm3917, %v3891, 0
      %v3925 = vsel %vm3917, %v3892, 0
      %v3928 = vsel %vm3917, %v3893, 0
      %v3931 = vsel %vm3917, %v3894, 0
      %v3934 = vsel %vm3917, %v3895, 0
      %v3937 = vsel %vm3917, %v3896, 0
      %v3940 = vsel %vm3917, %v3897, 0
      %v3943 = vsel %vm3917, %v3898, 0
      %v3946 = vsel %vm3917, %v3899, 0
      %v3949 = vsel %vm3917, %v3900, 0
      %v3952 = vsel %vm3917, %v3901, 0
      %v3955 = vsel %vm3917, %v3902, 0
      %v3958 = vsel %vm3917, %v3903, 0
      %v3961 = vsel %vm3917, %v3904, 0
      %v3964 = vsel %vm3917, %v3905, 0
      %3966 = vmatprep.subr.mxu0 0.0
      %3967 = vmatpush1.msra.mxu0 %v3906
      %3968 = vmatprep.subr.mxu0 0.0
      %3969 = vmatpush1.msra.mxu0 %v3907
      %3970 = vmatprep.subr.mxu0 0.0
      %3971 = vmatpush1.msra.mxu0 %v3908
      %3972 = vmatprep.subr.mxu0 0.0
      %3973 = vmatpush1.msra.mxu0 %v3909
      %3974 = vmatprep.subr.mxu0 0.0
      %3975 = vmatpush1.msra.mxu0 0.0
      %3976 = vmatprep.subr.mxu0 0.0
      %3977 = vmatpush1.msra.mxu0 0.0
      %3978 = vmatprep.subr.mxu0 0.0
      %3979 = vmatpush1.msra.mxu0 0.0
      %3980 = vmatprep.subr.mxu0 0.0
      %3981 = vmatpush1.msra.mxu0 0.0
      %3982 = vmatprep.subr.mxu0 0.0
      %3983 = vmatpush1.msra.mxu0 0.0
      %3984 = vmatprep.subr.mxu0 0.0
      %3985 = vmatpush1.msra.mxu0 0.0
      %3986 = vmatprep.subr.mxu0 0.0
      %3987 = vmatpush1.msra.mxu0 0.0
      %3988 = vmatprep.subr.mxu0 0.0
      %3989 = vmatpush1.msra.mxu0 0.0
      %3990 = vmatprep.subr.mxu0 0.0
      %3991 = vmatpush1.msra.mxu0 0.0
      %3992 = vmatprep.subr.mxu0 0.0
      %3993 = vmatpush1.msra.mxu0 0.0
      %3994 = vmatprep.subr.mxu0 0.0
      %3995 = vmatpush1.msra.mxu0 0.0
      %3996 = vmatprep.subr.mxu0 0.0
      %3997 = vmatpush1.msra.mxu0 0.0
      %3998 = vmatprep.subr.mxu0 0.0
      %3999 = vmatpush1.msra.mxu0 0.0
      %4000 = vmatprep.subr.mxu0 0.0
      %4001 = vmatpush1.msra.mxu0 0.0
      %4002 = vmatprep.subr.mxu0 0.0
      %4003 = vmatpush1.msra.mxu0 0.0
      %4004 = vmatprep.subr.mxu0 0.0
      %4005 = vmatpush1.msra.mxu0 0.0
      %4006 = vmatprep.subr.mxu0 0.0
      %4007 = vmatpush1.msra.mxu0 0.0
      %4008 = vmatprep.subr.mxu0 0.0
      %4009 = vmatpush1.msra.mxu0 0.0
      %4010 = vmatprep.subr.mxu0 0.0
      %4011 = vmatpush1.msra.mxu0 0.0
      %4012 = vmatprep.subr.mxu0 0.0
      %4013 = vmatpush1.msra.mxu0 0.0
      %4014 = vmatprep.subr.mxu0 0.0
      %4015 = vmatpush1.msra.mxu0 0.0
      %4016 = vmatprep.subr.mxu0 0.0
      %4017 = vmatpush1.msra.mxu0 0.0
      %4018 = vmatprep.subr.mxu0 0.0
      %4019 = vmatpush1.msra.mxu0 0.0
      %4020 = vmatprep.subr.mxu0 0.0
      %4021 = vmatpush1.msra.mxu0 0.0
      %4022 = vmatprep.subr.mxu0 0.0
      %4023 = vmatpush1.msra.mxu0 0.0
      %4024 = vmatprep.subr.mxu0 0.0
      %4025 = vmatpush1.msra.mxu0 0.0
      %4026 = vmatprep.subr.mxu0 0.0
      %4027 = vmatpush1.msra.mxu0 0.0
      %4028 = vmatprep.subr.mxu0 0.0
      %4029 = vmatpush1.msra.mxu0 0.0
      %4030 = vmatprep.mubr.f32.mxu0 0.0
      %4031 = vmatmul.mubr.f32.gmra.mrb[0].mxu0 %v3919
      %v4032 = vpop.f32.mrb[0].mxu0
      %v4033 = vadd.f32 %v3915, %v4032
      %v4034 = vpop.f32.mrb[0].mxu0
      %4035 = vmatprep.mubr.f32.mxu0 0.0
      %4036 = vmatmul.mubr.f32.gmra.mrb[0].mxu0 %v3922
      %v4037 = vpop.f32.mrb[0].mxu0
      %v4038 = vadd.f32 %v3915, %v4037
      %v4039 = vpop.f32.mrb[0].mxu0
      %4040 = vmatprep.mubr.f32.mxu0 0.0
      %4041 = vmatmul.mubr.f32.gmra.mrb[0].mxu0 %v3925
      %v4042 = vpop.f32.mrb[0].mxu0
      %v4043 = vadd.f32 %v3915, %v4042
      %v4044 = vpop.f32.mrb[0].mxu0
      %4045 = vmatprep.mubr.f32.mxu0 0.0
      %4046 = vmatmul.mubr.f32.gmra.mrb[0].mxu0 %v3928
      %v4047 = vpop.f32.mrb[0].mxu0
      %v4048 = vadd.f32 %v3915, %v4047
      %v4049 = vpop.f32.mrb[0].mxu0
      %4050 = vmatprep.mubr.f32.mxu0 0.0
      %4051 = vmatmul.mubr.f32.gmra.mrb[0].mxu0 %v3931
      %v4052 = vpop.f32.mrb[0].mxu0
      %v4053 = vadd.f32 %v3915, %v4052
      %v4054 = vpop.f32.mrb[0].mxu0
      %4055 = vmatprep.mubr.f32.mxu0 0.0
      %4056 = vmatmul.mubr.f32.gmra.mrb[0].mxu0 %v3934
      %v4057 = vpop.f32.mrb[0].mxu0
      %v4058 = vadd.f32 %v3915, %v4057
      %v4059 = vpop.f32.mrb[0].mxu0
      %4060 = vmatprep.mubr.f32.mxu0 0.0
      %4061 = vmatmul.mubr.f32.gmra.mrb[0].mxu0 %v3937
      %v4062 = vpop.f32.mrb[0].mxu0
      %v4063 = vadd.f32 %v3915, %v4062
      %v4064 = vpop.f32.mrb[0].mxu0
      %4065 = vmatprep.mubr.f32.mxu0 0.0
      %4066 = vmatmul.mubr.f32.gmra.mrb[0].mxu0 %v3940
      %v4067 = vpop.f32.mrb[0].mxu0
      %v4068 = vadd.f32 %v3915, %v4067
      %v4069 = vpop.f32.mrb[0].mxu0
      %4070 = vmatprep.mubr.f32.mxu0 0.0
      %4071 = vmatmul.mubr.f32.gmra.mrb[0].mxu0 %v3943
      %v4072 = vpop.f32.mrb[0].mxu0
      %v4073 = vadd.f32 %v3915, %v4072
      %v4074 = vpop.f32.mrb[0].mxu0
      %4075 = vmatprep.mubr.f32.mxu0 0.0
      %4076 = vmatmul.mubr.f32.gmra.mrb[0].mxu0 %v3946
      %v4077 = vpop.f32.mrb[0].mxu0
      %v4078 = vadd.f32 %v3915, %v4077
      %v4079 = vpop.f32.mrb[0].mxu0
      %4080 = vmatprep.mubr.f32.mxu0 0.0
      %4081 = vmatmul.mubr.f32.gmra.mrb[0].mxu0 %v3949
      %v4082 = vpop.f32.mrb[0].mxu0
      %v4083 = vadd.f32 %v3915, %v4082
      %v4084 = vpop.f32.mrb[0].mxu0
      %4085 = vmatprep.mubr.f32.mxu0 0.0
      %4086 = vmatmul.mubr.f32.gmra.mrb[0].mxu0 %v3952
      %v4087 = vpop.f32.mrb[0].mxu0
      %v4088 = vadd.f32 %v3915, %v4087
      %v4089 = vpop.f32.mrb[0].mxu0
      %4090 = vmatprep.mubr.f32.mxu0 0.0
      %4091 = vmatmul.mubr.f32.gmra.mrb[0].mxu0 %v3955
      %v4092 = vpop.f32.mrb[0].mxu0
      %v4093 = vadd.f32 %v3915, %v4092
      %v4094 = vpop.f32.mrb[0].mxu0
      %4095 = vmatprep.mubr.f32.mxu0 0.0
      %4096 = vmatmul.mubr.f32.gmra.mrb[0].mxu0 %v3958
      %v4097 = vpop.f32.mrb[0].mxu0
      %v4098 = vadd.f32 %v3915, %v4097
      %v4099 = vpop.f32.mrb[0].mxu0
      %4100 = vmatprep.mubr.f32.mxu0 0.0
      %4101 = vmatmul.mubr.f32.gmra.mrb[0].mxu0 %v3961
      %v4102 = vpop.f32.mrb[0].mxu0
      %v4103 = vadd.f32 %v3915, %v4102
      %v4104 = vpop.f32.mrb[0].mxu0
      %4105 = vmatprep.mubr.f32.mxu0 0.0
      %4106 = vmatmul.mubr.f32.gmra.mrb[0].mxu0 %v3964
      %v4107 = vpop.f32.mrb[0].mxu0
      %v4108 = vadd.f32 %v3915, %v4107
      %v4109 = vpop.f32.mrb[0].mxu0
      %4110 = vdwg.mxu0
      %v4111 = vmul.f32 %v4033, 0.5
      %v4112 = vmul.f32 %v4038, 0.5
      %v4113 = vmul.f32 %v4043, 0.5
      %v4114 = vmul.f32 %v4048, 0.5
      %v4115 = vmul.f32 %v4053, 0.5
      %v4116 = vmul.f32 %v4058, 0.5
      %v4117 = vmul.f32 %v4063, 0.5
      %v4118 = vmul.f32 %v4068, 0.5
      %v4119 = vmul.f32 %v4073, 0.5
      %v4120 = vmul.f32 %v4078, 0.5
      %v4121 = vmul.f32 %v4083, 0.5
      %v4122 = vmul.f32 %v4088, 0.5
      %v4123 = vmul.f32 %v4093, 0.5
      %v4124 = vmul.f32 %v4098, 0.5
      %v4125 = vmul.f32 %v4103, 0.5
      %v4126 = vmul.f32 %v4108, 0.5
      %v4127 = vrcp.pop 1.4142135
      %v4128 = vmul.f32 %v4033, %v4127
      %v4129 = vmul.f32 %v4038, %v4127
      %v4130 = vmul.f32 %v4043, %v4127
      %v4131 = vmul.f32 %v4048, %v4127
      %v4132 = vmul.f32 %v4053, %v4127
      %v4133 = vmul.f32 %v4058, %v4127
      %v4134 = vmul.f32 %v4063, %v4127
      %v4135 = vmul.f32 %v4068, %v4127
      %v4136 = vmul.f32 %v4073, %v4127
      %v4137 = vmul.f32 %v4078, %v4127
      %v4138 = vmul.f32 %v4083, %v4127
      %v4139 = vmul.f32 %v4088, %v4127
      %v4140 = vmul.f32 %v4093, %v4127
      %v4141 = vmul.f32 %v4098, %v4127
      %v4142 = vmul.f32 %v4103, %v4127
      %v4143 = vmul.f32 %v4108, %v4127
      %v4144 = verf.f32.pop %v4128
      %v4145 = verf.f32.pop %v4129
      %v4146 = verf.f32.pop %v4130
      %v4147 = verf.f32.pop %v4131
      %v4148 = verf.f32.pop %v4132
      %v4149 = verf.f32.pop %v4133
      %v4150 = verf.f32.pop %v4134
      %v4151 = verf.f32.pop %v4135
      %v4152 = verf.f32.pop %v4136
      %v4153 = verf.f32.pop %v4137
      %v4154 = verf.f32.pop %v4138
      %v4155 = verf.f32.pop %v4139
      %v4156 = verf.f32.pop %v4140
      %v4157 = verf.f32.pop %v4141
      %v4158 = verf.f32.pop %v4142
      %v4159 = verf.f32.pop %v4143
      %v4160 = vadd.f32 %v4144, 1.0
      %v4161 = vadd.f32 %v4145, 1.0
      %v4162 = vadd.f32 %v4146, 1.0
      %v4163 = vadd.f32 %v4147, 1.0
      %v4164 = vadd.f32 %v4148, 1.0
      %v4165 = vadd.f32 %v4149, 1.0
      %v4166 = vadd.f32 %v4150, 1.0
      %v4167 = vadd.f32 %v4151, 1.0
      %v4168 = vadd.f32 %v4152, 1.0
      %v4169 = vadd.f32 %v4153, 1.0
      %v4170 = vadd.f32 %v4154, 1.0
      %v4171 = vadd.f32 %v4155, 1.0
      %v4172 = vadd.f32 %v4156, 1.0
      %v4173 = vadd.f32 %v4157, 1.0
      %v4174 = vadd.f32 %v4158, 1.0
      %v4175 = vadd.f32 %v4159, 1.0
      %v4176 = vmul.f32 %v4111, %v4160
      %v4177 = vmul.f32 %v4112, %v4161
      %v4178 = vmul.f32 %v4113, %v4162
      %v4179 = vmul.f32 %v4114, %v4163
      %v4180 = vmul.f32 %v4115, %v4164
      %v4181 = vmul.f32 %v4116, %v4165
      %v4182 = vmul.f32 %v4117, %v4166
      %v4183 = vmul.f32 %v4118, %v4167
      %v4184 = vmul.f32 %v4119, %v4168
      %v4185 = vmul.f32 %v4120, %v4169
      %v4186 = vmul.f32 %v4121, %v4170
      %v4187 = vmul.f32 %v4122, %v4171
      %v4188 = vmul.f32 %v4123, %v4172
      %v4189 = vmul.f32 %v4124, %v4173
      %v4190 = vmul.f32 %v4125, %v4174
      %v4191 = vmul.f32 %v4126, %v4175
      %v4192 = vld [vmem:[%s425] sm:$0xff]
      %v4193 = vld [vmem:[%s425 + $0x8] sm:$0xff]
      %v4194 = vld [vmem:[%s425 + $0x10] sm:$0xff]
      %v4195 = vld [vmem:[%s425 + $0x18] sm:$0xff]
      %v4196 = vld [vmem:[%s425 + $0x20] sm:$0xff]
      %v4197 = vld [vmem:[%s425 + $0x28] sm:$0xff]
      %v4198 = vld [vmem:[%s425 + $0x30] sm:$0xff]
      %v4199 = vld [vmem:[%s425 + $0x38] sm:$0xff]
      %v4200 = vld [vmem:[%s425 + $0x40] sm:$0xff]
      %v4201 = vld [vmem:[%s425 + $0x48] sm:$0xff]
      %v4202 = vld [vmem:[%s425 + $0x50] sm:$0xff]
      %v4203 = vld [vmem:[%s425 + $0x58] sm:$0xff]
      %v4204 = vld [vmem:[%s425 + $0x60] sm:$0xff]
      %v4205 = vld [vmem:[%s425 + $0x68] sm:$0xff]
      %v4206 = vld [vmem:[%s425 + $0x70] sm:$0xff]
      %v4207 = vld [vmem:[%s425 + $0x78] sm:$0xff]
      %v4208 = vld [vmem:[%s4] sm:$0xff]
      %v4209 = vld [vmem:[%s4 + $0x8] sm:$0xff]
      %v4210 = vld [vmem:[%s4 + $0x10] sm:$0xff]
      %v4211 = vld [vmem:[%s4 + $0x18] sm:$0xff]
      %v4212 = vld [vmem:[%s4 + $0x20] sm:$0xff]
      %v4213 = vld [vmem:[%s4 + $0x28] sm:$0xff]
      %v4214 = vld [vmem:[%s4 + $0x30] sm:$0xff]
      %v4215 = vld [vmem:[%s4 + $0x38] sm:$0xff]
      %v4216 = vld [vmem:[%s4 + $0x40] sm:$0xff]
      %v4217 = vld [vmem:[%s4 + $0x48] sm:$0xff]
      %v4218 = vld [vmem:[%s4 + $0x50] sm:$0xff]
      %v4219 = vld [vmem:[%s4 + $0x58] sm:$0xff]
      %v4220 = vld [vmem:[%s4 + $0x60] sm:$0xff]
      %v4221 = vld [vmem:[%s4 + $0x68] sm:$0xff]
      %v4222 = vld [vmem:[%s4 + $0x70] sm:$0xff]
      %v4223 = vld [vmem:[%s4 + $0x78] sm:$0xff]
      %v4224 = vld [vmem:[%s4 + $0x80] sm:$0xf]
      %v4225 = vld [vmem:[%s5] sm:$0x1]
      %v4227 = vlaneseq
      %v4228 = vshrl.u32 %v4227, 7
      %v4229 = vsub.s32 0, %v4228
      %v4230 = vrot.slane %v4225, %v4229
      %vm4232 = vcmask 31744
      %v4234 = vsel %vm4232, %v4192, 0
      %v4237 = vsel %vm4232, %v4193, 0
      %v4240 = vsel %vm4232, %v4194, 0
      %v4243 = vsel %vm4232, %v4195, 0
      %v4246 = vsel %vm4232, %v4196, 0
      %v4249 = vsel %vm4232, %v4197, 0
      %v4252 = vsel %vm4232, %v4198, 0
      %v4255 = vsel %vm4232, %v4199, 0
      %v4258 = vsel %vm4232, %v4200, 0
      %v4261 = vsel %vm4232, %v4201, 0
      %v4264 = vsel %vm4232, %v4202, 0
      %v4267 = vsel %vm4232, %v4203, 0
      %v4270 = vsel %vm4232, %v4204, 0
      %v4273 = vsel %vm4232, %v4205, 0
      %v4276 = vsel %vm4232, %v4206, 0
      %v4279 = vsel %vm4232, %v4207, 0
      %vm4281 = vcmask 1043456
      %v4283 = vsel %vm4281, %v4224, 0
      %4285 = vmatprep.subr.mxu0 0.0
      %4286 = vmatpush1.msra.mxu0 %v4208
      %4287 = vmatprep.subr.mxu0 0.0
      %4288 = vmatpush1.msra.mxu0 %v4209
      %4289 = vmatprep.subr.mxu0 0.0
      %4290 = vmatpush1.msra.mxu0 %v4210
      %4291 = vmatprep.subr.mxu0 0.0
      %4292 = vmatpush1.msra.mxu0 %v4211
      %4293 = vmatprep.subr.mxu0 0.0
      %4294 = vmatpush1.msra.mxu0 %v4212
      %4295 = vmatprep.subr.mxu0 0.0
      %4296 = vmatpush1.msra.mxu0 %v4213
      %4297 = vmatprep.subr.mxu0 0.0
      %4298 = vmatpush1.msra.mxu0 %v4214
      %4299 = vmatprep.subr.mxu0 0.0
      %4300 = vmatpush1.msra.mxu0 %v4215
      %4301 = vmatprep.subr.mxu0 0.0
      %4302 = vmatpush1.msra.mxu0 %v4216
      %4303 = vmatprep.subr.mxu0 0.0
      %4304 = vmatpush1.msra.mxu0 %v4217
      %4305 = vmatprep.subr.mxu0 0.0
      %4306 = vmatpush1.msra.mxu0 %v4218
      %4307 = vmatprep.subr.mxu0 0.0
      %4308 = vmatpush1.msra.mxu0 %v4219
      %4309 = vmatprep.subr.mxu0 0.0
      %4310 = vmatpush1.msra.mxu0 %v4220
      %4311 = vmatprep.subr.mxu0 0.0
      %4312 = vmatpush1.msra.mxu0 %v4221
      %4313 = vmatprep.subr.mxu0 0.0
      %4314 = vmatpush1.msra.mxu0 %v4222
      %4315 = vmatprep.subr.mxu0 0.0
      %4316 = vmatpush1.msra.mxu0 %v4223
      %4317 = vmatprep.subr.mxu0 0.0
      %4318 = vmatpush1.msra.mxu0 %v4283
      %4319 = vmatprep.subr.mxu0 0.0
      %4320 = vmatpush1.msra.mxu0 0.0
      %4321 = vmatprep.subr.mxu0 0.0
      %4322 = vmatpush1.msra.mxu0 0.0
      %4323 = vmatprep.subr.mxu0 0.0
      %4324 = vmatpush1.msra.mxu0 0.0
      %4325 = vmatprep.subr.mxu0 0.0
      %4326 = vmatpush1.msra.mxu0 0.0
      %4327 = vmatprep.subr.mxu0 0.0
      %4328 = vmatpush1.msra.mxu0 0.0
      %4329 = vmatprep.subr.mxu0 0.0
      %4330 = vmatpush1.msra.mxu0 0.0
      %4331 = vmatprep.subr.mxu0 0.0
      %4332 = vmatpush1.msra.mxu0 0.0
      %4333 = vmatprep.subr.mxu0 0.0
      %4334 = vmatpush1.msra.mxu0 0.0
      %4335 = vmatprep.subr.mxu0 0.0
      %4336 = vmatpush1.msra.mxu0 0.0
      %4337 = vmatprep.subr.mxu0 0.0
      %4338 = vmatpush1.msra.mxu0 0.0
      %4339 = vmatprep.subr.mxu0 0.0
      %4340 = vmatpush1.msra.mxu0 0.0
      %4341 = vmatprep.subr.mxu0 0.0
      %4342 = vmatpush1.msra.mxu0 0.0
      %4343 = vmatprep.subr.mxu0 0.0
      %4344 = vmatpush1.msra.mxu0 0.0
      %4345 = vmatprep.subr.mxu0 0.0
      %4346 = vmatpush1.msra.mxu0 0.0
      %4347 = vmatprep.subr.mxu0 0.0
      %4348 = vmatpush1.msra.mxu0 0.0
      %4349 = vmatprep.mubr.f32.mxu0 %v4234
      %4350 = vmatmul.mubr.f32.gmra.mrb[0].mxu0 %v4176
      %v4351 = vpop.f32.mrb[0].mxu0
      %v4352 = vadd.f32 %v4230, %v4351
      %v4353 = vpop.f32.mrb[0].mxu0
      %4354 = vmatprep.mubr.f32.mxu0 %v4237
      %4355 = vmatmul.mubr.f32.gmra.mrb[0].mxu0 %v4177
      %v4356 = vpop.f32.mrb[0].mxu0
      %v4357 = vadd.f32 %v4230, %v4356
      %v4358 = vpop.f32.mrb[0].mxu0
      %4359 = vmatprep.mubr.f32.mxu0 %v4240
      %4360 = vmatmul.mubr.f32.gmra.mrb[0].mxu0 %v4178
      %v4361 = vpop.f32.mrb[0].mxu0
      %v4362 = vadd.f32 %v4230, %v4361
      %v4363 = vpop.f32.mrb[0].mxu0
      %4364 = vmatprep.mubr.f32.mxu0 %v4243
      %4365 = vmatmul.mubr.f32.gmra.mrb[0].mxu0 %v4179
      %v4366 = vpop.f32.mrb[0].mxu0
      %v4367 = vadd.f32 %v4230, %v4366
      %v4368 = vpop.f32.mrb[0].mxu0
      %4369 = vmatprep.mubr.f32.mxu0 %v4246
      %4370 = vmatmul.mubr.f32.gmra.mrb[0].mxu0 %v4180
      %v4371 = vpop.f32.mrb[0].mxu0
      %v4372 = vadd.f32 %v4230, %v4371
      %v4373 = vpop.f32.mrb[0].mxu0
      %4374 = vmatprep.mubr.f32.mxu0 %v4249
      %4375 = vmatmul.mubr.f32.gmra.mrb[0].mxu0 %v4181
      %v4376 = vpop.f32.mrb[0].mxu0
      %v4377 = vadd.f32 %v4230, %v4376
      %v4378 = vpop.f32.mrb[0].mxu0
      %4379 = vmatprep.mubr.f32.mxu0 %v4252
      %4380 = vmatmul.mubr.f32.gmra.mrb[0].mxu0 %v4182
      %v4381 = vpop.f32.mrb[0].mxu0
      %v4382 = vadd.f32 %v4230, %v4381
      %v4383 = vpop.f32.mrb[0].mxu0
      %4384 = vmatprep.mubr.f32.mxu0 %v4255
      %4385 = vmatmul.mubr.f32.gmra.mrb[0].mxu0 %v4183
      %v4386 = vpop.f32.mrb[0].mxu0
      %v4387 = vadd.f32 %v4230, %v4386
      %v4388 = vpop.f32.mrb[0].mxu0
      %4389 = vmatprep.mubr.f32.mxu0 %v4258
      %4390 = vmatmul.mubr.f32.gmra.mrb[0].mxu0 %v4184
      %v4391 = vpop.f32.mrb[0].mxu0
      %v4392 = vadd.f32 %v4230, %v4391
      %v4393 = vpop.f32.mrb[0].mxu0
      %4394 = vmatprep.mubr.f32.mxu0 %v4261
      %4395 = vmatmul.mubr.f32.gmra.mrb[0].mxu0 %v4185
      %v4396 = vpop.f32.mrb[0].mxu0
      %v4397 = vadd.f32 %v4230, %v4396
      %v4398 = vpop.f32.mrb[0].mxu0
      %4399 = vmatprep.mubr.f32.mxu0 %v4264
      %4400 = vmatmul.mubr.f32.gmra.mrb[0].mxu0 %v4186
      %v4401 = vpop.f32.mrb[0].mxu0
      %v4402 = vadd.f32 %v4230, %v4401
      %v4403 = vpop.f32.mrb[0].mxu0
      %4404 = vmatprep.mubr.f32.mxu0 %v4267
      %4405 = vmatmul.mubr.f32.gmra.mrb[0].mxu0 %v4187
      %v4406 = vpop.f32.mrb[0].mxu0
      %v4407 = vadd.f32 %v4230, %v4406
      %v4408 = vpop.f32.mrb[0].mxu0
      %4409 = vmatprep.mubr.f32.mxu0 %v4270
      %4410 = vmatmul.mubr.f32.gmra.mrb[0].mxu0 %v4188
      %v4411 = vpop.f32.mrb[0].mxu0
      %v4412 = vadd.f32 %v4230, %v4411
      %v4413 = vpop.f32.mrb[0].mxu0
      %4414 = vmatprep.mubr.f32.mxu0 %v4273
      %4415 = vmatmul.mubr.f32.gmra.mrb[0].mxu0 %v4189
      %v4416 = vpop.f32.mrb[0].mxu0
      %v4417 = vadd.f32 %v4230, %v4416
      %v4418 = vpop.f32.mrb[0].mxu0
      %4419 = vmatprep.mubr.f32.mxu0 %v4276
      %4420 = vmatmul.mubr.f32.gmra.mrb[0].mxu0 %v4190
      %v4421 = vpop.f32.mrb[0].mxu0
      %v4422 = vadd.f32 %v4230, %v4421
      %v4423 = vpop.f32.mrb[0].mxu0
      %4424 = vmatprep.mubr.f32.mxu0 %v4279
      %4425 = vmatmul.mubr.f32.gmra.mrb[0].mxu0 %v4191
      %v4426 = vpop.f32.mrb[0].mxu0
      %v4427 = vadd.f32 %v4230, %v4426
      %v4428 = vpop.f32.mrb[0].mxu0
      %4429 = vdwg.mxu0
      %v4430 = vmul.f32 %v4352, 0.5
      %v4431 = vmul.f32 %v4357, 0.5
      %v4432 = vmul.f32 %v4362, 0.5
      %v4433 = vmul.f32 %v4367, 0.5
      %v4434 = vmul.f32 %v4372, 0.5
      %v4435 = vmul.f32 %v4377, 0.5
      %v4436 = vmul.f32 %v4382, 0.5
      %v4437 = vmul.f32 %v4387, 0.5
      %v4438 = vmul.f32 %v4392, 0.5
      %v4439 = vmul.f32 %v4397, 0.5
      %v4440 = vmul.f32 %v4402, 0.5
      %v4441 = vmul.f32 %v4407, 0.5
      %v4442 = vmul.f32 %v4412, 0.5
      %v4443 = vmul.f32 %v4417, 0.5
      %v4444 = vmul.f32 %v4422, 0.5
      %v4445 = vmul.f32 %v4427, 0.5
      %v4446 = vmul.f32 %v4352, %v4127
      %v4447 = vmul.f32 %v4357, %v4127
      %v4448 = vmul.f32 %v4362, %v4127
      %v4449 = vmul.f32 %v4367, %v4127
      %v4450 = vmul.f32 %v4372, %v4127
      %v4451 = vmul.f32 %v4377, %v4127
      %v4452 = vmul.f32 %v4382, %v4127
      %v4453 = vmul.f32 %v4387, %v4127
      %v4454 = vmul.f32 %v4392, %v4127
      %v4455 = vmul.f32 %v4397, %v4127
      %v4456 = vmul.f32 %v4402, %v4127
      %v4457 = vmul.f32 %v4407, %v4127
      %v4458 = vmul.f32 %v4412, %v4127
      %v4459 = vmul.f32 %v4417, %v4127
      %v4460 = vmul.f32 %v4422, %v4127
      %v4461 = vmul.f32 %v4427, %v4127
      %v4462 = verf.f32.pop %v4446
      %v4463 = verf.f32.pop %v4447
      %v4464 = verf.f32.pop %v4448
      %v4465 = verf.f32.pop %v4449
      %v4466 = verf.f32.pop %v4450
      %v4467 = verf.f32.pop %v4451
      %v4468 = verf.f32.pop %v4452
      %v4469 = verf.f32.pop %v4453
      %v4470 = verf.f32.pop %v4454
      %v4471 = verf.f32.pop %v4455
      %v4472 = verf.f32.pop %v4456
      %v4473 = verf.f32.pop %v4457
      %v4474 = verf.f32.pop %v4458
      %v4475 = verf.f32.pop %v4459
      %v4476 = verf.f32.pop %v4460
      %v4477 = verf.f32.pop %v4461
      %v4478 = vadd.f32 %v4462, 1.0
      %v4479 = vadd.f32 %v4463, 1.0
      %v4480 = vadd.f32 %v4464, 1.0
      %v4481 = vadd.f32 %v4465, 1.0
      %v4482 = vadd.f32 %v4466, 1.0
      %v4483 = vadd.f32 %v4467, 1.0
      %v4484 = vadd.f32 %v4468, 1.0
      %v4485 = vadd.f32 %v4469, 1.0
      %v4486 = vadd.f32 %v4470, 1.0
      %v4487 = vadd.f32 %v4471, 1.0
      %v4488 = vadd.f32 %v4472, 1.0
      %v4489 = vadd.f32 %v4473, 1.0
      %v4490 = vadd.f32 %v4474, 1.0
      %v4491 = vadd.f32 %v4475, 1.0
      %v4492 = vadd.f32 %v4476, 1.0
      %v4493 = vadd.f32 %v4477, 1.0
      %v4494 = vmul.f32 %v4430, %v4478
      %v4495 = vmul.f32 %v4431, %v4479
      %v4496 = vmul.f32 %v4432, %v4480
      %v4497 = vmul.f32 %v4433, %v4481
      %v4498 = vmul.f32 %v4434, %v4482
      %v4499 = vmul.f32 %v4435, %v4483
      %v4500 = vmul.f32 %v4436, %v4484
      %v4501 = vmul.f32 %v4437, %v4485
      %v4502 = vmul.f32 %v4438, %v4486
      %v4503 = vmul.f32 %v4439, %v4487
      %v4504 = vmul.f32 %v4440, %v4488
      %v4505 = vmul.f32 %v4441, %v4489
      %v4506 = vmul.f32 %v4442, %v4490
      %v4507 = vmul.f32 %v4443, %v4491
      %v4508 = vmul.f32 %v4444, %v4492
      %v4509 = vmul.f32 %v4445, %v4493
      %v4510 = vld [vmem:[%s6] sm:$0xff]
      %v4511 = vld [vmem:[%s6 + $0x8] sm:$0xff]
      %v4512 = vld [vmem:[%s6 + $0x10] sm:$0xff]
      %v4513 = vld [vmem:[%s6 + $0x18] sm:$0xff]
      %v4514 = vld [vmem:[%s6 + $0x20] sm:$0xff]
      %v4515 = vld [vmem:[%s6 + $0x28] sm:$0xff]
      %v4516 = vld [vmem:[%s6 + $0x30] sm:$0xff]
      %v4517 = vld [vmem:[%s6 + $0x38] sm:$0xff]
      %v4518 = vld [vmem:[%s6 + $0x40] sm:$0xff]
      %v4519 = vld [vmem:[%s6 + $0x48] sm:$0xff]
      %v4520 = vld [vmem:[%s6 + $0x50] sm:$0xff]
      %v4521 = vld [vmem:[%s6 + $0x58] sm:$0xff]
      %v4522 = vld [vmem:[%s6 + $0x60] sm:$0xff]
      %v4523 = vld [vmem:[%s6 + $0x68] sm:$0xff]
      %v4524 = vld [vmem:[%s6 + $0x70] sm:$0xff]
      %v4525 = vld [vmem:[%s6 + $0x78] sm:$0xff]
      %v4526 = vld [vmem:[%s7] sm:$0x1]
      %v4528 = vlaneseq
      %v4529 = vshrl.u32 %v4528, 7
      %v4530 = vsub.s32 0, %v4529
      %v4531 = vrot.slane %v4526, %v4530
      %4533 = vmatprep.subr.mxu0 0.0
      %4534 = vmatpush1.msra.mxu0 %v4510
      %4535 = vmatprep.subr.mxu0 0.0
      %4536 = vmatpush1.msra.mxu0 %v4511
      %4537 = vmatprep.subr.mxu0 0.0
      %4538 = vmatpush1.msra.mxu0 %v4512
      %4539 = vmatprep.subr.mxu0 0.0
      %4540 = vmatpush1.msra.mxu0 %v4513
      %4541 = vmatprep.subr.mxu0 0.0
      %4542 = vmatpush1.msra.mxu0 %v4514
      %4543 = vmatprep.subr.mxu0 0.0
      %4544 = vmatpush1.msra.mxu0 %v4515
      %4545 = vmatprep.subr.mxu0 0.0
      %4546 = vmatpush1.msra.mxu0 %v4516
      %4547 = vmatprep.subr.mxu0 0.0
      %4548 = vmatpush1.msra.mxu0 %v4517
      %4549 = vmatprep.subr.mxu0 0.0
      %4550 = vmatpush1.msra.mxu0 %v4518
      %4551 = vmatprep.subr.mxu0 0.0
      %4552 = vmatpush1.msra.mxu0 %v4519
      %4553 = vmatprep.subr.mxu0 0.0
      %4554 = vmatpush1.msra.mxu0 %v4520
      %4555 = vmatprep.subr.mxu0 0.0
      %4556 = vmatpush1.msra.mxu0 %v4521
      %4557 = vmatprep.subr.mxu0 0.0
      %4558 = vmatpush1.msra.mxu0 %v4522
      %4559 = vmatprep.subr.mxu0 0.0
      %4560 = vmatpush1.msra.mxu0 %v4523
      %4561 = vmatprep.subr.mxu0 0.0
      %4562 = vmatpush1.msra.mxu0 %v4524
      %4563 = vmatprep.subr.mxu0 0.0
      %4564 = vmatpush1.msra.mxu0 %v4525
      %4565 = vmatprep.subr.mxu0 0.0
      %4566 = vmatpush1.msra.mxu0 0.0
      %4567 = vmatprep.subr.mxu0 0.0
      %4568 = vmatpush1.msra.mxu0 0.0
      %4569 = vmatprep.subr.mxu0 0.0
      %4570 = vmatpush1.msra.mxu0 0.0
      %4571 = vmatprep.subr.mxu0 0.0
      %4572 = vmatpush1.msra.mxu0 0.0
      %4573 = vmatprep.subr.mxu0 0.0
      %4574 = vmatpush1.msra.mxu0 0.0
      %4575 = vmatprep.subr.mxu0 0.0
      %4576 = vmatpush1.msra.mxu0 0.0
      %4577 = vmatprep.subr.mxu0 0.0
      %4578 = vmatpush1.msra.mxu0 0.0
      %4579 = vmatprep.subr.mxu0 0.0
      %4580 = vmatpush1.msra.mxu0 0.0
      %4581 = vmatprep.subr.mxu0 0.0
      %4582 = vmatpush1.msra.mxu0 0.0
      %4583 = vmatprep.subr.mxu0 0.0
      %4584 = vmatpush1.msra.mxu0 0.0
      %4585 = vmatprep.subr.mxu0 0.0
      %4586 = vmatpush1.msra.mxu0 0.0
      %4587 = vmatprep.subr.mxu0 0.0
      %4588 = vmatpush1.msra.mxu0 0.0
      %4589 = vmatprep.subr.mxu0 0.0
      %4590 = vmatpush1.msra.mxu0 0.0
      %4591 = vmatprep.subr.mxu0 0.0
      %4592 = vmatpush1.msra.mxu0 0.0
      %4593 = vmatprep.subr.mxu0 0.0
      %4594 = vmatpush1.msra.mxu0 0.0
      %4595 = vmatprep.subr.mxu0 0.0
      %4596 = vmatpush1.msra.mxu0 0.0
      %4597 = vmatprep.mubr.f32.mxu0 0.0
      %4598 = vmatmul.mubr.f32.gmra.mrb[0].mxu0 %v4494
      %v4599 = vpop.f32.mrb[0].mxu0
      %v4600 = vadd.f32 %v4531, %v4599
      %v4601 = vpop.f32.mrb[0].mxu0
      %4602 = vmatprep.mubr.f32.mxu0 0.0
      %4603 = vmatmul.mubr.f32.gmra.mrb[0].mxu0 %v4495
      %v4604 = vpop.f32.mrb[0].mxu0
      %v4605 = vadd.f32 %v4531, %v4604
      %v4606 = vpop.f32.mrb[0].mxu0
      %4607 = vmatprep.mubr.f32.mxu0 0.0
      %4608 = vmatmul.mubr.f32.gmra.mrb[0].mxu0 %v4496
      %v4609 = vpop.f32.mrb[0].mxu0
      %v4610 = vadd.f32 %v4531, %v4609
      %v4611 = vpop.f32.mrb[0].mxu0
      %4612 = vmatprep.mubr.f32.mxu0 0.0
      %4613 = vmatmul.mubr.f32.gmra.mrb[0].mxu0 %v4497
      %v4614 = vpop.f32.mrb[0].mxu0
      %v4615 = vadd.f32 %v4531, %v4614
      %v4616 = vpop.f32.mrb[0].mxu0
      %4617 = vmatprep.mubr.f32.mxu0 0.0
      %4618 = vmatmul.mubr.f32.gmra.mrb[0].mxu0 %v4498
      %v4619 = vpop.f32.mrb[0].mxu0
      %v4620 = vadd.f32 %v4531, %v4619
      %v4621 = vpop.f32.mrb[0].mxu0
      %4622 = vmatprep.mubr.f32.mxu0 0.0
      %4623 = vmatmul.mubr.f32.gmra.mrb[0].mxu0 %v4499
      %v4624 = vpop.f32.mrb[0].mxu0
      %v4625 = vadd.f32 %v4531, %v4624
      %v4626 = vpop.f32.mrb[0].mxu0
      %4627 = vmatprep.mubr.f32.mxu0 0.0
      %4628 = vmatmul.mubr.f32.gmra.mrb[0].mxu0 %v4500
      %v4629 = vpop.f32.mrb[0].mxu0
      %v4630 = vadd.f32 %v4531, %v4629
      %v4631 = vpop.f32.mrb[0].mxu0
      %4632 = vmatprep.mubr.f32.mxu0 0.0
      %4633 = vmatmul.mubr.f32.gmra.mrb[0].mxu0 %v4501
      %v4634 = vpop.f32.mrb[0].mxu0
      %v4635 = vadd.f32 %v4531, %v4634
      %v4636 = vpop.f32.mrb[0].mxu0
      %4637 = vmatprep.mubr.f32.mxu0 0.0
      %4638 = vmatmul.mubr.f32.gmra.mrb[0].mxu0 %v4502
      %v4639 = vpop.f32.mrb[0].mxu0
      %v4640 = vadd.f32 %v4531, %v4639
      %v4641 = vpop.f32.mrb[0].mxu0
      %4642 = vmatprep.mubr.f32.mxu0 0.0
      %4643 = vmatmul.mubr.f32.gmra.mrb[0].mxu0 %v4503
      %v4644 = vpop.f32.mrb[0].mxu0
      %v4645 = vadd.f32 %v4531, %v4644
      %v4646 = vpop.f32.mrb[0].mxu0
      %4647 = vmatprep.mubr.f32.mxu0 0.0
      %4648 = vmatmul.mubr.f32.gmra.mrb[0].mxu0 %v4504
      %v4649 = vpop.f32.mrb[0].mxu0
      %v4650 = vadd.f32 %v4531, %v4649
      %v4651 = vpop.f32.mrb[0].mxu0
      %4652 = vmatprep.mubr.f32.mxu0 0.0
      %4653 = vmatmul.mubr.f32.gmra.mrb[0].mxu0 %v4505
      %v4654 = vpop.f32.mrb[0].mxu0
      %v4655 = vadd.f32 %v4531, %v4654
      %v4656 = vpop.f32.mrb[0].mxu0
      %4657 = vmatprep.mubr.f32.mxu0 0.0
      %4658 = vmatmul.mubr.f32.gmra.mrb[0].mxu0 %v4506
      %v4659 = vpop.f32.mrb[0].mxu0
      %v4660 = vadd.f32 %v4531, %v4659
      %v4661 = vpop.f32.mrb[0].mxu0
      %4662 = vmatprep.mubr.f32.mxu0 0.0
      %4663 = vmatmul.mubr.f32.gmra.mrb[0].mxu0 %v4507
      %v4664 = vpop.f32.mrb[0].mxu0
      %v4665 = vadd.f32 %v4531, %v4664
      %v4666 = vpop.f32.mrb[0].mxu0
      %4667 = vmatprep.mubr.f32.mxu0 0.0
      %4668 = vmatmul.mubr.f32.gmra.mrb[0].mxu0 %v4508
      %v4669 = vpop.f32.mrb[0].mxu0
      %v4670 = vadd.f32 %v4531, %v4669
      %v4671 = vpop.f32.mrb[0].mxu0
      %4672 = vmatprep.mubr.f32.mxu0 0.0
      %4673 = vmatmul.mubr.f32.gmra.mrb[0].mxu0 %v4509
      %v4674 = vpop.f32.mrb[0].mxu0
      %v4675 = vadd.f32 %v4531, %v4674
      %v4676 = vpop.f32.mrb[0].mxu0
      %4677 = vdwg.mxu0
      %v4678 = vmul.f32 %v4600, 0.5
      %v4679 = vmul.f32 %v4605, 0.5
      %v4680 = vmul.f32 %v4610, 0.5
      %v4681 = vmul.f32 %v4615, 0.5
      %v4682 = vmul.f32 %v4620, 0.5
      %v4683 = vmul.f32 %v4625, 0.5
      %v4684 = vmul.f32 %v4630, 0.5
      %v4685 = vmul.f32 %v4635, 0.5
      %v4686 = vmul.f32 %v4640, 0.5
      %v4687 = vmul.f32 %v4645, 0.5
      %v4688 = vmul.f32 %v4650, 0.5
      %v4689 = vmul.f32 %v4655, 0.5
      %v4690 = vmul.f32 %v4660, 0.5
      %v4691 = vmul.f32 %v4665, 0.5
      %v4692 = vmul.f32 %v4670, 0.5
      %v4693 = vmul.f32 %v4675, 0.5
      %v4694 = vmul.f32 %v4600, %v4127
      %v4695 = vmul.f32 %v4605, %v4127
      %v4696 = vmul.f32 %v4610, %v4127
      %v4697 = vmul.f32 %v4615, %v4127
      %v4698 = vmul.f32 %v4620, %v4127
      %v4699 = vmul.f32 %v4625, %v4127
      %v4700 = vmul.f32 %v4630, %v4127
      %v4701 = vmul.f32 %v4635, %v4127
      %v4702 = vmul.f32 %v4640, %v4127
      %v4703 = vmul.f32 %v4645, %v4127
      %v4704 = vmul.f32 %v4650, %v4127
      %v4705 = vmul.f32 %v4655, %v4127
      %v4706 = vmul.f32 %v4660, %v4127
      %v4707 = vmul.f32 %v4665, %v4127
      %v4708 = vmul.f32 %v4670, %v4127
      %v4709 = vmul.f32 %v4675, %v4127
      %v4710 = verf.f32.pop %v4694
      %v4711 = verf.f32.pop %v4695
      %v4712 = verf.f32.pop %v4696
      %v4713 = verf.f32.pop %v4697
      %v4714 = verf.f32.pop %v4698
      %v4715 = verf.f32.pop %v4699
      %v4716 = verf.f32.pop %v4700
      %v4717 = verf.f32.pop %v4701
      %v4718 = verf.f32.pop %v4702
      %v4719 = verf.f32.pop %v4703
      %v4720 = verf.f32.pop %v4704
      %v4721 = verf.f32.pop %v4705
      %v4722 = verf.f32.pop %v4706
      %v4723 = verf.f32.pop %v4707
      %v4724 = verf.f32.pop %v4708
      %v4725 = verf.f32.pop %v4709
      %v4726 = vadd.f32 %v4710, 1.0
      %v4727 = vadd.f32 %v4711, 1.0
      %v4728 = vadd.f32 %v4712, 1.0
      %v4729 = vadd.f32 %v4713, 1.0
      %v4730 = vadd.f32 %v4714, 1.0
      %v4731 = vadd.f32 %v4715, 1.0
      %v4732 = vadd.f32 %v4716, 1.0
      %v4733 = vadd.f32 %v4717, 1.0
      %v4734 = vadd.f32 %v4718, 1.0
      %v4735 = vadd.f32 %v4719, 1.0
      %v4736 = vadd.f32 %v4720, 1.0
      %v4737 = vadd.f32 %v4721, 1.0
      %v4738 = vadd.f32 %v4722, 1.0
      %v4739 = vadd.f32 %v4723, 1.0
      %v4740 = vadd.f32 %v4724, 1.0
      %v4741 = vadd.f32 %v4725, 1.0
      %v4742 = vmul.f32 %v4678, %v4726
      %v4743 = vmul.f32 %v4679, %v4727
      %v4744 = vmul.f32 %v4680, %v4728
      %v4745 = vmul.f32 %v4681, %v4729
      %v4746 = vmul.f32 %v4682, %v4730
      %v4747 = vmul.f32 %v4683, %v4731
      %v4748 = vmul.f32 %v4684, %v4732
      %v4749 = vmul.f32 %v4685, %v4733
      %v4750 = vmul.f32 %v4686, %v4734
      %v4751 = vmul.f32 %v4687, %v4735
      %v4752 = vmul.f32 %v4688, %v4736
      %v4753 = vmul.f32 %v4689, %v4737
      %v4754 = vmul.f32 %v4690, %v4738
      %v4755 = vmul.f32 %v4691, %v4739
      %v4756 = vmul.f32 %v4692, %v4740
      %v4757 = vmul.f32 %v4693, %v4741
      %v4758 = vld [vmem:[%s8] sm:$0xff]
      %v4759 = vld [vmem:[%s8 + $0x8] sm:$0xff]
      %v4760 = vld [vmem:[%s8 + $0x10] sm:$0xff]
      %v4761 = vld [vmem:[%s8 + $0x18] sm:$0xff]
      %v4762 = vld [vmem:[%s8 + $0x20] sm:$0xff]
      %v4763 = vld [vmem:[%s8 + $0x28] sm:$0xff]
      %v4764 = vld [vmem:[%s8 + $0x30] sm:$0xff]
      %v4765 = vld [vmem:[%s8 + $0x38] sm:$0xff]
      %v4766 = vld [vmem:[%s8 + $0x40] sm:$0xff]
      %v4767 = vld [vmem:[%s8 + $0x48] sm:$0xff]
      %v4768 = vld [vmem:[%s8 + $0x50] sm:$0xff]
      %v4769 = vld [vmem:[%s8 + $0x58] sm:$0xff]
      %v4770 = vld [vmem:[%s8 + $0x60] sm:$0xff]
      %v4771 = vld [vmem:[%s8 + $0x68] sm:$0xff]
      %v4772 = vld [vmem:[%s8 + $0x70] sm:$0xff]
      %v4773 = vld [vmem:[%s8 + $0x78] sm:$0xff]
      %v4774 = vld [vmem:[%s9] sm:$0x1]
      %v4776 = vlaneseq
      %v4777 = vshrl.u32 %v4776, 7
      %v4778 = vsub.s32 0, %v4777
      %v4779 = vrot.slane %v4774, %v4778
      %4781 = vmatprep.subr.mxu0 0.0
      %4782 = vmatpush1.msra.mxu0 %v4758
      %4783 = vmatprep.subr.mxu0 0.0
      %4784 = vmatpush1.msra.mxu0 %v4759
      %4785 = vmatprep.subr.mxu0 0.0
      %4786 = vmatpush1.msra.mxu0 %v4760
      %4787 = vmatprep.subr.mxu0 0.0
      %4788 = vmatpush1.msra.mxu0 %v4761
      %4789 = vmatprep.subr.mxu0 0.0
      %4790 = vmatpush1.msra.mxu0 %v4762
      %4791 = vmatprep.subr.mxu0 0.0
      %4792 = vmatpush1.msra.mxu0 %v4763
      %4793 = vmatprep.subr.mxu0 0.0
      %4794 = vmatpush1.msra.mxu0 %v4764
      %4795 = vmatprep.subr.mxu0 0.0
      %4796 = vmatpush1.msra.mxu0 %v4765
      %4797 = vmatprep.subr.mxu0 0.0
      %4798 = vmatpush1.msra.mxu0 %v4766
      %4799 = vmatprep.subr.mxu0 0.0
      %4800 = vmatpush1.msra.mxu0 %v4767
      %4801 = vmatprep.subr.mxu0 0.0
      %4802 = vmatpush1.msra.mxu0 %v4768
      %4803 = vmatprep.subr.mxu0 0.0
      %4804 = vmatpush1.msra.mxu0 %v4769
      %4805 = vmatprep.subr.mxu0 0.0
      %4806 = vmatpush1.msra.mxu0 %v4770
      %4807 = vmatprep.subr.mxu0 0.0
      %4808 = vmatpush1.msra.mxu0 %v4771
      %4809 = vmatprep.subr.mxu0 0.0
      %4810 = vmatpush1.msra.mxu0 %v4772
      %4811 = vmatprep.subr.mxu0 0.0
      %4812 = vmatpush1.msra.mxu0 %v4773
      %4813 = vmatprep.subr.mxu0 0.0
      %4814 = vmatpush1.msra.mxu0 0.0
      %4815 = vmatprep.subr.mxu0 0.0
      %4816 = vmatpush1.msra.mxu0 0.0
      %4817 = vmatprep.subr.mxu0 0.0
      %4818 = vmatpush1.msra.mxu0 0.0
      %4819 = vmatprep.subr.mxu0 0.0
      %4820 = vmatpush1.msra.mxu0 0.0
      %4821 = vmatprep.subr.mxu0 0.0
      %4822 = vmatpush1.msra.mxu0 0.0
      %4823 = vmatprep.subr.mxu0 0.0
      %4824 = vmatpush1.msra.mxu0 0.0
      %4825 = vmatprep.subr.mxu0 0.0
      %4826 = vmatpush1.msra.mxu0 0.0
      %4827 = vmatprep.subr.mxu0 0.0
      %4828 = vmatpush1.msra.mxu0 0.0
      %4829 = vmatprep.subr.mxu0 0.0
      %4830 = vmatpush1.msra.mxu0 0.0
      %4831 = vmatprep.subr.mxu0 0.0
      %4832 = vmatpush1.msra.mxu0 0.0
      %4833 = vmatprep.subr.mxu0 0.0
      %4834 = vmatpush1.msra.mxu0 0.0
      %4835 = vmatprep.subr.mxu0 0.0
      %4836 = vmatpush1.msra.mxu0 0.0
      %4837 = vmatprep.subr.mxu0 0.0
      %4838 = vmatpush1.msra.mxu0 0.0
      %4839 = vmatprep.subr.mxu0 0.0
      %4840 = vmatpush1.msra.mxu0 0.0
      %4841 = vmatprep.subr.mxu0 0.0
      %4842 = vmatpush1.msra.mxu0 0.0
      %4843 = vmatprep.subr.mxu0 0.0
      %4844 = vmatpush1.msra.mxu0 0.0
      %4845 = vmatprep.mubr.f32.mxu0 0.0
      %4846 = vmatmul.mubr.f32.gmra.mrb[0].mxu0 %v4742
      %v4847 = vpop.f32.mrb[0].mxu0
      %v4848 = vadd.f32 %v4779, %v4847
      %v4849 = vpop.f32.mrb[0].mxu0
      %4850 = vmatprep.mubr.f32.mxu0 0.0
      %4851 = vmatmul.mubr.f32.gmra.mrb[0].mxu0 %v4743
      %v4852 = vpop.f32.mrb[0].mxu0
      %v4853 = vadd.f32 %v4779, %v4852
      %v4854 = vpop.f32.mrb[0].mxu0
      %4855 = vmatprep.mubr.f32.mxu0 0.0
      %4856 = vmatmul.mubr.f32.gmra.mrb[0].mxu0 %v4744
      %v4857 = vpop.f32.mrb[0].mxu0
      %v4858 = vadd.f32 %v4779, %v4857
      %v4859 = vpop.f32.mrb[0].mxu0
      %4860 = vmatprep.mubr.f32.mxu0 0.0
      %4861 = vmatmul.mubr.f32.gmra.mrb[0].mxu0 %v4745
      %v4862 = vpop.f32.mrb[0].mxu0
      %v4863 = vadd.f32 %v4779, %v4862
      %v4864 = vpop.f32.mrb[0].mxu0
      %4865 = vmatprep.mubr.f32.mxu0 0.0
      %4866 = vmatmul.mubr.f32.gmra.mrb[0].mxu0 %v4746
      %v4867 = vpop.f32.mrb[0].mxu0
      %v4868 = vadd.f32 %v4779, %v4867
      %v4869 = vpop.f32.mrb[0].mxu0
      %4870 = vmatprep.mubr.f32.mxu0 0.0
      %4871 = vmatmul.mubr.f32.gmra.mrb[0].mxu0 %v4747
      %v4872 = vpop.f32.mrb[0].mxu0
      %v4873 = vadd.f32 %v4779, %v4872
      %v4874 = vpop.f32.mrb[0].mxu0
      %4875 = vmatprep.mubr.f32.mxu0 0.0
      %4876 = vmatmul.mubr.f32.gmra.mrb[0].mxu0 %v4748
      %v4877 = vpop.f32.mrb[0].mxu0
      %v4878 = vadd.f32 %v4779, %v4877
      %v4879 = vpop.f32.mrb[0].mxu0
      %4880 = vmatprep.mubr.f32.mxu0 0.0
      %4881 = vmatmul.mubr.f32.gmra.mrb[0].mxu0 %v4749
      %v4882 = vpop.f32.mrb[0].mxu0
      %v4883 = vadd.f32 %v4779, %v4882
      %v4884 = vpop.f32.mrb[0].mxu0
      %4885 = vmatprep.mubr.f32.mxu0 0.0
      %4886 = vmatmul.mubr.f32.gmra.mrb[0].mxu0 %v4750
      %v4887 = vpop.f32.mrb[0].mxu0
      %v4888 = vadd.f32 %v4779, %v4887
      %v4889 = vpop.f32.mrb[0].mxu0
      %4890 = vmatprep.mubr.f32.mxu0 0.0
      %4891 = vmatmul.mubr.f32.gmra.mrb[0].mxu0 %v4751
      %v4892 = vpop.f32.mrb[0].mxu0
      %v4893 = vadd.f32 %v4779, %v4892
      %v4894 = vpop.f32.mrb[0].mxu0
      %4895 = vmatprep.mubr.f32.mxu0 0.0
      %4896 = vmatmul.mubr.f32.gmra.mrb[0].mxu0 %v4752
      %v4897 = vpop.f32.mrb[0].mxu0
      %v4898 = vadd.f32 %v4779, %v4897
      %v4899 = vpop.f32.mrb[0].mxu0
      %4900 = vmatprep.mubr.f32.mxu0 0.0
      %4901 = vmatmul.mubr.f32.gmra.mrb[0].mxu0 %v4753
      %v4902 = vpop.f32.mrb[0].mxu0
      %v4903 = vadd.f32 %v4779, %v4902
      %v4904 = vpop.f32.mrb[0].mxu0
      %4905 = vmatprep.mubr.f32.mxu0 0.0
      %4906 = vmatmul.mubr.f32.gmra.mrb[0].mxu0 %v4754
      %v4907 = vpop.f32.mrb[0].mxu0
      %v4908 = vadd.f32 %v4779, %v4907
      %v4909 = vpop.f32.mrb[0].mxu0
      %4910 = vmatprep.mubr.f32.mxu0 0.0
      %4911 = vmatmul.mubr.f32.gmra.mrb[0].mxu0 %v4755
      %v4912 = vpop.f32.mrb[0].mxu0
      %v4913 = vadd.f32 %v4779, %v4912
      %v4914 = vpop.f32.mrb[0].mxu0
      %4915 = vmatprep.mubr.f32.mxu0 0.0
      %4916 = vmatmul.mubr.f32.gmra.mrb[0].mxu0 %v4756
      %v4917 = vpop.f32.mrb[0].mxu0
      %v4918 = vadd.f32 %v4779, %v4917
      %v4919 = vpop.f32.mrb[0].mxu0
      %4920 = vmatprep.mubr.f32.mxu0 0.0
      %4921 = vmatmul.mubr.f32.gmra.mrb[0].mxu0 %v4757
      %v4922 = vpop.f32.mrb[0].mxu0
      %v4923 = vadd.f32 %v4779, %v4922
      %v4924 = vpop.f32.mrb[0].mxu0
      %4925 = vdwg.mxu0
      %v4926 = vmul.f32 %v4848, 0.5
      %v4927 = vmul.f32 %v4853, 0.5
      %v4928 = vmul.f32 %v4858, 0.5
      %v4929 = vmul.f32 %v4863, 0.5
      %v4930 = vmul.f32 %v4868, 0.5
      %v4931 = vmul.f32 %v4873, 0.5
      %v4932 = vmul.f32 %v4878, 0.5
      %v4933 = vmul.f32 %v4883, 0.5
      %v4934 = vmul.f32 %v4888, 0.5
      %v4935 = vmul.f32 %v4893, 0.5
      %v4936 = vmul.f32 %v4898, 0.5
      %v4937 = vmul.f32 %v4903, 0.5
      %v4938 = vmul.f32 %v4908, 0.5
      %v4939 = vmul.f32 %v4913, 0.5
      %v4940 = vmul.f32 %v4918, 0.5
      %v4941 = vmul.f32 %v4923, 0.5
      %v4942 = vmul.f32 %v4848, %v4127
      %v4943 = vmul.f32 %v4853, %v4127
      %v4944 = vmul.f32 %v4858, %v4127
      %v4945 = vmul.f32 %v4863, %v4127
      %v4946 = vmul.f32 %v4868, %v4127
      %v4947 = vmul.f32 %v4873, %v4127
      %v4948 = vmul.f32 %v4878, %v4127
      %v4949 = vmul.f32 %v4883, %v4127
      %v4950 = vmul.f32 %v4888, %v4127
      %v4951 = vmul.f32 %v4893, %v4127
      %v4952 = vmul.f32 %v4898, %v4127
      %v4953 = vmul.f32 %v4903, %v4127
      %v4954 = vmul.f32 %v4908, %v4127
      %v4955 = vmul.f32 %v4913, %v4127
      %v4956 = vmul.f32 %v4918, %v4127
      %v4957 = vmul.f32 %v4923, %v4127
      %v4958 = verf.f32.pop %v4942
      %v4959 = verf.f32.pop %v4943
      %v4960 = verf.f32.pop %v4944
      %v4961 = verf.f32.pop %v4945
      %v4962 = verf.f32.pop %v4946
      %v4963 = verf.f32.pop %v4947
      %v4964 = verf.f32.pop %v4948
      %v4965 = verf.f32.pop %v4949
      %v4966 = verf.f32.pop %v4950
      %v4967 = verf.f32.pop %v4951
      %v4968 = verf.f32.pop %v4952
      %v4969 = verf.f32.pop %v4953
      %v4970 = verf.f32.pop %v4954
      %v4971 = verf.f32.pop %v4955
      %v4972 = verf.f32.pop %v4956
      %v4973 = verf.f32.pop %v4957
      %v4974 = vadd.f32 %v4958, 1.0
      %v4975 = vadd.f32 %v4959, 1.0
      %v4976 = vadd.f32 %v4960, 1.0
      %v4977 = vadd.f32 %v4961, 1.0
      %v4978 = vadd.f32 %v4962, 1.0
      %v4979 = vadd.f32 %v4963, 1.0
      %v4980 = vadd.f32 %v4964, 1.0
      %v4981 = vadd.f32 %v4965, 1.0
      %v4982 = vadd.f32 %v4966, 1.0
      %v4983 = vadd.f32 %v4967, 1.0
      %v4984 = vadd.f32 %v4968, 1.0
      %v4985 = vadd.f32 %v4969, 1.0
      %v4986 = vadd.f32 %v4970, 1.0
      %v4987 = vadd.f32 %v4971, 1.0
      %v4988 = vadd.f32 %v4972, 1.0
      %v4989 = vadd.f32 %v4973, 1.0
      %v4990 = vmul.f32 %v4926, %v4974
      %v4991 = vmul.f32 %v4927, %v4975
      %v4992 = vmul.f32 %v4928, %v4976
      %v4993 = vmul.f32 %v4929, %v4977
      %v4994 = vmul.f32 %v4930, %v4978
      %v4995 = vmul.f32 %v4931, %v4979
      %v4996 = vmul.f32 %v4932, %v4980
      %v4997 = vmul.f32 %v4933, %v4981
      %v4998 = vmul.f32 %v4934, %v4982
      %v4999 = vmul.f32 %v4935, %v4983
      %v5000 = vmul.f32 %v4936, %v4984
      %v5001 = vmul.f32 %v4937, %v4985
      %v5002 = vmul.f32 %v4938, %v4986
      %v5003 = vmul.f32 %v4939, %v4987
      %v5004 = vmul.f32 %v4940, %v4988
      %v5005 = vmul.f32 %v4941, %v4989
      %v5006 = vld [vmem:[%s10] sm:$0xff]
      %v5007 = vld [vmem:[%s10 + $0x8] sm:$0xff]
      %v5008 = vld [vmem:[%s10 + $0x10] sm:$0xff]
      %v5009 = vld [vmem:[%s10 + $0x18] sm:$0xff]
      %v5010 = vld [vmem:[%s10 + $0x20] sm:$0xff]
      %v5011 = vld [vmem:[%s10 + $0x28] sm:$0xff]
      %v5012 = vld [vmem:[%s10 + $0x30] sm:$0xff]
      %v5013 = vld [vmem:[%s10 + $0x38] sm:$0xff]
      %v5014 = vld [vmem:[%s10 + $0x40] sm:$0xff]
      %v5015 = vld [vmem:[%s10 + $0x48] sm:$0xff]
      %v5016 = vld [vmem:[%s10 + $0x50] sm:$0xff]
      %v5017 = vld [vmem:[%s10 + $0x58] sm:$0xff]
      %v5018 = vld [vmem:[%s10 + $0x60] sm:$0xff]
      %v5019 = vld [vmem:[%s10 + $0x68] sm:$0xff]
      %v5020 = vld [vmem:[%s10 + $0x70] sm:$0xff]
      %v5021 = vld [vmem:[%s10 + $0x78] sm:$0xff]
      %v5022 = vld [vmem:[%s11] sm:$0x1]
      %v5024 = vlaneseq
      %v5025 = vshrl.u32 %v5024, 7
      %v5026 = vsub.s32 0, %v5025
      %v5027 = vrot.slane %v5022, %v5026
      %5029 = vmatprep.subr.mxu0 0.0
      %5030 = vmatpush1.msra.mxu0 %v5006
      %5031 = vmatprep.subr.mxu0 0.0
      %5032 = vmatpush1.msra.mxu0 %v5007
      %5033 = vmatprep.subr.mxu0 0.0
      %5034 = vmatpush1.msra.mxu0 %v5008
      %5035 = vmatprep.subr.mxu0 0.0
      %5036 = vmatpush1.msra.mxu0 %v5009
      %5037 = vmatprep.subr.mxu0 0.0
      %5038 = vmatpush1.msra.mxu0 %v5010
      %5039 = vmatprep.subr.mxu0 0.0
      %5040 = vmatpush1.msra.mxu0 %v5011
      %5041 = vmatprep.subr.mxu0 0.0
      %5042 = vmatpush1.msra.mxu0 %v5012
      %5043 = vmatprep.subr.mxu0 0.0
      %5044 = vmatpush1.msra.mxu0 %v5013
      %5045 = vmatprep.subr.mxu0 0.0
      %5046 = vmatpush1.msra.mxu0 %v5014
      %5047 = vmatprep.subr.mxu0 0.0
      %5048 = vmatpush1.msra.mxu0 %v5015
      %5049 = vmatprep.subr.mxu0 0.0
      %5050 = vmatpush1.msra.mxu0 %v5016
      %5051 = vmatprep.subr.mxu0 0.0
      %5052 = vmatpush1.msra.mxu0 %v5017
      %5053 = vmatprep.subr.mxu0 0.0
      %5054 = vmatpush1.msra.mxu0 %v5018
      %5055 = vmatprep.subr.mxu0 0.0
      %5056 = vmatpush1.msra.mxu0 %v5019
      %5057 = vmatprep.subr.mxu0 0.0
      %5058 = vmatpush1.msra.mxu0 %v5020
      %5059 = vmatprep.subr.mxu0 0.0
      %5060 = vmatpush1.msra.mxu0 %v5021
      %5061 = vmatprep.subr.mxu0 0.0
      %5062 = vmatpush1.msra.mxu0 0.0
      %5063 = vmatprep.subr.mxu0 0.0
      %5064 = vmatpush1.msra.mxu0 0.0
      %5065 = vmatprep.subr.mxu0 0.0
      %5066 = vmatpush1.msra.mxu0 0.0
      %5067 = vmatprep.subr.mxu0 0.0
      %5068 = vmatpush1.msra.mxu0 0.0
      %5069 = vmatprep.subr.mxu0 0.0
      %5070 = vmatpush1.msra.mxu0 0.0
      %5071 = vmatprep.subr.mxu0 0.0
      %5072 = vmatpush1.msra.mxu0 0.0
      %5073 = vmatprep.subr.mxu0 0.0
      %5074 = vmatpush1.msra.mxu0 0.0
      %5075 = vmatprep.subr.mxu0 0.0
      %5076 = vmatpush1.msra.mxu0 0.0
      %5077 = vmatprep.subr.mxu0 0.0
      %5078 = vmatpush1.msra.mxu0 0.0
      %5079 = vmatprep.subr.mxu0 0.0
      %5080 = vmatpush1.msra.mxu0 0.0
      %5081 = vmatprep.subr.mxu0 0.0
      %5082 = vmatpush1.msra.mxu0 0.0
      %5083 = vmatprep.subr.mxu0 0.0
      %5084 = vmatpush1.msra.mxu0 0.0
      %5085 = vmatprep.subr.mxu0 0.0
      %5086 = vmatpush1.msra.mxu0 0.0
      %5087 = vmatprep.subr.mxu0 0.0
      %5088 = vmatpush1.msra.mxu0 0.0
      %5089 = vmatprep.subr.mxu0 0.0
      %5090 = vmatpush1.msra.mxu0 0.0
      %5091 = vmatprep.subr.mxu0 0.0
      %5092 = vmatpush1.msra.mxu0 0.0
      %5093 = vmatprep.mubr.f32.mxu0 0.0
      %5094 = vmatmul.mubr.f32.gmra.mrb[0].mxu0 %v4990
      %v5095 = vpop.f32.mrb[0].mxu0
      %v5096 = vadd.f32 %v5027, %v5095
      %v5097 = vpop.f32.mrb[0].mxu0
      %5098 = vmatprep.mubr.f32.mxu0 0.0
      %5099 = vmatmul.mubr.f32.gmra.mrb[0].mxu0 %v4991
      %v5100 = vpop.f32.mrb[0].mxu0
      %v5101 = vadd.f32 %v5027, %v5100
      %v5102 = vpop.f32.mrb[0].mxu0
      %5103 = vmatprep.mubr.f32.mxu0 0.0
      %5104 = vmatmul.mubr.f32.gmra.mrb[0].mxu0 %v4992
      %v5105 = vpop.f32.mrb[0].mxu0
      %v5106 = vadd.f32 %v5027, %v5105
      %v5107 = vpop.f32.mrb[0].mxu0
      %5108 = vmatprep.mubr.f32.mxu0 0.0
      %5109 = vmatmul.mubr.f32.gmra.mrb[0].mxu0 %v4993
      %v5110 = vpop.f32.mrb[0].mxu0
      %v5111 = vadd.f32 %v5027, %v5110
      %v5112 = vpop.f32.mrb[0].mxu0
      %5113 = vmatprep.mubr.f32.mxu0 0.0
      %5114 = vmatmul.mubr.f32.gmra.mrb[0].mxu0 %v4994
      %v5115 = vpop.f32.mrb[0].mxu0
      %v5116 = vadd.f32 %v5027, %v5115
      %v5117 = vpop.f32.mrb[0].mxu0
      %5118 = vmatprep.mubr.f32.mxu0 0.0
      %5119 = vmatmul.mubr.f32.gmra.mrb[0].mxu0 %v4995
      %v5120 = vpop.f32.mrb[0].mxu0
      %v5121 = vadd.f32 %v5027, %v5120
      %v5122 = vpop.f32.mrb[0].mxu0
      %5123 = vmatprep.mubr.f32.mxu0 0.0
      %5124 = vmatmul.mubr.f32.gmra.mrb[0].mxu0 %v4996
      %v5125 = vpop.f32.mrb[0].mxu0
      %v5126 = vadd.f32 %v5027, %v5125
      %v5127 = vpop.f32.mrb[0].mxu0
      %5128 = vmatprep.mubr.f32.mxu0 0.0
      %5129 = vmatmul.mubr.f32.gmra.mrb[0].mxu0 %v4997
      %v5130 = vpop.f32.mrb[0].mxu0
      %v5131 = vadd.f32 %v5027, %v5130
      %v5132 = vpop.f32.mrb[0].mxu0
      %5133 = vmatprep.mubr.f32.mxu0 0.0
      %5134 = vmatmul.mubr.f32.gmra.mrb[0].mxu0 %v4998
      %v5135 = vpop.f32.mrb[0].mxu0
      %v5136 = vadd.f32 %v5027, %v5135
      %v5137 = vpop.f32.mrb[0].mxu0
      %5138 = vmatprep.mubr.f32.mxu0 0.0
      %5139 = vmatmul.mubr.f32.gmra.mrb[0].mxu0 %v4999
      %v5140 = vpop.f32.mrb[0].mxu0
      %v5141 = vadd.f32 %v5027, %v5140
      %v5142 = vpop.f32.mrb[0].mxu0
      %5143 = vmatprep.mubr.f32.mxu0 0.0
      %5144 = vmatmul.mubr.f32.gmra.mrb[0].mxu0 %v5000
      %v5145 = vpop.f32.mrb[0].mxu0
      %v5146 = vadd.f32 %v5027, %v5145
      %v5147 = vpop.f32.mrb[0].mxu0
      %5148 = vmatprep.mubr.f32.mxu0 0.0
      %5149 = vmatmul.mubr.f32.gmra.mrb[0].mxu0 %v5001
      %v5150 = vpop.f32.mrb[0].mxu0
      %v5151 = vadd.f32 %v5027, %v5150
      %v5152 = vpop.f32.mrb[0].mxu0
      %5153 = vmatprep.mubr.f32.mxu0 0.0
      %5154 = vmatmul.mubr.f32.gmra.mrb[0].mxu0 %v5002
      %v5155 = vpop.f32.mrb[0].mxu0
      %v5156 = vadd.f32 %v5027, %v5155
      %v5157 = vpop.f32.mrb[0].mxu0
      %5158 = vmatprep.mubr.f32.mxu0 0.0
      %5159 = vmatmul.mubr.f32.gmra.mrb[0].mxu0 %v5003
      %v5160 = vpop.f32.mrb[0].mxu0
      %v5161 = vadd.f32 %v5027, %v5160
      %v5162 = vpop.f32.mrb[0].mxu0
      %5163 = vmatprep.mubr.f32.mxu0 0.0
      %5164 = vmatmul.mubr.f32.gmra.mrb[0].mxu0 %v5004
      %v5165 = vpop.f32.mrb[0].mxu0
      %v5166 = vadd.f32 %v5027, %v5165
      %v5167 = vpop.f32.mrb[0].mxu0
      %5168 = vmatprep.mubr.f32.mxu0 0.0
      %5169 = vmatmul.mubr.f32.gmra.mrb[0].mxu0 %v5005
      %v5170 = vpop.f32.mrb[0].mxu0
      %v5171 = vadd.f32 %v5027, %v5170
      %v5172 = vpop.f32.mrb[0].mxu0
      %5173 = vdwg.mxu0
      %5174 = vst.msk [vmem:[%s437] sm:$0xff] %vm4232, %v5096
      %5175 = vst.msk [vmem:[%s437 + $0x8] sm:$0xff] %vm4232, %v5101
      %5176 = vst.msk [vmem:[%s437 + $0x10] sm:$0xff] %vm4232, %v5106
      %5177 = vst.msk [vmem:[%s437 + $0x18] sm:$0xff] %vm4232, %v5111
      %5178 = vst.msk [vmem:[%s437 + $0x20] sm:$0xff] %vm4232, %v5116
      %5179 = vst.msk [vmem:[%s437 + $0x28] sm:$0xff] %vm4232, %v5121
      %5180 = vst.msk [vmem:[%s437 + $0x30] sm:$0xff] %vm4232, %v5126
      %5181 = vst.msk [vmem:[%s437 + $0x38] sm:$0xff] %vm4232, %v5131
      %5182 = vst.msk [vmem:[%s437 + $0x40] sm:$0xff] %vm4232, %v5136
      %5183 = vst.msk [vmem:[%s437 + $0x48] sm:$0xff] %vm4232, %v5141
      %5184 = vst.msk [vmem:[%s437 + $0x50] sm:$0xff] %vm4232, %v5146
      %5185 = vst.msk [vmem:[%s437 + $0x58] sm:$0xff] %vm4232, %v5151
      %5186 = vst.msk [vmem:[%s437 + $0x60] sm:$0xff] %vm4232, %v5156
      %5187 = vst.msk [vmem:[%s437 + $0x68] sm:$0xff] %vm4232, %v5161
      %5188 = vst.msk [vmem:[%s437 + $0x70] sm:$0xff] %vm4232, %v5166
      %5189 = vst.msk [vmem:[%s437 + $0x78] sm:$0xff] %vm4232, %v5171
      %s5190 = smul.u32 16, %s23
      %p5191 = scmp.lt.s32.totalorder %s5190, 47
      %s5192 = scalar_select %p5191, %s5190, 47
      %s5193 = smul.addr %s5192, 8
      %s5194 = scalar_lea.vmem %s12, %s5193
      // Predicated region
      $region69: #{tpu_custom_call.1} parent=67 // pred_check
        %p5195 = pneg %p303
      $region70: #{tpu_custom_call.1} parent=67 // pred_check_branch
        %5197 = sbr.rel (%p5195) target = $region72
      $region71: #{tpu_custom_call.1} parent=67 // pred_region
        %s5198 = smul.u32 16, %s23
      $region72: #{tpu_custom_call.1} parent=67 // pred_fallthru
        _
    $region68: #{tpu_custom_call.1} parent=5 // pred_fallthru
      _
    %p5199 = scmp.le.s32.totalorder 2, %s18
    // Predicated region
    $region73: #{tpu_custom_call.1} parent=5 // pred_check
      %p5200 = pneg %p5199
    $region74: #{tpu_custom_call.1} parent=5 // pred_check_branch
      %5202 = sbr.rel (%p5200) target = $region76
    $region75: #{tpu_custom_call.1} parent=5 // pred_region
      %s5203 = ssub.s32 %s18, 2
      // Predicated region
      $region77: #{tpu_custom_call.1} parent=75 // pred_check
        %p5204 = pneg %p309
      $region78: #{tpu_custom_call.1} parent=75 // pred_check_branch
        %5206 = sbr.rel (%p5204) target = $region80
      $region79: #{tpu_custom_call.1} parent=75 // pred_region
        %s5207 = smul.u32 16, %s24
        %p5208 = scmp.lt.s32.totalorder %s5207, 47
        %s5209 = scalar_select %p5208, %s5207, 47
        %s5210 = smul.addr %s5209, 8
        %s5211 = scalar_lea.vmem %s12, %s5210
      $region80: #{tpu_custom_call.1} parent=75 // pred_fallthru
        _
    $region76: #{tpu_custom_call.1} parent=5 // pred_fallthru
      _
  $region6: #{tpu_custom_call.1} parent=0 // loop_footer
    %s22 = sadd.s32 1, %s18
  $region7: #{tpu_custom_call.1} parent=0 // loop_footer_branch
    %17 = sbr.rel target = $region3
  $region8: #{tpu_custom_call.1} parent=0 // loop_exit
    _

</llo_original>
